<compile_context>
chip_gen: v7x
topology: tpu7x:2x2x1
jax: 0.10.0
libtpu: 0.0.40
codegen_flags: <defaults>
</compile_context>

<pallas_src>
import functools

import jax
import jax.numpy as jnp
import numpy as np
from jax.experimental import pallas as pl
from jax.experimental.pallas import tpu as pltpu

COLOR_COEF = 0.1
DEPTH_COEF = 0.1
FREESPACE_WEIGHT = 10.0
TRUNCATION_WEIGHT = 6000.0
TRUNCATION = 0.05

_LANE = 128
_NUM_SPLITS = 2                       # deterministic 2-way megacore split
_VMEM_INPUT_BUDGET = 10 * 1024 * 1024  # double-buffered inputs, v5e-safe


def _round_up(x, m):
    return ((x + m - 1) // m) * m


def _sublane_multiple(dtype):
    return 8 * max(1, 4 // jnp.dtype(dtype).itemsize)   # 8 f32 / 16 bf16 / 32 i8


def _rgbd_loss_kernel(rgb_c_ref, rgb_f_ref, gt_rgb_ref,
                      d_c_ref, d_f_ref, gt_d_row_ref, gt_d_col_ref,
                      z_c_ref, s_c_ref, z_f_ref, s_f_ref,
                      misc_acc_ref, sdf_c_acc_ref, sdf_f_acc_ref,
                      *, truncation, inv_truncation):
    """Per-lane partial sums over ray blocks.

    Accumulators (VMEM-resident across the inner "arbitrary" axis, one split
    row each; lane collapse happens in the tiny JAX epilogue):
      misc_acc  (1, 4, tn): rows = [rgb_c sqsum, rgb_f sqsum, d_c sqsum, d_f sqsum]
      sdf_*_acc (1, 4, S):  rows = [fs sqsum, front count, tr sqsum, band count]
    """
    i = pl.program_id(1)

    @pl.when(i == 0)
    def _init():
        misc_acc_ref[...] = jnp.zeros_like(misc_acc_ref)
        sdf_c_acc_ref[...] = jnp.zeros_like(sdf_c_acc_ref)
        sdf_f_acc_ref[...] = jnp.zeros_like(sdf_f_acc_ref)

    f32 = jnp.float32

    # ---- RGB / depth MSE partials on lane-dense (3, tn) / (1, tn) blocks ----
    gt_rgb = gt_rgb_ref[...].astype(f32)                       # (3, tn)
    gt_d_row = gt_d_row_ref[...].astype(f32)                   # (1, tn)
    e_rgb_c = jnp.sum((rgb_c_ref[...].astype(f32) - gt_rgb) ** 2,
                      axis=0, keepdims=True)                   # (1, tn)
    e_rgb_f = jnp.sum((rgb_f_ref[...].astype(f32) - gt_rgb) ** 2,
                      axis=0, keepdims=True)
    e_d_c = (d_c_ref[...].astype(f32) - gt_d_row) ** 2         # (1, tn)
    e_d_f = (d_f_ref[...].astype(f32) - gt_d_row) ** 2
    misc_acc_ref[...] += jnp.concatenate(
        [e_rgb_c, e_rgb_f, e_d_c, e_d_f], axis=0)[None]        # one coalesced add

    # ---- SDF partials (shared per-ray quantities hoisted once per step) ----
    # TODO(synk): get_gt_sdf_masks / get_gt_sdf are not defined in the reference
    # source; using the standard neural-RGBD formulation (front/back truncation
    # masks, linearly-ramped gt sdf inside the band).  front/band are {0,1} and
    # disjoint, hence fs = front*(sdf-1)^2 and tr = band*(sdf-(gt_d-z)/trunc)^2.
    gt_d = gt_d_col_ref[...].astype(f32)                       # (tn, 1)
    lo = gt_d - truncation
    hi = gt_d + truncation
    dmask = jnp.where(gt_d > 0.0, 1.0, 0.0)                    # (tn, 1)

    def sdf_head(z_ref, s_ref, acc_ref):
        z = z_ref[...].astype(f32)                             # (tn, S)
        s = s_ref[...].astype(f32)
        front_p = z < lo
        band_p = jnp.logical_and(z >= lo, z <= hi)
        front = jnp.where(front_p, 1.0, 0.0)
        band = jnp.where(band_p, 1.0, 0.0) * dmask
        fs = jnp.where(front_p, (s - 1.0) ** 2, 0.0)
        tr = band * (s - (gt_d - z) * inv_truncation) ** 2
        acc_ref[...] += jnp.concatenate(
            [jnp.sum(fs, axis=0, keepdims=True),
             jnp.sum(front, axis=0, keepdims=True),
             jnp.sum(tr, axis=0, keepdims=True),
             jnp.sum(band, axis=0, keepdims=True)], axis=0)[None]

    sdf_head(z_c_ref, s_c_ref, sdf_c_acc_ref)
    sdf_head(z_f_ref, s_f_ref, sdf_f_acc_ref)


def rgbd_loss(input_result, gt_rgb, gt_depth, *, block_rays=1024):
    """Pallas equivalent of RGBDLoss.forward (coarse + fine heads)."""
    rgb_c = input_result['rgb_coarse'].reshape(-1, 3)
    rgb_f = input_result['rgb_fine'].reshape(-1, 3)
    gt_rgb2 = gt_rgb.reshape(-1, 3)
    d_c = input_result['depth_coarse'].reshape(-1, 1)
    d_f = input_result['depth_fine'].reshape(-1, 1)
    gt_d = gt_depth.reshape(-1, 1)
    z_c = input_result['z_vals_coarse']
    s_c = input_result['sigmas_coarse']
    z_f = input_result['z_vals_fine']
    s_f = input_result['sigmas_fine']

    n_rays, s_coarse = z_c.shape
    s_fine = z_f.shape[1]

    # --- VMEM budget from the REAL padded-in-VMEM block sizes (x2 buffers) ---
    def isz(x):
        return jnp.dtype(x.dtype).itemsize

    bytes_per_ray = 0
    for a, rows in ((rgb_c, 3), (rgb_f, 3), (gt_rgb2, 3),
                    (d_c, 1), (d_f, 1), (gt_d, 1)):           # (rows, tn) blocks
        bytes_per_ray += _round_up(rows, _sublane_multiple(a.dtype)) * isz(a)
    bytes_per_ray += _round_up(1, _LANE) * isz(gt_d)          # (tn, 1) gt_d column
    for a in (z_c, s_c):                                      # (tn, S) blocks
        bytes_per_ray += _round_up(s_coarse, _LANE) * isz(a)
    for a in (z_f, s_f):
        bytes_per_ray += _round_up(s_fine, _LANE) * isz(a)

    max_tn = max(_LANE,
                 (_VMEM_INPUT_BUDGET // (2 * bytes_per_ray)) // _LANE * _LANE)
    cap = max(_LANE, (block_rays // _LANE) * _LANE)
    want_tn = _round_up(-(-n_rays // _NUM_SPLITS), _LANE)     # enough for 2 splits
    tn = max(_LANE, min(cap, max_tn, want_tn))

    bps = -(-n_rays // (_NUM_SPLITS * tn))                    # blocks per split
    n_pad = _NUM_SPLITS * bps * tn                            # zero-padded rays
    grid = (_NUM_SPLITS, bps)

    def pad_rows(x):
        if x.shape[0] == n_pad:
            return x
        return jnp.pad(x, ((0, n_pad - x.shape[0]),) + ((0, 0),) * (x.ndim - 1))

    # Layout plumbing: lane-dense transposed narrow streams + one gt_d column.
    rgb_c_t = pad_rows(rgb_c).T                               # (3, n_pad)
    rgb_f_t = pad_rows(rgb_f).T
    gt_rgb_t = pad_rows(gt_rgb2).T
    d_c_t = pad_rows(d_c).T                                   # (1, n_pad)
    d_f_t = pad_rows(d_f).T
    gt_d_row = pad_rows(gt_d).T
    gt_d_col = pad_rows(gt_d)                                 # (n_pad, 1)
    z_c_p, s_c_p = pad_rows(z_c), pad_rows(s_c)               # (n_pad, S)
    z_f_p, s_f_p = pad_rows(z_f), pad_rows(s_f)

    def row_spec(rows):
        return pl.BlockSpec((rows, tn), lambda c, i: (0, c * bps + i))

    def ray_spec(cols):
        return pl.BlockSpec((tn, cols), lambda c, i: (c * bps + i, 0))

    def acc_spec(cols):
        return pl.BlockSpec((1, 4, cols), lambda c, i: (c, 0, 0))

    f32 = jnp.float32
    out_shape = (
        jax.ShapeDtypeStruct((_NUM_SPLITS, 4, tn), f32),
        jax.ShapeDtypeStruct((_NUM_SPLITS, 4, s_coarse), f32),
        jax.ShapeDtypeStruct((_NUM_SPLITS, 4, s_fine), f32),
    )
    out_specs = (acc_spec(tn), acc_spec(s_coarse), acc_spec(s_fine))

    acc_bytes = 4 * _NUM_SPLITS * 8 * (_round_up(tn, _LANE)
                                       + _round_up(s_coarse, _LANE)
                                       + _round_up(s_fine, _LANE))
    vmem_limit = int(min(64 << 20,
                         max(16 << 20,
                             2 * tn * bytes_per_ray + 2 * acc_bytes + (4 << 20))))

    misc, sdf_c_acc, sdf_f_acc = pl.pallas_call(
        functools.partial(_rgbd_loss_kernel,
                          truncation=TRUNCATION,
                          inv_truncation=1.0 / TRUNCATION),
        out_shape=out_shape,
        grid=grid,
        in_specs=[row_spec(3), row_spec(3), row_spec(3),
                  row_spec(1), row_spec(1), row_spec(1),
                  ray_spec(1),
                  ray_spec(s_coarse), ray_spec(s_coarse),
                  ray_spec(s_fine), ray_spec(s_fine)],
        out_specs=out_specs,
        compiler_params=pltpu.CompilerParams(
            dimension_semantics=("parallel", "arbitrary"),
            vmem_limit_bytes=vmem_limit),
    )(rgb_c_t, rgb_f_t, gt_rgb_t, d_c_t, d_f_t, gt_d_row, gt_d_col,
      z_c_p, s_c_p, z_f_p, s_f_p)

    # Tiny epilogue: collapse split rows + lanes, then combine scalars.
    misc_sums = jnp.sum(misc, axis=(0, 2))                    # (4,)
    sdf_c_sums = jnp.sum(sdf_c_acc, axis=(0, 2))              # (4,)
    sdf_f_sums = jnp.sum(sdf_f_acc, axis=(0, 2))              # (4,)

    n_rgb = float(n_rays * 3)
    n_depth = float(n_rays)
    n_sdf_c = float(n_rays * s_coarse)
    n_sdf_f = float(n_rays * s_fine)

    rgb_loss = COLOR_COEF * (misc_sums[0] + misc_sums[1]) / n_rgb
    depth_loss = DEPTH_COEF * (misc_sums[2] + misc_sums[3]) / n_depth
    # Counts guarded against empty front/band masks (reference would NaN).
    fs_c = (sdf_c_sums[0] / n_sdf_c) / jnp.maximum(sdf_c_sums[1], 1.0)
    tr_c = (sdf_c_sums[2] / n_sdf_c) / jnp.maximum(sdf_c_sums[3], 1.0)
    fs_f = (sdf_f_sums[0] / n_sdf_f) / jnp.maximum(sdf_f_sums[1], 1.0)
    tr_f = (sdf_f_sums[2] / n_sdf_f) / jnp.maximum(sdf_f_sums[3], 1.0)
    loss = (rgb_loss + depth_loss
            + FREESPACE_WEIGHT * (fs_c + fs_f)
            + TRUNCATION_WEIGHT * (tr_c + tr_f))
    return loss, rgb_loss, depth_loss, fs_c, fs_f, tr_c, tr_f


def _ref_rgbd_loss(inp, gt_rgb, gt_depth):
    """Pure-JAX reference mirroring the PyTorch semantics (un-simplified math)."""
    mse = lambda a, b: jnp.mean((a - b) ** 2)
    rgb_loss = COLOR_COEF * (mse(inp['rgb_coarse'].reshape(-1, 3), gt_rgb.reshape(-1, 3))
                             + mse(inp['rgb_fine'].reshape(-1, 3), gt_rgb.reshape(-1, 3)))
    depth_loss = DEPTH_COEF * (mse(inp['depth_coarse'].reshape(-1, 1), gt_depth.reshape(-1, 1))
                               + mse(inp['depth_fine'].reshape(-1, 1), gt_depth.reshape(-1, 1)))
    gd = gt_depth.reshape(-1, 1)

    def sdf(z, s):
        front = jnp.where(z < gd - TRUNCATION, 1.0, 0.0)
        back = jnp.where(z > gd + TRUNCATION, 1.0, 0.0)
        dmask = jnp.where(gd > 0.0, 1.0, 0.0)
        sm = (1.0 - front) * (1.0 - back) * dmask
        gt_sdf = front + sm * (gd - z) / TRUNCATION
        fs = jnp.mean((s * front - gt_sdf * front) ** 2) / jnp.sum(front)
        tr = jnp.mean((s * sm - gt_sdf * sm) ** 2) / jnp.sum(sm)
        return fs, tr

    fs_c, tr_c = sdf(inp['z_vals_coarse'], inp['sigmas_coarse'])
    fs_f, tr_f = sdf(inp['z_vals_fine'], inp['sigmas_fine'])
    loss = (rgb_loss + depth_loss
            + fs_c * FREESPACE_WEIGHT + tr_c * TRUNCATION_WEIGHT
            + fs_f * FREESPACE_WEIGHT + tr_f * TRUNCATION_WEIGHT)
    return loss, rgb_loss, depth_loss, fs_c, fs_f, tr_c, tr_f


if __name__ == "__main__":
    key = jax.random.PRNGKey(0)
    N, S = 500, 64  # non-multiple-of-128 ray count exercises the zero-padding path
    ks = jax.random.split(key, 9)

    gt_rgb = jax.random.uniform(ks[0], (N, 3), jnp.float32)
    gt_depth = jax.random.uniform(ks[1], (N,), jnp.float32, minval=0.5, maxval=1.5)

    rgb_coarse = jax.random.uniform(ks[2], (N, 3), jnp.float32)
    rgb_fine = jnp.clip(rgb_coarse + 0.05 * jax.random.normal(ks[3], (N, 3)), 0.0, 1.0)
    depth_coarse = gt_depth[:, None] + 0.1 * jax.random.normal(ks[4], (N, 1))
    depth_fine = gt_depth[:, None] + 0.05 * jax.random.normal(ks[5], (N, 1))

    t = jnp.linspace(0.1, 2.0, S, dtype=jnp.float32)
    z_vals_coarse = jnp.broadcast_to(t, (N, S))
    z_vals_fine = z_vals_coarse + 0.005 * jax.random.uniform(ks[6], (N, S), jnp.float32)

    sdf_gtish = jnp.clip((gt_depth[:, None] - z_vals_coarse) / TRUNCATION, -1.0, 1.0)
    sigmas_coarse = sdf_gtish + 0.1 * jax.random.normal(ks[7], (N, S))
    sigmas_fine = sdf_gtish + 0.05 * jax.random.normal(ks[8], (N, S))

    input_result = {
        'rgb_coarse': rgb_coarse, 'rgb_fine': rgb_fine,
        'depth_coarse': depth_coarse, 'depth_fine': depth_fine,
        'z_vals_coarse': z_vals_coarse, 'sigmas_coarse': sigmas_coarse,
        'z_vals_fine': z_vals_fine, 'sigmas_fine': sigmas_fine,
    }

    ref = _ref_rgbd_loss(input_result, gt_rgb, gt_depth)

    # Default tiling: tn=256, 1 block per split (grid (2,1)).
    out_big = jax.block_until_ready(rgbd_loss(input_result, gt_rgb, gt_depth))
    # Small tiles: tn=128, 2 blocks per split -> exercises the accumulation loop.
    out_tiled = jax.block_until_ready(
        rgbd_loss(input_result, gt_rgb, gt_depth, block_rays=128))

    for out in (out_big, out_tiled):
        for got, want in zip(out, ref):
            np.testing.assert_allclose(np.asarray(got), np.asarray(want),
                                       rtol=3e-4, atol=1e-8)

    print("KERNEL_OK")
</pallas_src>

<mosaic_0001>
module attributes {stable_mosaic.version = 11 : i64} {
  func.func @_rgbd_loss_kernel(%arg0: i32, %arg1: i32, %arg2: memref<3x256xf32, #tpu.memory_space<vmem>>, %arg3: memref<3x256xf32, #tpu.memory_space<vmem>>, %arg4: memref<3x256xf32, #tpu.memory_space<vmem>>, %arg5: memref<1x256xf32, #tpu.memory_space<vmem>>, %arg6: memref<1x256xf32, #tpu.memory_space<vmem>>, %arg7: memref<1x256xf32, #tpu.memory_space<vmem>>, %arg8: memref<256x1xf32, #tpu.memory_space<vmem>>, %arg9: memref<256x64xf32, #tpu.memory_space<vmem>>, %arg10: memref<256x64xf32, #tpu.memory_space<vmem>>, %arg11: memref<256x64xf32, #tpu.memory_space<vmem>>, %arg12: memref<256x64xf32, #tpu.memory_space<vmem>>, %arg13: memref<1x4x256xf32, #tpu.memory_space<vmem>>, %arg14: memref<1x4x64xf32, #tpu.memory_space<vmem>>, %arg15: memref<1x4x64xf32, #tpu.memory_space<vmem>>) attributes {dimension_semantics = [#tpu.dimension_semantics<parallel>, #tpu.dimension_semantics<arbitrary>], iteration_bounds = array<i64: 2, 1>, scalar_prefetch = 0 : i64, scratch_operands = 0 : i64, tpu.core_type = #tpu.core_type<tc>, window_params = [{transform_indices = @transform_0, window_bounds = array<i64: 3, 256>}, {transform_indices = @transform_1, window_bounds = array<i64: 3, 256>}, {transform_indices = @transform_2, window_bounds = array<i64: 3, 256>}, {transform_indices = @transform_3, window_bounds = array<i64: 1, 256>}, {transform_indices = @transform_4, window_bounds = array<i64: 1, 256>}, {transform_indices = @transform_5, window_bounds = array<i64: 1, 256>}, {transform_indices = @transform_6, window_bounds = array<i64: 256, 1>}, {transform_indices = @transform_7, window_bounds = array<i64: 256, 64>}, {transform_indices = @transform_8, window_bounds = array<i64: 256, 64>}, {transform_indices = @transform_9, window_bounds = array<i64: 256, 64>}, {transform_indices = @transform_10, window_bounds = array<i64: 256, 64>}, {transform_indices = @transform_11, window_bounds = array<i64: 1, 4, 256>}, {transform_indices = @transform_12, window_bounds = array<i64: 1, 4, 64>}, {transform_indices = @transform_13, window_bounds = array<i64: 1, 4, 64>}]} {
    %c0_i32 = arith.constant 0 : i32
    %0 = arith.cmpi eq, %arg1, %c0_i32 : i32
    %1 = arith.extui %0 : i1 to i32
    %c0_i32_0 = arith.constant 0 : i32
    %2 = arith.cmpi ne, %1, %c0_i32_0 : i32
    scf.if %2 {
      %cst_68 = arith.constant 0.000000e+00 : f32
      %120 = vector.broadcast %cst_68 : f32 to vector<1x4x256xf32>
      %c0_69 = arith.constant 0 : index
      %c0_70 = arith.constant 0 : index
      %c0_71 = arith.constant 0 : index
      %121 = vector.load %arg13[%c0_69, %c0_70, %c0_71] : memref<1x4x256xf32, #tpu.memory_space<vmem>>, vector<1x4x256xf32>
      tpu.vector_store %arg13[%c0_69, %c0_70, %c0_71], %120 {strides = array<i32>} : memref<1x4x256xf32, #tpu.memory_space<vmem>>, vector<1x4x256xf32>,
      %cst_72 = arith.constant 0.000000e+00 : f32
      %122 = vector.broadcast %cst_72 : f32 to vector<1x4x64xf32>
      %c0_73 = arith.constant 0 : index
      %c0_74 = arith.constant 0 : index
      %c0_75 = arith.constant 0 : index
      %123 = vector.load %arg14[%c0_73, %c0_74, %c0_75] : memref<1x4x64xf32, #tpu.memory_space<vmem>>, vector<1x4x64xf32>
      tpu.vector_store %arg14[%c0_73, %c0_74, %c0_75], %122 {strides = array<i32>} : memref<1x4x64xf32, #tpu.memory_space<vmem>>, vector<1x4x64xf32>,
      %cst_76 = arith.constant 0.000000e+00 : f32
      %124 = vector.broadcast %cst_76 : f32 to vector<1x4x64xf32>
      %c0_77 = arith.constant 0 : index
      %c0_78 = arith.constant 0 : index
      %c0_79 = arith.constant 0 : index
      %125 = vector.load %arg15[%c0_77, %c0_78, %c0_79] : memref<1x4x64xf32, #tpu.memory_space<vmem>>, vector<1x4x64xf32>
      tpu.vector_store %arg15[%c0_77, %c0_78, %c0_79], %124 {strides = array<i32>} : memref<1x4x64xf32, #tpu.memory_space<vmem>>, vector<1x4x64xf32>,
    } else {
    }
    %c0 = arith.constant 0 : index
    %c0_1 = arith.constant 0 : index
    %3 = vector.load %arg4[%c0, %c0_1] : memref<3x256xf32, #tpu.memory_space<vmem>>, vector<3x256xf32>
    %c0_2 = arith.constant 0 : index
    %c0_3 = arith.constant 0 : index
    %4 = vector.load %arg7[%c0_2, %c0_3] : memref<1x256xf32, #tpu.memory_space<vmem>>, vector<1x256xf32>
    %c0_4 = arith.constant 0 : index
    %c0_5 = arith.constant 0 : index
    %5 = vector.load %arg2[%c0_4, %c0_5] : memref<3x256xf32, #tpu.memory_space<vmem>>, vector<3x256xf32>
    %6 = arith.subf %5, %3 : vector<3x256xf32>
    %7 = arith.mulf %6, %6 : vector<3x256xf32>
    %cst = arith.constant dense<0.000000e+00> : vector<256xf32>
    %8 = vector.multi_reduction <add>, %7, %cst [0] : vector<3x256xf32> to vector<256xf32>
    %9 = vector.shape_cast %8 : vector<256xf32> to vector<1x256xf32>
    %c0_6 = arith.constant 0 : index
    %c0_7 = arith.constant 0 : index
    %10 = vector.load %arg3[%c0_6, %c0_7] : memref<3x256xf32, #tpu.memory_space<vmem>>, vector<3x256xf32>
    %11 = arith.subf %10, %3 : vector<3x256xf32>
    %12 = arith.mulf %11, %11 : vector<3x256xf32>
    %cst_8 = arith.constant dense<0.000000e+00> : vector<256xf32>
    %13 = vector.multi_reduction <add>, %12, %cst_8 [0] : vector<3x256xf32> to vector<256xf32>
    %14 = vector.shape_cast %13 : vector<256xf32> to vector<1x256xf32>
    %c0_9 = arith.constant 0 : index
    %c0_10 = arith.constant 0 : index
    %15 = vector.load %arg5[%c0_9, %c0_10] : memref<1x256xf32, #tpu.memory_space<vmem>>, vector<1x256xf32>
    %16 = arith.subf %15, %4 : vector<1x256xf32>
    %17 = arith.mulf %16, %16 : vector<1x256xf32>
    %c0_11 = arith.constant 0 : index
    %c0_12 = arith.constant 0 : index
    %18 = vector.load %arg6[%c0_11, %c0_12] : memref<1x256xf32, #tpu.memory_space<vmem>>, vector<1x256xf32>
    %19 = arith.subf %18, %4 : vector<1x256xf32>
    %20 = arith.mulf %19, %19 : vector<1x256xf32>
    %c0_13 = arith.constant 0 : index
    %c0_14 = arith.constant 0 : index
    %c0_15 = arith.constant 0 : index
    %21 = vector.load %arg13[%c0_13, %c0_14, %c0_15] : memref<1x4x256xf32, #tpu.memory_space<vmem>>, vector<1x4x256xf32>
    %22 = tpu.concatenate %9, %14, %17, %20 in 0 : vector<1x256xf32>, vector<1x256xf32>, vector<1x256xf32>, vector<1x256xf32> -> vector<4x256xf32>
    %23 = vector.shape_cast %22 : vector<4x256xf32> to vector<1x4x256xf32>
    %24 = arith.addf %21, %23 : vector<1x4x256xf32>
    %c0_16 = arith.constant 0 : index
    %c0_17 = arith.constant 0 : index
    %c0_18 = arith.constant 0 : index
    %25 = vector.load %arg13[%c0_16, %c0_17, %c0_18] : memref<1x4x256xf32, #tpu.memory_space<vmem>>, vector<1x4x256xf32>
    tpu.vector_store %arg13[%c0_16, %c0_17, %c0_18], %24 {strides = array<i32>} : memref<1x4x256xf32, #tpu.memory_space<vmem>>, vector<1x4x256xf32>,
    %c0_19 = arith.constant 0 : index
    %c0_20 = arith.constant 0 : index
    %26 = vector.load %arg8[%c0_19, %c0_20] : memref<256x1xf32, #tpu.memory_space<vmem>>, vector<256x1xf32>
    %cst_21 = arith.constant 5.000000e-02 : f32
    %27 = vector.broadcast %cst_21 : f32 to vector<256x1xf32>
    %28 = arith.subf %26, %27 : vector<256x1xf32>
    %cst_22 = arith.constant 5.000000e-02 : f32
    %29 = vector.broadcast %cst_22 : f32 to vector<256x1xf32>
    %30 = arith.addf %26, %29 : vector<256x1xf32>
    %cst_23 = arith.constant 0.000000e+00 : f32
    %31 = vector.broadcast %cst_23 : f32 to vector<256x1xf32>
    %32 = arith.cmpf ogt, %26, %31 : vector<256x1xf32>
    %cst_24 = arith.constant 1.000000e+00 : f32
    %cst_25 = arith.constant 0.000000e+00 : f32
    %33 = vector.broadcast %cst_24 : f32 to vector<256x1xf32>
    %34 = vector.broadcast %cst_25 : f32 to vector<256x1xf32>
    %35 = arith.select %32, %33, %34 : vector<256x1xi1>, vector<256x1xf32>
    %c0_26 = arith.constant 0 : index
    %c0_27 = arith.constant 0 : index
    %36 = vector.load %arg9[%c0_26, %c0_27] : memref<256x64xf32, #tpu.memory_space<vmem>>, vector<256x64xf32>
    %c0_28 = arith.constant 0 : index
    %c0_29 = arith.constant 0 : index
    %37 = vector.load %arg10[%c0_28, %c0_29] : memref<256x64xf32, #tpu.memory_space<vmem>>, vector<256x64xf32>
    %38 = vector.broadcast %28 : vector<256x1xf32> to vector<256x64xf32>
    %39 = arith.cmpf olt, %36, %38 : vector<256x64xf32>
    %40 = vector.broadcast %28 : vector<256x1xf32> to vector<256x64xf32>
    %41 = arith.cmpf oge, %36, %40 : vector<256x64xf32>
    %42 = vector.broadcast %30 : vector<256x1xf32> to vector<256x64xf32>
    %43 = arith.cmpf ole, %36, %42 : vector<256x64xf32>
    %44 = arith.andi %41, %43 : vector<256x64xi1>
    %cst_30 = arith.constant 1.000000e+00 : f32
    %cst_31 = arith.constant 0.000000e+00 : f32
    %45 = vector.broadcast %cst_30 : f32 to vector<256x64xf32>
    %46 = vector.broadcast %cst_31 : f32 to vector<256x64xf32>
    %47 = arith.select %39, %45, %46 : vector<256x64xi1>, vector<256x64xf32>
    %cst_32 = arith.constant 1.000000e+00 : f32
    %cst_33 = arith.constant 0.000000e+00 : f32
    %48 = vector.broadcast %cst_32 : f32 to vector<256x64xf32>
    %49 = vector.broadcast %cst_33 : f32 to vector<256x64xf32>
    %50 = arith.select %44, %48, %49 : vector<256x64xi1>, vector<256x64xf32>
    %51 = vector.broadcast %35 : vector<256x1xf32> to vector<256x64xf32>
    %52 = arith.mulf %50, %51 : vector<256x64xf32>
    %cst_34 = arith.constant 1.000000e+00 : f32
    %53 = vector.broadcast %cst_34 : f32 to vector<256x64xf32>
    %54 = arith.subf %37, %53 : vector<256x64xf32>
    %55 = arith.mulf %54, %54 : vector<256x64xf32>
    %cst_35 = arith.constant 0.000000e+00 : f32
    %56 = vector.broadcast %cst_35 : f32 to vector<256x64xf32>
    %57 = arith.select %39, %55, %56 : vector<256x64xi1>, vector<256x64xf32>
    %58 = vector.broadcast %26 : vector<256x1xf32> to vector<256x64xf32>
    %59 = arith.subf %58, %36 : vector<256x64xf32>
    %cst_36 = arith.constant 2.000000e+01 : f32
    %60 = vector.broadcast %cst_36 : f32 to vector<256x64xf32>
    %61 = arith.mulf %59, %60 : vector<256x64xf32>
    %62 = arith.subf %37, %61 : vector<256x64xf32>
    %63 = arith.mulf %62, %62 : vector<256x64xf32>
    %64 = arith.mulf %52, %63 : vector<256x64xf32>
    %c0_37 = arith.constant 0 : index
    %c0_38 = arith.constant 0 : index
    %c0_39 = arith.constant 0 : index
    %65 = vector.load %arg14[%c0_37, %c0_38, %c0_39] : memref<1x4x64xf32, #tpu.memory_space<vmem>>, vector<1x4x64xf32>
    %cst_40 = arith.constant dense<0.000000e+00> : vector<64xf32>
    %66 = vector.multi_reduction <add>, %57, %cst_40 [0] : vector<256x64xf32> to vector<64xf32>
    %67 = vector.shape_cast %66 : vector<64xf32> to vector<1x64xf32>
    %cst_41 = arith.constant dense<0.000000e+00> : vector<64xf32>
    %68 = vector.multi_reduction <add>, %47, %cst_41 [0] : vector<256x64xf32> to vector<64xf32>
    %69 = vector.shape_cast %68 : vector<64xf32> to vector<1x64xf32>
    %cst_42 = arith.constant dense<0.000000e+00> : vector<64xf32>
    %70 = vector.multi_reduction <add>, %64, %cst_42 [0] : vector<256x64xf32> to vector<64xf32>
    %71 = vector.shape_cast %70 : vector<64xf32> to vector<1x64xf32>
    %cst_43 = arith.constant dense<0.000000e+00> : vector<64xf32>
    %72 = vector.multi_reduction <add>, %52, %cst_43 [0] : vector<256x64xf32> to vector<64xf32>
    %73 = vector.shape_cast %72 : vector<64xf32> to vector<1x64xf32>
    %74 = tpu.concatenate %67, %69, %71, %73 in 0 : vector<1x64xf32>, vector<1x64xf32>, vector<1x64xf32>, vector<1x64xf32> -> vector<4x64xf32>
    %75 = vector.shape_cast %74 : vector<4x64xf32> to vector<1x4x64xf32>
    %76 = arith.addf %65, %75 : vector<1x4x64xf32>
    %c0_44 = arith.constant 0 : index
    %c0_45 = arith.constant 0 : index
    %c0_46 = arith.constant 0 : index
    %77 = vector.load %arg14[%c0_44, %c0_45, %c0_46] : memref<1x4x64xf32, #tpu.memory_space<vmem>>, vector<1x4x64xf32>
    tpu.vector_store %arg14[%c0_44, %c0_45, %c0_46], %76 {strides = array<i32>} : memref<1x4x64xf32, #tpu.memory_space<vmem>>, vector<1x4x64xf32>,
    %c0_47 = arith.constant 0 : index
    %c0_48 = arith.constant 0 : index
    %78 = vector.load %arg11[%c0_47, %c0_48] : memref<256x64xf32, #tpu.memory_space<vmem>>, vector<256x64xf32>
    %c0_49 = arith.constant 0 : index
    %c0_50 = arith.constant 0 : index
    %79 = vector.load %arg12[%c0_49, %c0_50] : memref<256x64xf32, #tpu.memory_space<vmem>>, vector<256x64xf32>
    %80 = vector.broadcast %28 : vector<256x1xf32> to vector<256x64xf32>
    %81 = arith.cmpf olt, %78, %80 : vector<256x64xf32>
    %82 = vector.broadcast %28 : vector<256x1xf32> to vector<256x64xf32>
    %83 = arith.cmpf oge, %78, %82 : vector<256x64xf32>
    %84 = vector.broadcast %30 : vector<256x1xf32> to vector<256x64xf32>
    %85 = arith.cmpf ole, %78, %84 : vector<256x64xf32>
    %86 = arith.andi %83, %85 : vector<256x64xi1>
    %cst_51 = arith.constant 1.000000e+00 : f32
    %cst_52 = arith.constant 0.000000e+00 : f32
    %87 = vector.broadcast %cst_51 : f32 to vector<256x64xf32>
    %88 = vector.broadcast %cst_52 : f32 to vector<256x64xf32>
    %89 = arith.select %81, %87, %88 : vector<256x64xi1>, vector<256x64xf32>
    %cst_53 = arith.constant 1.000000e+00 : f32
    %cst_54 = arith.constant 0.000000e+00 : f32
    %90 = vector.broadcast %cst_53 : f32 to vector<256x64xf32>
    %91 = vector.broadcast %cst_54 : f32 to vector<256x64xf32>
    %92 = arith.select %86, %90, %91 : vector<256x64xi1>, vector<256x64xf32>
    %93 = vector.broadcast %35 : vector<256x1xf32> to vector<256x64xf32>
    %94 = arith.mulf %92, %93 : vector<256x64xf32>
    %cst_55 = arith.constant 1.000000e+00 : f32
    %95 = vector.broadcast %cst_55 : f32 to vector<256x64xf32>
    %96 = arith.subf %79, %95 : vector<256x64xf32>
    %97 = arith.mulf %96, %96 : vector<256x64xf32>
    %cst_56 = arith.constant 0.000000e+00 : f32
    %98 = vector.broadcast %cst_56 : f32 to vector<256x64xf32>
    %99 = arith.select %81, %97, %98 : vector<256x64xi1>, vector<256x64xf32>
    %100 = vector.broadcast %26 : vector<256x1xf32> to vector<256x64xf32>
    %101 = arith.subf %100, %78 : vector<256x64xf32>
    %cst_57 = arith.constant 2.000000e+01 : f32
    %102 = vector.broadcast %cst_57 : f32 to vector<256x64xf32>
    %103 = arith.mulf %101, %102 : vector<256x64xf32>
    %104 = arith.subf %79, %103 : vector<256x64xf32>
    %105 = arith.mulf %104, %104 : vector<256x64xf32>
    %106 = arith.mulf %94, %105 : vector<256x64xf32>
    %c0_58 = arith.constant 0 : index
    %c0_59 = arith.constant 0 : index
    %c0_60 = arith.constant 0 : index
    %107 = vector.load %arg15[%c0_58, %c0_59, %c0_60] : memref<1x4x64xf32, #tpu.memory_space<vmem>>, vector<1x4x64xf32>
    %cst_61 = arith.constant dense<0.000000e+00> : vector<64xf32>
    %108 = vector.multi_reduction <add>, %99, %cst_61 [0] : vector<256x64xf32> to vector<64xf32>
    %109 = vector.shape_cast %108 : vector<64xf32> to vector<1x64xf32>
    %cst_62 = arith.constant dense<0.000000e+00> : vector<64xf32>
    %110 = vector.multi_reduction <add>, %89, %cst_62 [0] : vector<256x64xf32> to vector<64xf32>
    %111 = vector.shape_cast %110 : vector<64xf32> to vector<1x64xf32>
    %cst_63 = arith.constant dense<0.000000e+00> : vector<64xf32>
    %112 = vector.multi_reduction <add>, %106, %cst_63 [0] : vector<256x64xf32> to vector<64xf32>
    %113 = vector.shape_cast %112 : vector<64xf32> to vector<1x64xf32>
    %cst_64 = arith.constant dense<0.000000e+00> : vector<64xf32>
    %114 = vector.multi_reduction <add>, %94, %cst_64 [0] : vector<256x64xf32> to vector<64xf32>
    %115 = vector.shape_cast %114 : vector<64xf32> to vector<1x64xf32>
    %116 = tpu.concatenate %109, %111, %113, %115 in 0 : vector<1x64xf32>, vector<1x64xf32>, vector<1x64xf32>, vector<1x64xf32> -> vector<4x64xf32>
    %117 = vector.shape_cast %116 : vector<4x64xf32> to vector<1x4x64xf32>
    %118 = arith.addf %107, %117 : vector<1x4x64xf32>
    %c0_65 = arith.constant 0 : index
    %c0_66 = arith.constant 0 : index
    %c0_67 = arith.constant 0 : index
    %119 = vector.load %arg15[%c0_65, %c0_66, %c0_67] : memref<1x4x64xf32, #tpu.memory_space<vmem>>, vector<1x4x64xf32>
    tpu.vector_store %arg15[%c0_65, %c0_66, %c0_67], %118 {strides = array<i32>} : memref<1x4x64xf32, #tpu.memory_space<vmem>>, vector<1x4x64xf32>,
    return
  }
  func.func @transform_0(%arg0: i32, %arg1: i32) -> (i32, i32) {
    %c1_i32 = arith.constant 1 : i32
    %0 = arith.muli %arg0, %c1_i32 : i32
    %1 = arith.addi %0, %arg1 : i32
    %c0_i32 = arith.constant 0 : i32
    %c0_i32_0 = arith.constant 0 : i32
    return %c0_i32, %1 : i32, i32
  }
  func.func @transform_1(%arg0: i32, %arg1: i32) -> (i32, i32) {
    %c1_i32 = arith.constant 1 : i32
    %0 = arith.muli %arg0, %c1_i32 : i32
    %1 = arith.addi %0, %arg1 : i32
    %c0_i32 = arith.constant 0 : i32
    %c0_i32_0 = arith.constant 0 : i32
    return %c0_i32, %1 : i32, i32
  }
  func.func @transform_2(%arg0: i32, %arg1: i32) -> (i32, i32) {
    %c1_i32 = arith.constant 1 : i32
    %0 = arith.muli %arg0, %c1_i32 : i32
    %1 = arith.addi %0, %arg1 : i32
    %c0_i32 = arith.constant 0 : i32
    %c0_i32_0 = arith.constant 0 : i32
    return %c0_i32, %1 : i32, i32
  }
  func.func @transform_3(%arg0: i32, %arg1: i32) -> (i32, i32) {
    %c1_i32 = arith.constant 1 : i32
    %0 = arith.muli %arg0, %c1_i32 : i32
    %1 = arith.addi %0, %arg1 : i32
    %c0_i32 = arith.constant 0 : i32
    %c0_i32_0 = arith.constant 0 : i32
    return %c0_i32, %1 : i32, i32
  }
  func.func @transform_4(%arg0: i32, %arg1: i32) -> (i32, i32) {
    %c1_i32 = arith.constant 1 : i32
    %0 = arith.muli %arg0, %c1_i32 : i32
    %1 = arith.addi %0, %arg1 : i32
    %c0_i32 = arith.constant 0 : i32
    %c0_i32_0 = arith.constant 0 : i32
    return %c0_i32, %1 : i32, i32
  }
  func.func @transform_5(%arg0: i32, %arg1: i32) -> (i32, i32) {
    %c1_i32 = arith.constant 1 : i32
    %0 = arith.muli %arg0, %c1_i32 : i32
    %1 = arith.addi %0, %arg1 : i32
    %c0_i32 = arith.constant 0 : i32
    %c0_i32_0 = arith.constant 0 : i32
    return %c0_i32, %1 : i32, i32
  }
  func.func @transform_6(%arg0: i32, %arg1: i32) -> (i32, i32) {
    %c1_i32 = arith.constant 1 : i32
    %0 = arith.muli %arg0, %c1_i32 : i32
    %1 = arith.addi %0, %arg1 : i32
    %c0_i32 = arith.constant 0 : i32
    %c0_i32_0 = arith.constant 0 : i32
    return %1, %c0_i32 : i32, i32
  }
  func.func @transform_7(%arg0: i32, %arg1: i32) -> (i32, i32) {
    %c1_i32 = arith.constant 1 : i32
    %0 = arith.muli %arg0, %c1_i32 : i32
    %1 = arith.addi %0, %arg1 : i32
    %c0_i32 = arith.constant 0 : i32
    %c0_i32_0 = arith.constant 0 : i32
    return %1, %c0_i32 : i32, i32
  }
  func.func @transform_8(%arg0: i32, %arg1: i32) -> (i32, i32) {
    %c1_i32 = arith.constant 1 : i32
    %0 = arith.muli %arg0, %c1_i32 : i32
    %1 = arith.addi %0, %arg1 : i32
    %c0_i32 = arith.constant 0 : i32
    %c0_i32_0 = arith.constant 0 : i32
    return %1, %c0_i32 : i32, i32
  }
  func.func @transform_9(%arg0: i32, %arg1: i32) -> (i32, i32) {
    %c1_i32 = arith.constant 1 : i32
    %0 = arith.muli %arg0, %c1_i32 : i32
    %1 = arith.addi %0, %arg1 : i32
    %c0_i32 = arith.constant 0 : i32
    %c0_i32_0 = arith.constant 0 : i32
    return %1, %c0_i32 : i32, i32
  }
  func.func @transform_10(%arg0: i32, %arg1: i32) -> (i32, i32) {
    %c1_i32 = arith.constant 1 : i32
    %0 = arith.muli %arg0, %c1_i32 : i32
    %1 = arith.addi %0, %arg1 : i32
    %c0_i32 = arith.constant 0 : i32
    %c0_i32_0 = arith.constant 0 : i32
    return %1, %c0_i32 : i32, i32
  }
  func.func @transform_11(%arg0: i32, %arg1: i32) -> (i32, i32, i32) {
    %c0_i32 = arith.constant 0 : i32
    %c0_i32_0 = arith.constant 0 : i32
    %c0_i32_1 = arith.constant 0 : i32
    return %arg0, %c0_i32, %c0_i32_0 : i32, i32, i32
  }
  func.func @transform_12(%arg0: i32, %arg1: i32) -> (i32, i32, i32) {
    %c0_i32 = arith.constant 0 : i32
    %c0_i32_0 = arith.constant 0 : i32
    %c0_i32_1 = arith.constant 0 : i32
    return %arg0, %c0_i32, %c0_i32_0 : i32, i32, i32
  }
  func.func @transform_13(%arg0: i32, %arg1: i32) -> (i32, i32, i32) {
    %c0_i32 = arith.constant 0 : i32
    %c0_i32_0 = arith.constant 0 : i32
    %c0_i32_1 = arith.constant 0 : i32
    return %arg0, %c0_i32, %c0_i32_0 : i32, i32, i32
  }
}

</mosaic_0001>

<llo_original>
// kernel: tpu_custom_call.1
$region0: #{tpu_custom_call.1}
  #allocation0 [shape = 'u32[]', space=smem, size = 0x4, offset = 0x4, fixed_abs, tag = 'smem constant byte address 0x4 - core index']
  #allocation1 [shape = 'u32[144,128]{1,0:T(1,128)}', space=vmem, size = 0x12000, scoped, tag = 'internal scratch']
  %s0 = inlined_call_operand.vmem [shape: f32[3,512], index: 0, kind: input, shape index: {}]
  %s1 = inlined_call_operand.vmem [shape: f32[3,512], index: 1, kind: input, shape index: {}]
  %s2 = inlined_call_operand.vmem [shape: f32[3,512], index: 2, kind: input, shape index: {}]
  %s3 = inlined_call_operand.vmem [shape: f32[1,512], index: 3, kind: input, shape index: {}]
  %s4 = inlined_call_operand.vmem [shape: f32[1,512], index: 4, kind: input, shape index: {}]
  %s5 = inlined_call_operand.vmem [shape: f32[1,512], index: 5, kind: input, shape index: {}]
  %s6 = inlined_call_operand.vmem [shape: f32[512,1], index: 6, kind: input, shape index: {}]
  %s7 = inlined_call_operand.vmem [shape: f32[512,64], index: 7, kind: input, shape index: {}]
  %s8 = inlined_call_operand.vmem [shape: f32[512,64], index: 8, kind: input, shape index: {}]
  %s9 = inlined_call_operand.vmem [shape: f32[512,64], index: 9, kind: input, shape index: {}]
  %s10 = inlined_call_operand.vmem [shape: f32[512,64], index: 10, kind: input, shape index: {}]
  %s11 = inlined_call_operand.hbm [shape: f32[2,4,256], index: 11, kind: output, shape index: {0}]
  %s12 = inlined_call_operand.hbm [shape: f32[2,4,64], index: 12, kind: output, shape index: {1}]
  %s13 = inlined_call_operand.hbm [shape: f32[2,4,64], index: 13, kind: output, shape index: {2}]
  %14 = xla_tuple %s11, %s12, %s13
  %s15 = sld [smem:[#allocation0]]
  $region97: #{tpu_custom_call.1} parent=0
    _
  %s17 = ssub.s32 1, %s15
  %s18 = scalar_select 0, %s17, %s15
  $region1: #{tpu_custom_call.1} parent=0
    #allocation2 [shape = 'u8[8192]{0}', space=vmem, size = 0x2000, scoped, tag = 'output window, operand 0']
    #allocation3 [shape = 's32[2]{0}', space=sflag, size = 0x8, scoped, tag = 'scoped memory for tpu_custom_call.1']
    #allocation4 [shape = 'u8[4096]{0}', space=vmem, size = 0x1000, scoped, tag = 'output window, operand 1']
    #allocation5 [shape = 's32[2]{0}', space=sflag, size = 0x8, scoped, tag = 'scoped memory for tpu_custom_call.1']
    #allocation6 [shape = 'u8[4096]{0}', space=vmem, size = 0x1000, scoped, tag = 'output window, operand 2']
    %19 = vsyncpa [#allocation3], 0
    %s20 = scalar_lea.sflag [#allocation3], 1
    %21 = vsyncpa %s20, 0
    %22 = vsyncpa [#allocation5], 0
    %s23 = scalar_lea.sflag [#allocation5], 1
    %24 = vsyncpa %s23, 0
    loop: start=0, step=1, limit=4
    $region2: #{tpu_custom_call.1} parent=1 // loop_pre_header
      _
    $region3: #{tpu_custom_call.1} parent=1 // loop_header
      %s26 = sphi 0, %s30
      %p27 = scmp.ge.s32.totalorder %s26, 4
      %s33 = sphi 0, %s45
      %s34 = sphi 0, %s41
      %s35 = sphi 0, %s33
      %s36 = sphi 0, %s34
      %s37 = sphi 0, %s35
      %s38 = sphi 0, %s36
      %s50 = sphi 0, %s52
      %s53 = sphi 0, %s50
      %s54 = sphi 0, %s53
      %s70 = sphi 0, %s54
      %s78 = sphi 0, %s80
      %s81 = sphi 0, %s78
      %s82 = sphi 0, %s81
      %s98 = sphi 0, %s82
      %s106 = sphi 0, %s108
      %s109 = sphi 0, %s106
      %s110 = sphi 0, %s109
      %s126 = sphi 0, %s110
      %s134 = sphi 0, %s136
      %s137 = sphi 0, %s134
      %s138 = sphi 0, %s137
      %s154 = sphi 0, %s138
      %s162 = sphi 0, %s164
      %s165 = sphi 0, %s162
      %s166 = sphi 0, %s165
      %s182 = sphi 0, %s166
      %s190 = sphi 0, %s192
      %s193 = sphi 0, %s190
      %s194 = sphi 0, %s193
      %s210 = sphi 0, %s194
      %s218 = sphi 0, %s220
      %s221 = sphi 0, %s218
      %s222 = sphi 0, %s221
      %s238 = sphi 0, %s222
      %s246 = sphi 0, %s248
      %s249 = sphi 0, %s246
      %s250 = sphi 0, %s249
      %s266 = sphi 0, %s250
      %s274 = sphi 0, %s276
      %s277 = sphi 0, %s274
      %s278 = sphi 0, %s277
      %s294 = sphi 0, %s278
      %s302 = sphi 0, %s304
      %s305 = sphi 0, %s302
      %s306 = sphi 0, %s305
      %s322 = sphi 0, %s306
      %s330 = sphi 0, %s332
      %s333 = sphi 0, %s330
      %s334 = sphi 0, %s333
      %s350 = sphi 0, %s334
      %s356 = sphi 0, %s358
      %s359 = sphi 0, %s356
      %s360 = sphi 0, %s359
      %s376 = sphi 0, %s360
      %s382 = sphi 0, %s384
      %s385 = sphi 0, %s382
      %s386 = sphi 0, %s385
      %s402 = sphi 0, %s386
      %s408 = sphi 0, %s410
      %s411 = sphi 0, %s408
      %s412 = sphi 0, %s411
      %s428 = sphi 0, %s412
    $region4: #{tpu_custom_call.1} parent=1 // loop_header_branch
      %29 = sbr.rel (%p27) target = $region8
    $region5: #{tpu_custom_call.1} parent=1 // loop_body
      %s31 = ssub.s32 %s26, 1
      %s32 = ssub.s32 %s26, 2
      %s39 = sadd.s32 1, %s34
      %p40 = scmp.ge.s32.totalorder %s39, 1
      %s41 = scalar_select %p40, 0, %s39
      %s42 = sadd.s32 1, %s33
      %s43 = scalar_select %p40, %s42, %s33
      %p44 = scmp.ge.s32.totalorder %s43, 2
      %s45 = scalar_select %p44, 0, %s43
      %s46 = sadd.s32 %s33, %s34
      %s47 = sadd.s32 %s45, %s41
      %s48 = ssub.s32 %s46, %s47
      %p49 = scmp.eq.s32.totalorder %s48, 0
      %s51 = sadd.s32 %s50, 1
      %s52 = scalar_select %p49, %s50, %s51
      %p55 = pneg %p49
      %p56 = scmp.eq.s32.totalorder %s26, 1
      %p57 = por %p55, %p56
      %p58 = scmp.ne.s32.totalorder %s50, %s53
      %p59 = scmp.eq.s32.totalorder %s26, 0
      %p60 = por %p58, %p59
      %p61 = scmp.ne.s32.totalorder %s50, %s53
      %p62 = scmp.eq.s32.totalorder %s31, 1
      %p63 = por %p61, %p62
      %p64 = scmp.ne.s32.totalorder %s53, %s54
      %p65 = scmp.eq.s32.totalorder %s31, 0
      %p66 = por %p64, %p65
      %p67 = scmp.ne.s32.totalorder %s53, %s54
      %p68 = scmp.eq.s32.totalorder %s32, 1
      %p69 = por %p67, %p68
      %p71 = scmp.ne.s32.totalorder %s54, %s70
      %p72 = scmp.eq.s32.totalorder %s32, 0
      %p73 = por %p71, %p72
      %s74 = sadd.s32 %s33, %s34
      %s75 = sadd.s32 %s45, %s41
      %s76 = ssub.s32 %s74, %s75
      %p77 = scmp.eq.s32.totalorder %s76, 0
      %s79 = sadd.s32 %s78, 1
      %s80 = scalar_select %p77, %s78, %s79
      %p83 = pneg %p77
      %p84 = scmp.eq.s32.totalorder %s26, 1
      %p85 = por %p83, %p84
      %p86 = scmp.ne.s32.totalorder %s78, %s81
      %p87 = scmp.eq.s32.totalorder %s26, 0
      %p88 = por %p86, %p87
      %p89 = scmp.ne.s32.totalorder %s78, %s81
      %p90 = scmp.eq.s32.totalorder %s31, 1
      %p91 = por %p89, %p90
      %p92 = scmp.ne.s32.totalorder %s81, %s82
      %p93 = scmp.eq.s32.totalorder %s31, 0
      %p94 = por %p92, %p93
      %p95 = scmp.ne.s32.totalorder %s81, %s82
      %p96 = scmp.eq.s32.totalorder %s32, 1
      %p97 = por %p95, %p96
      %p99 = scmp.ne.s32.totalorder %s82, %s98
      %p100 = scmp.eq.s32.totalorder %s32, 0
      %p101 = por %p99, %p100
      %s102 = sadd.s32 %s33, %s34
      %s103 = sadd.s32 %s45, %s41
      %s104 = ssub.s32 %s102, %s103
      %p105 = scmp.eq.s32.totalorder %s104, 0
      %s107 = sadd.s32 %s106, 1
      %s108 = scalar_select %p105, %s106, %s107
      %p111 = pneg %p105
      %p112 = scmp.eq.s32.totalorder %s26, 1
      %p113 = por %p111, %p112
      %p114 = scmp.ne.s32.totalorder %s106, %s109
      %p115 = scmp.eq.s32.totalorder %s26, 0
      %p116 = por %p114, %p115
      %p117 = scmp.ne.s32.totalorder %s106, %s109
      %p118 = scmp.eq.s32.totalorder %s31, 1
      %p119 = por %p117, %p118
      %p120 = scmp.ne.s32.totalorder %s109, %s110
      %p121 = scmp.eq.s32.totalorder %s31, 0
      %p122 = por %p120, %p121
      %p123 = scmp.ne.s32.totalorder %s109, %s110
      %p124 = scmp.eq.s32.totalorder %s32, 1
      %p125 = por %p123, %p124
      %p127 = scmp.ne.s32.totalorder %s110, %s126
      %p128 = scmp.eq.s32.totalorder %s32, 0
      %p129 = por %p127, %p128
      %s130 = sadd.s32 %s33, %s34
      %s131 = sadd.s32 %s45, %s41
      %s132 = ssub.s32 %s130, %s131
      %p133 = scmp.eq.s32.totalorder %s132, 0
      %s135 = sadd.s32 %s134, 1
      %s136 = scalar_select %p133, %s134, %s135
      %p139 = pneg %p133
      %p140 = scmp.eq.s32.totalorder %s26, 1
      %p141 = por %p139, %p140
      %p142 = scmp.ne.s32.totalorder %s134, %s137
      %p143 = scmp.eq.s32.totalorder %s26, 0
      %p144 = por %p142, %p143
      %p145 = scmp.ne.s32.totalorder %s134, %s137
      %p146 = scmp.eq.s32.totalorder %s31, 1
      %p147 = por %p145, %p146
      %p148 = scmp.ne.s32.totalorder %s137, %s138
      %p149 = scmp.eq.s32.totalorder %s31, 0
      %p150 = por %p148, %p149
      %p151 = scmp.ne.s32.totalorder %s137, %s138
      %p152 = scmp.eq.s32.totalorder %s32, 1
      %p153 = por %p151, %p152
      %p155 = scmp.ne.s32.totalorder %s138, %s154
      %p156 = scmp.eq.s32.totalorder %s32, 0
      %p157 = por %p155, %p156
      %s158 = sadd.s32 %s33, %s34
      %s159 = sadd.s32 %s45, %s41
      %s160 = ssub.s32 %s158, %s159
      %p161 = scmp.eq.s32.totalorder %s160, 0
      %s163 = sadd.s32 %s162, 1
      %s164 = scalar_select %p161, %s162, %s163
      %p167 = pneg %p161
      %p168 = scmp.eq.s32.totalorder %s26, 1
      %p169 = por %p167, %p168
      %p170 = scmp.ne.s32.totalorder %s162, %s165
      %p171 = scmp.eq.s32.totalorder %s26, 0
      %p172 = por %p170, %p171
      %p173 = scmp.ne.s32.totalorder %s162, %s165
      %p174 = scmp.eq.s32.totalorder %s31, 1
      %p175 = por %p173, %p174
      %p176 = scmp.ne.s32.totalorder %s165, %s166
      %p177 = scmp.eq.s32.totalorder %s31, 0
      %p178 = por %p176, %p177
      %p179 = scmp.ne.s32.totalorder %s165, %s166
      %p180 = scmp.eq.s32.totalorder %s32, 1
      %p181 = por %p179, %p180
      %p183 = scmp.ne.s32.totalorder %s166, %s182
      %p184 = scmp.eq.s32.totalorder %s32, 0
      %p185 = por %p183, %p184
      %s186 = sadd.s32 %s33, %s34
      %s187 = sadd.s32 %s45, %s41
      %s188 = ssub.s32 %s186, %s187
      %p189 = scmp.eq.s32.totalorder %s188, 0
      %s191 = sadd.s32 %s190, 1
      %s192 = scalar_select %p189, %s190, %s191
      %p195 = pneg %p189
      %p196 = scmp.eq.s32.totalorder %s26, 1
      %p197 = por %p195, %p196
      %p198 = scmp.ne.s32.totalorder %s190, %s193
      %p199 = scmp.eq.s32.totalorder %s26, 0
      %p200 = por %p198, %p199
      %p201 = scmp.ne.s32.totalorder %s190, %s193
      %p202 = scmp.eq.s32.totalorder %s31, 1
      %p203 = por %p201, %p202
      %p204 = scmp.ne.s32.totalorder %s193, %s194
      %p205 = scmp.eq.s32.totalorder %s31, 0
      %p206 = por %p204, %p205
      %p207 = scmp.ne.s32.totalorder %s193, %s194
      %p208 = scmp.eq.s32.totalorder %s32, 1
      %p209 = por %p207, %p208
      %p211 = scmp.ne.s32.totalorder %s194, %s210
      %p212 = scmp.eq.s32.totalorder %s32, 0
      %p213 = por %p211, %p212
      %s214 = sadd.s32 %s33, %s34
      %s215 = sadd.s32 %s45, %s41
      %s216 = ssub.s32 %s214, %s215
      %p217 = scmp.eq.s32.totalorder %s216, 0
      %s219 = sadd.s32 %s218, 1
      %s220 = scalar_select %p217, %s218, %s219
      %p223 = pneg %p217
      %p224 = scmp.eq.s32.totalorder %s26, 1
      %p225 = por %p223, %p224
      %p226 = scmp.ne.s32.totalorder %s218, %s221
      %p227 = scmp.eq.s32.totalorder %s26, 0
      %p228 = por %p226, %p227
      %p229 = scmp.ne.s32.totalorder %s218, %s221
      %p230 = scmp.eq.s32.totalorder %s31, 1
      %p231 = por %p229, %p230
      %p232 = scmp.ne.s32.totalorder %s221, %s222
      %p233 = scmp.eq.s32.totalorder %s31, 0
      %p234 = por %p232, %p233
      %p235 = scmp.ne.s32.totalorder %s221, %s222
      %p236 = scmp.eq.s32.totalorder %s32, 1
      %p237 = por %p235, %p236
      %p239 = scmp.ne.s32.totalorder %s222, %s238
      %p240 = scmp.eq.s32.totalorder %s32, 0
      %p241 = por %p239, %p240
      %s242 = sadd.s32 %s33, %s34
      %s243 = sadd.s32 %s45, %s41
      %s244 = ssub.s32 %s242, %s243
      %p245 = scmp.eq.s32.totalorder %s244, 0
      %s247 = sadd.s32 %s246, 1
      %s248 = scalar_select %p245, %s246, %s247
      %p251 = pneg %p245
      %p252 = scmp.eq.s32.totalorder %s26, 1
      %p253 = por %p251, %p252
      %p254 = scmp.ne.s32.totalorder %s246, %s249
      %p255 = scmp.eq.s32.totalorder %s26, 0
      %p256 = por %p254, %p255
      %p257 = scmp.ne.s32.totalorder %s246, %s249
      %p258 = scmp.eq.s32.totalorder %s31, 1
      %p259 = por %p257, %p258
      %p260 = scmp.ne.s32.totalorder %s249, %s250
      %p261 = scmp.eq.s32.totalorder %s31, 0
      %p262 = por %p260, %p261
      %p263 = scmp.ne.s32.totalorder %s249, %s250
      %p264 = scmp.eq.s32.totalorder %s32, 1
      %p265 = por %p263, %p264
      %p267 = scmp.ne.s32.totalorder %s250, %s266
      %p268 = scmp.eq.s32.totalorder %s32, 0
      %p269 = por %p267, %p268
      %s270 = sadd.s32 %s33, %s34
      %s271 = sadd.s32 %s45, %s41
      %s272 = ssub.s32 %s270, %s271
      %p273 = scmp.eq.s32.totalorder %s272, 0
      %s275 = sadd.s32 %s274, 1
      %s276 = scalar_select %p273, %s274, %s275
      %p279 = pneg %p273
      %p280 = scmp.eq.s32.totalorder %s26, 1
      %p281 = por %p279, %p280
      %p282 = scmp.ne.s32.totalorder %s274, %s277
      %p283 = scmp.eq.s32.totalorder %s26, 0
      %p284 = por %p282, %p283
      %p285 = scmp.ne.s32.totalorder %s274, %s277
      %p286 = scmp.eq.s32.totalorder %s31, 1
      %p287 = por %p285, %p286
      %p288 = scmp.ne.s32.totalorder %s277, %s278
      %p289 = scmp.eq.s32.totalorder %s31, 0
      %p290 = por %p288, %p289
      %p291 = scmp.ne.s32.totalorder %s277, %s278
      %p292 = scmp.eq.s32.totalorder %s32, 1
      %p293 = por %p291, %p292
      %p295 = scmp.ne.s32.totalorder %s278, %s294
      %p296 = scmp.eq.s32.totalorder %s32, 0
      %p297 = por %p295, %p296
      %s298 = sadd.s32 %s33, %s34
      %s299 = sadd.s32 %s45, %s41
      %s300 = ssub.s32 %s298, %s299
      %p301 = scmp.eq.s32.totalorder %s300, 0
      %s303 = sadd.s32 %s302, 1
      %s304 = scalar_select %p301, %s302, %s303
      %p307 = pneg %p301
      %p308 = scmp.eq.s32.totalorder %s26, 1
      %p309 = por %p307, %p308
      %p310 = scmp.ne.s32.totalorder %s302, %s305
      %p311 = scmp.eq.s32.totalorder %s26, 0
      %p312 = por %p310, %p311
      %p313 = scmp.ne.s32.totalorder %s302, %s305
      %p314 = scmp.eq.s32.totalorder %s31, 1
      %p315 = por %p313, %p314
      %p316 = scmp.ne.s32.totalorder %s305, %s306
      %p317 = scmp.eq.s32.totalorder %s31, 0
      %p318 = por %p316, %p317
      %p319 = scmp.ne.s32.totalorder %s305, %s306
      %p320 = scmp.eq.s32.totalorder %s32, 1
      %p321 = por %p319, %p320
      %p323 = scmp.ne.s32.totalorder %s306, %s322
      %p324 = scmp.eq.s32.totalorder %s32, 0
      %p325 = por %p323, %p324
      %s326 = sadd.s32 %s33, %s34
      %s327 = sadd.s32 %s45, %s41
      %s328 = ssub.s32 %s326, %s327
      %p329 = scmp.eq.s32.totalorder %s328, 0
      %s331 = sadd.s32 %s330, 1
      %s332 = scalar_select %p329, %s330, %s331
      %p335 = pneg %p329
      %p336 = scmp.eq.s32.totalorder %s26, 1
      %p337 = por %p335, %p336
      %p338 = scmp.ne.s32.totalorder %s330, %s333
      %p339 = scmp.eq.s32.totalorder %s26, 0
      %p340 = por %p338, %p339
      %p341 = scmp.ne.s32.totalorder %s330, %s333
      %p342 = scmp.eq.s32.totalorder %s31, 1
      %p343 = por %p341, %p342
      %p344 = scmp.ne.s32.totalorder %s333, %s334
      %p345 = scmp.eq.s32.totalorder %s31, 0
      %p346 = por %p344, %p345
      %p347 = scmp.ne.s32.totalorder %s333, %s334
      %p348 = scmp.eq.s32.totalorder %s32, 1
      %p349 = por %p347, %p348
      %p351 = scmp.ne.s32.totalorder %s334, %s350
      %p352 = scmp.eq.s32.totalorder %s32, 0
      %p353 = por %p351, %p352
      %s354 = ssub.s32 %s33, %s45
      %p355 = scmp.eq.s32.totalorder %s354, 0
      %s357 = sadd.s32 %s356, 1
      %s358 = scalar_select %p355, %s356, %s357
      %p361 = pneg %p355
      %p362 = scmp.eq.s32.totalorder %s26, 1
      %p363 = por %p361, %p362
      %p364 = scmp.ne.s32.totalorder %s356, %s359
      %p365 = scmp.eq.s32.totalorder %s26, 0
      %p366 = por %p364, %p365
      %p367 = scmp.ne.s32.totalorder %s356, %s359
      %p368 = scmp.eq.s32.totalorder %s31, 1
      %p369 = por %p367, %p368
      %p370 = scmp.ne.s32.totalorder %s359, %s360
      %p371 = scmp.eq.s32.totalorder %s31, 0
      %p372 = por %p370, %p371
      %p373 = scmp.ne.s32.totalorder %s359, %s360
      %p374 = scmp.eq.s32.totalorder %s32, 1
      %p375 = por %p373, %p374
      %p377 = scmp.ne.s32.totalorder %s360, %s376
      %p378 = scmp.eq.s32.totalorder %s32, 0
      %p379 = por %p377, %p378
      %s380 = ssub.s32 %s33, %s45
      %p381 = scmp.eq.s32.totalorder %s380, 0
      %s383 = sadd.s32 %s382, 1
      %s384 = scalar_select %p381, %s382, %s383
      %p387 = pneg %p381
      %p388 = scmp.eq.s32.totalorder %s26, 1
      %p389 = por %p387, %p388
      %p390 = scmp.ne.s32.totalorder %s382, %s385
      %p391 = scmp.eq.s32.totalorder %s26, 0
      %p392 = por %p390, %p391
      %p393 = scmp.ne.s32.totalorder %s382, %s385
      %p394 = scmp.eq.s32.totalorder %s31, 1
      %p395 = por %p393, %p394
      %p396 = scmp.ne.s32.totalorder %s385, %s386
      %p397 = scmp.eq.s32.totalorder %s31, 0
      %p398 = por %p396, %p397
      %p399 = scmp.ne.s32.totalorder %s385, %s386
      %p400 = scmp.eq.s32.totalorder %s32, 1
      %p401 = por %p399, %p400
      %p403 = scmp.ne.s32.totalorder %s386, %s402
      %p404 = scmp.eq.s32.totalorder %s32, 0
      %p405 = por %p403, %p404
      %s406 = ssub.s32 %s33, %s45
      %p407 = scmp.eq.s32.totalorder %s406, 0
      %s409 = sadd.s32 %s408, 1
      %s410 = scalar_select %p407, %s408, %s409
      %p413 = pneg %p407
      %p414 = scmp.eq.s32.totalorder %s26, 1
      %p415 = por %p413, %p414
      %p416 = scmp.ne.s32.totalorder %s408, %s411
      %p417 = scmp.eq.s32.totalorder %s26, 0
      %p418 = por %p416, %p417
      %p419 = scmp.ne.s32.totalorder %s408, %s411
      %p420 = scmp.eq.s32.totalorder %s31, 1
      %p421 = por %p419, %p420
      %p422 = scmp.ne.s32.totalorder %s411, %s412
      %p423 = scmp.eq.s32.totalorder %s31, 0
      %p424 = por %p422, %p423
      %p425 = scmp.ne.s32.totalorder %s411, %s412
      %p426 = scmp.eq.s32.totalorder %s32, 1
      %p427 = por %p425, %p426
      %p429 = scmp.ne.s32.totalorder %s412, %s428
      %p430 = scmp.eq.s32.totalorder %s32, 0
      %p431 = por %p429, %p430
      %p432 = scmp.le.s32.totalorder 1, %s26
      %p433 = scmp.lt.s32.totalorder %s26, 3
      %p434 = pnand %p432, %p433
      %p435 = pneg %p434
      // Predicated region
      $region9: #{tpu_custom_call.1} parent=5 // pred_check
        _
      $region10: #{tpu_custom_call.1} parent=5 // pred_check_branch
        %437 = sbr.rel (%p434) target = $region12
      $region11: #{tpu_custom_call.1} parent=5 // pred_region
        %s438 = ssub.s32 %s26, 1
      $region12: #{tpu_custom_call.1} parent=5 // pred_fallthru
        _
      %p439 = scmp.lt.s32.totalorder %s26, 2
      // Predicated region
      $region13: #{tpu_custom_call.1} parent=5 // pred_check
        %p440 = pneg %p439
      $region14: #{tpu_custom_call.1} parent=5 // pred_check_branch
        %442 = sbr.rel (%p440) target = $region16
      $region15: #{tpu_custom_call.1} parent=5 // pred_region
        // Predicated region
        $region17: #{tpu_custom_call.1} parent=15 // pred_check
          %p443 = pneg %p60
        $region18: #{tpu_custom_call.1} parent=15 // pred_check_branch
          %445 = sbr.rel (%p443) target = $region20
        $region19: #{tpu_custom_call.1} parent=15 // pred_region
          %s446 = sadd.s32 %s33, %s34
          %s447 = smul.u32 2, %s446
          %p448 = scmp.lt.s32.totalorder %s447, 3
          %s449 = scalar_select %p448, %s447, 3
          %s450 = smul.addr %s449, 4
          %s451 = scalar_lea.vmem %s0, %s450
          %s452 = sadd.s32 %s33, %s34
          %s453 = smul.u32 2, %s452
        $region20: #{tpu_custom_call.1} parent=15 // pred_fallthru
          _
        // Predicated region
        $region21: #{tpu_custom_call.1} parent=15 // pred_check
          %p454 = pneg %p88
        $region22: #{tpu_custom_call.1} parent=15 // pred_check_branch
          %456 = sbr.rel (%p454) target = $region24
        $region23: #{tpu_custom_call.1} parent=15 // pred_region
          %s457 = sadd.s32 %s33, %s34
          %s458 = smul.u32 2, %s457
          %p459 = scmp.lt.s32.totalorder %s458, 3
          %s460 = scalar_select %p459, %s458, 3
          %s461 = smul.addr %s460, 4
          %s462 = scalar_lea.vmem %s1, %s461
          %s463 = sadd.s32 %s33, %s34
          %s464 = smul.u32 2, %s463
        $region24: #{tpu_custom_call.1} parent=15 // pred_fallthru
          _
        // Predicated region
        $region25: #{tpu_custom_call.1} parent=15 // pred_check
          %p465 = pneg %p116
        $region26: #{tpu_custom_call.1} parent=15 // pred_check_branch
          %467 = sbr.rel (%p465) target = $region28
        $region27: #{tpu_custom_call.1} parent=15 // pred_region
          %s468 = sadd.s32 %s33, %s34
          %s469 = smul.u32 2, %s468
          %p470 = scmp.lt.s32.totalorder %s469, 3
          %s471 = scalar_select %p470, %s469, 3
          %s472 = smul.addr %s471, 4
          %s473 = scalar_lea.vmem %s2, %s472
          %s474 = sadd.s32 %s33, %s34
          %s475 = smul.u32 2, %s474
        $region28: #{tpu_custom_call.1} parent=15 // pred_fallthru
          _
        // Predicated region
        $region29: #{tpu_custom_call.1} parent=15 // pred_check
          %p476 = pneg %p144
        $region30: #{tpu_custom_call.1} parent=15 // pred_check_branch
          %478 = sbr.rel (%p476) target = $region32
        $region31: #{tpu_custom_call.1} parent=15 // pred_region
          %s479 = sadd.s32 %s33, %s34
          %s480 = smul.u32 2, %s479
          %p481 = scmp.lt.s32.totalorder %s480, 3
          %s482 = scalar_select %p481, %s480, 3
          %s483 = scalar_lea.vmem %s3, %s482
          %s484 = sadd.s32 %s33, %s34
          %s485 = smul.u32 2, %s484
        $region32: #{tpu_custom_call.1} parent=15 // pred_fallthru
          _
        // Predicated region
        $region33: #{tpu_custom_call.1} parent=15 // pred_check
          %p486 = pneg %p172
        $region34: #{tpu_custom_call.1} parent=15 // pred_check_branch
          %488 = sbr.rel (%p486) target = $region36
        $region35: #{tpu_custom_call.1} parent=15 // pred_region
          %s489 = sadd.s32 %s33, %s34
          %s490 = smul.u32 2, %s489
          %p491 = scmp.lt.s32.totalorder %s490, 3
          %s492 = scalar_select %p491, %s490, 3
          %s493 = scalar_lea.vmem %s4, %s492
          %s494 = sadd.s32 %s33, %s34
          %s495 = smul.u32 2, %s494
        $region36: #{tpu_custom_call.1} parent=15 // pred_fallthru
          _
        // Predicated region
        $region37: #{tpu_custom_call.1} parent=15 // pred_check
          %p496 = pneg %p200
        $region38: #{tpu_custom_call.1} parent=15 // pred_check_branch
          %498 = sbr.rel (%p496) target = $region40
        $region39: #{tpu_custom_call.1} parent=15 // pred_region
          %s499 = sadd.s32 %s33, %s34
          %s500 = smul.u32 2, %s499
          %p501 = scmp.lt.s32.totalorder %s500, 3
          %s502 = scalar_select %p501, %s500, 3
          %s503 = scalar_lea.vmem %s5, %s502
          %s504 = sadd.s32 %s33, %s34
          %s505 = smul.u32 2, %s504
        $region40: #{tpu_custom_call.1} parent=15 // pred_fallthru
          _
        // Predicated region
        $region41: #{tpu_custom_call.1} parent=15 // pred_check
          %p506 = pneg %p228
        $region42: #{tpu_custom_call.1} parent=15 // pred_check_branch
          %508 = sbr.rel (%p506) target = $region44
        $region43: #{tpu_custom_call.1} parent=15 // pred_region
          %s509 = sadd.s32 %s33, %s34
          %s510 = smul.u32 32, %s509
          %p511 = scmp.lt.s32.totalorder %s510, 63
          %s512 = scalar_select %p511, %s510, 63
          %s513 = smul.addr %s512, 8
          %s514 = scalar_lea.vmem %s6, %s513
          %s515 = sadd.s32 %s33, %s34
          %s516 = smul.u32 32, %s515
        $region44: #{tpu_custom_call.1} parent=15 // pred_fallthru
          _
        // Predicated region
        $region45: #{tpu_custom_call.1} parent=15 // pred_check
          %p517 = pneg %p256
        $region46: #{tpu_custom_call.1} parent=15 // pred_check_branch
          %519 = sbr.rel (%p517) target = $region48
        $region47: #{tpu_custom_call.1} parent=15 // pred_region
          %s520 = sadd.s32 %s33, %s34
          %s521 = smul.u32 32, %s520
          %p522 = scmp.lt.s32.totalorder %s521, 63
          %s523 = scalar_select %p522, %s521, 63
          %s524 = smul.addr %s523, 8
          %s525 = scalar_lea.vmem %s7, %s524
          %s526 = sadd.s32 %s33, %s34
          %s527 = smul.u32 32, %s526
        $region48: #{tpu_custom_call.1} parent=15 // pred_fallthru
          _
        // Predicated region
        $region49: #{tpu_custom_call.1} parent=15 // pred_check
          %p528 = pneg %p284
        $region50: #{tpu_custom_call.1} parent=15 // pred_check_branch
          %530 = sbr.rel (%p528) target = $region52
        $region51: #{tpu_custom_call.1} parent=15 // pred_region
          %s531 = sadd.s32 %s33, %s34
          %s532 = smul.u32 32, %s531
          %p533 = scmp.lt.s32.totalorder %s532, 63
          %s534 = scalar_select %p533, %s532, 63
          %s535 = smul.addr %s534, 8
          %s536 = scalar_lea.vmem %s8, %s535
          %s537 = sadd.s32 %s33, %s34
          %s538 = smul.u32 32, %s537
        $region52: #{tpu_custom_call.1} parent=15 // pred_fallthru
          _
        // Predicated region
        $region53: #{tpu_custom_call.1} parent=15 // pred_check
          %p539 = pneg %p312
        $region54: #{tpu_custom_call.1} parent=15 // pred_check_branch
          %541 = sbr.rel (%p539) target = $region56
        $region55: #{tpu_custom_call.1} parent=15 // pred_region
          %s542 = sadd.s32 %s33, %s34
          %s543 = smul.u32 32, %s542
          %p544 = scmp.lt.s32.totalorder %s543, 63
          %s545 = scalar_select %p544, %s543, 63
          %s546 = smul.addr %s545, 8
          %s547 = scalar_lea.vmem %s9, %s546
          %s548 = sadd.s32 %s33, %s34
          %s549 = smul.u32 32, %s548
        $region56: #{tpu_custom_call.1} parent=15 // pred_fallthru
          _
        // Predicated region
        $region57: #{tpu_custom_call.1} parent=15 // pred_check
          %p550 = pneg %p340
        $region58: #{tpu_custom_call.1} parent=15 // pred_check_branch
          %552 = sbr.rel (%p550) target = $region60
        $region59: #{tpu_custom_call.1} parent=15 // pred_region
          %s553 = sadd.s32 %s33, %s34
          %s554 = smul.u32 32, %s553
          %p555 = scmp.lt.s32.totalorder %s554, 63
          %s556 = scalar_select %p555, %s554, 63
          %s557 = smul.addr %s556, 8
          %s558 = scalar_lea.vmem %s10, %s557
          %s559 = sadd.s32 %s33, %s34
          %s560 = smul.u32 32, %s559
        $region60: #{tpu_custom_call.1} parent=15 // pred_fallthru
          _
      $region16: #{tpu_custom_call.1} parent=5 // pred_fallthru
        _
      %p561 = scmp.le.s32.totalorder 1, %s26
      %p562 = scmp.lt.s32.totalorder %s26, 3
      %p563 = pnand %p561, %p562
      %p564 = pneg %p563
      // Predicated region
      $region61: #{tpu_custom_call.1} parent=5 // pred_check
        _
      $region62: #{tpu_custom_call.1} parent=5 // pred_check_branch
        %566 = sbr.rel (%p563) target = $region64
      $region63: #{tpu_custom_call.1} parent=5 // pred_region
        %s567 = ssub.s32 %s26, 1
        %s568 = sadd.s32 %s35, %s36
        %s569 = smul.u32 2, %s568
        %p570 = scmp.lt.s32.totalorder %s569, 3
        %s571 = scalar_select %p570, %s569, 3
        %s572 = smul.addr %s571, 4
        %s573 = scalar_lea.vmem %s0, %s572
        %p574 = pneg %p66
        %p575 = pneg %p63
        %s576 = sadd.s32 %s35, %s36
        %s577 = smul.u32 2, %s576
        %p578 = scmp.lt.s32.totalorder %s577, 3
        %s579 = scalar_select %p578, %s577, 3
        %s580 = smul.addr %s579, 4
        %s581 = scalar_lea.vmem %s1, %s580
        %p582 = pneg %p94
        %p583 = pneg %p91
        %s584 = sadd.s32 %s35, %s36
        %s585 = smul.u32 2, %s584
        %p586 = scmp.lt.s32.totalorder %s585, 3
        %s587 = scalar_select %p586, %s585, 3
        %s588 = smul.addr %s587, 4
        %s589 = scalar_lea.vmem %s2, %s588
        %p590 = pneg %p122
        %p591 = pneg %p119
        %s592 = sadd.s32 %s35, %s36
        %s593 = smul.u32 2, %s592
        %p594 = scmp.lt.s32.totalorder %s593, 3
        %s595 = scalar_select %p594, %s593, 3
        %s596 = scalar_lea.vmem %s3, %s595
        %p597 = pneg %p150
        %p598 = pneg %p147
        %s599 = sadd.s32 %s35, %s36
        %s600 = smul.u32 2, %s599
        %p601 = scmp.lt.s32.totalorder %s600, 3
        %s602 = scalar_select %p601, %s600, 3
        %s603 = scalar_lea.vmem %s4, %s602
        %p604 = pneg %p178
        %p605 = pneg %p175
        %s606 = sadd.s32 %s35, %s36
        %s607 = smul.u32 2, %s606
        %p608 = scmp.lt.s32.totalorder %s607, 3
        %s609 = scalar_select %p608, %s607, 3
        %s610 = scalar_lea.vmem %s5, %s609
        %p611 = pneg %p206
        %p612 = pneg %p203
        %s613 = sadd.s32 %s35, %s36
        %s614 = smul.u32 32, %s613
        %p615 = scmp.lt.s32.totalorder %s614, 63
        %s616 = scalar_select %p615, %s614, 63
        %s617 = smul.addr %s616, 8
        %s618 = scalar_lea.vmem %s6, %s617
        %p619 = pneg %p234
        %p620 = pneg %p231
        %s621 = sadd.s32 %s35, %s36
        %s622 = smul.u32 32, %s621
        %p623 = scmp.lt.s32.totalorder %s622, 63
        %s624 = scalar_select %p623, %s622, 63
        %s625 = smul.addr %s624, 8
        %s626 = scalar_lea.vmem %s7, %s625
        %p627 = pneg %p262
        %p628 = pneg %p259
        %s629 = sadd.s32 %s35, %s36
        %s630 = smul.u32 32, %s629
        %p631 = scmp.lt.s32.totalorder %s630, 63
        %s632 = scalar_select %p631, %s630, 63
        %s633 = smul.addr %s632, 8
        %s634 = scalar_lea.vmem %s8, %s633
        %p635 = pneg %p290
        %p636 = pneg %p287
        %s637 = sadd.s32 %s35, %s36
        %s638 = smul.u32 32, %s637
        %p639 = scmp.lt.s32.totalorder %s638, 63
        %s640 = scalar_select %p639, %s638, 63
        %s641 = smul.addr %s640, 8
        %s642 = scalar_lea.vmem %s9, %s641
        %p643 = pneg %p318
        %p644 = pneg %p315
        %s645 = sadd.s32 %s35, %s36
        %s646 = smul.u32 32, %s645
        %p647 = scmp.lt.s32.totalorder %s646, 63
        %s648 = scalar_select %p647, %s646, 63
        %s649 = smul.addr %s648, 8
        %s650 = scalar_lea.vmem %s10, %s649
        %p651 = pneg %p346
        %p652 = pneg %p343
        %p653 = pneg %p372
        %p654 = pneg %p369
        %s655 = sand.u32 %s359, 1
        %s656 = scalar_lea.sflag [#allocation3], %s655
        %s657 = sand.u32 %s359, 1
        %s658 = smul.addr %s657, 8
        %s659 = scalar_lea.vmem [#allocation2], %s658
        %p660 = pneg %p398
        %p661 = pneg %p395
        %s662 = sand.u32 %s31, 1
        %s663 = scalar_lea.sflag [#allocation5], %s662
        %s664 = sand.u32 %s385, 1
        %s665 = smul.addr %s664, 4
        %s666 = scalar_lea.vmem [#allocation4], %s665
        %p667 = pneg %p424
        %p668 = pneg %p421
        %s669 = sand.u32 %s31, 1
        %s670 = scalar_lea.sflag [#allocation5], %s669
        %s671 = sand.u32 %s411, 1
        %s672 = smul.addr %s671, 4
        %s673 = scalar_lea.vmem [#allocation6], %s672
        %s674 = sadd.s32 %s35, %s36
        %s675 = smul.u32 2, %s674
        %p676 = scmp.lt.s32.totalorder %s675, 3
        %s677 = scalar_select %p676, %s675, 3
        %s678 = smul.addr %s677, 4
        %s679 = scalar_lea.vmem %s0, %s678
        %s680 = sadd.s32 %s35, %s36
        %s681 = smul.u32 2, %s680
        %s682 = sadd.s32 %s35, %s36
        %s683 = smul.u32 2, %s682
        %p684 = scmp.lt.s32.totalorder %s683, 3
        %s685 = scalar_select %p684, %s683, 3
        %s686 = smul.addr %s685, 4
        %s687 = scalar_lea.vmem %s1, %s686
        %s688 = sadd.s32 %s35, %s36
        %s689 = smul.u32 2, %s688
        %s690 = sadd.s32 %s35, %s36
        %s691 = smul.u32 2, %s690
        %p692 = scmp.lt.s32.totalorder %s691, 3
        %s693 = scalar_select %p692, %s691, 3
        %s694 = smul.addr %s693, 4
        %s695 = scalar_lea.vmem %s2, %s694
        %s696 = sadd.s32 %s35, %s36
        %s697 = smul.u32 2, %s696
        %s698 = sadd.s32 %s35, %s36
        %s699 = smul.u32 2, %s698
        %p700 = scmp.lt.s32.totalorder %s699, 3
        %s701 = scalar_select %p700, %s699, 3
        %s702 = scalar_lea.vmem %s3, %s701
        %s703 = sadd.s32 %s35, %s36
        %s704 = smul.u32 2, %s703
        %s705 = sadd.s32 %s35, %s36
        %s706 = smul.u32 2, %s705
        %p707 = scmp.lt.s32.totalorder %s706, 3
        %s708 = scalar_select %p707, %s706, 3
        %s709 = scalar_lea.vmem %s4, %s708
        %s710 = sadd.s32 %s35, %s36
        %s711 = smul.u32 2, %s710
        %s712 = sadd.s32 %s35, %s36
        %s713 = smul.u32 2, %s712
        %p714 = scmp.lt.s32.totalorder %s713, 3
        %s715 = scalar_select %p714, %s713, 3
        %s716 = scalar_lea.vmem %s5, %s715
        %s717 = sadd.s32 %s35, %s36
        %s718 = smul.u32 2, %s717
        %s719 = sadd.s32 %s35, %s36
        %s720 = smul.u32 32, %s719
        %p721 = scmp.lt.s32.totalorder %s720, 63
        %s722 = scalar_select %p721, %s720, 63
        %s723 = smul.addr %s722, 8
        %s724 = scalar_lea.vmem %s6, %s723
        %s725 = sadd.s32 %s35, %s36
        %s726 = smul.u32 32, %s725
        %s727 = sadd.s32 %s35, %s36
        %s728 = smul.u32 32, %s727
        %p729 = scmp.lt.s32.totalorder %s728, 63
        %s730 = scalar_select %p729, %s728, 63
        %s731 = smul.addr %s730, 8
        %s732 = scalar_lea.vmem %s7, %s731
        %s733 = sadd.s32 %s35, %s36
        %s734 = smul.u32 32, %s733
        %s735 = sadd.s32 %s35, %s36
        %s736 = smul.u32 32, %s735
        %p737 = scmp.lt.s32.totalorder %s736, 63
        %s738 = scalar_select %p737, %s736, 63
        %s739 = smul.addr %s738, 8
        %s740 = scalar_lea.vmem %s8, %s739
        %s741 = sadd.s32 %s35, %s36
        %s742 = smul.u32 32, %s741
        %s743 = sadd.s32 %s35, %s36
        %s744 = smul.u32 32, %s743
        %p745 = scmp.lt.s32.totalorder %s744, 63
        %s746 = scalar_select %p745, %s744, 63
        %s747 = smul.addr %s746, 8
        %s748 = scalar_lea.vmem %s9, %s747
        %s749 = sadd.s32 %s35, %s36
        %s750 = smul.u32 32, %s749
        %s751 = sadd.s32 %s35, %s36
        %s752 = smul.u32 32, %s751
        %p753 = scmp.lt.s32.totalorder %s752, 63
        %s754 = scalar_select %p753, %s752, 63
        %s755 = smul.addr %s754, 8
        %s756 = scalar_lea.vmem %s10, %s755
        %s757 = sadd.s32 %s35, %s36
        %s758 = smul.u32 32, %s757
        %p759 = scmp.eq.s32.totalorder %s36, 0
        // Predicated region
        $region65: #{tpu_custom_call.1} parent=63 // pred_check
          %p760 = pneg %p759
        $region66: #{tpu_custom_call.1} parent=63 // pred_check_branch
          %762 = sbr.rel (%p760) target = $region68
        $region67: #{tpu_custom_call.1} parent=63 // pred_region
          %763 = vst [vmem:[%s659] sm:$0xff] 0.0
          %vm764 = vcmask 519168
          %765 = vst.msk [vmem:[%s666] sm:$0xf] %vm764, 0.0
          %766 = vst.msk [vmem:[%s673] sm:$0xf] %vm764, 0.0
        $region68: #{tpu_custom_call.1} parent=63 // pred_fallthru
          _
        %v767 = vld [vmem:[%s695] sm:$0x77]
        %v768 = vld [vmem:[%s716] sm:$0x3]
        %v769 = vld [vmem:[%s679] sm:$0x77]
        %v770 = vsub.f32 %v769, %v767
        %v771 = vmul.f32 %v770, %v770
        %v773 = vcombine.high %v771, %v771
        %vm775 = vcmask 1042432
        %v776 = vsel %vm775, %v771, 0.0
        %v777 = vrot.slane %v776, 4
        %v778 = vadd.f32 %v776, %v777
        %v779 = vrot.slane %v778, 2
        %v780 = vadd.f32 %v778, %v779
        %v781 = vrot.slane %v780, 1
        %v782 = vadd.f32 %v780, %v781
        %v783 = vsel %vm775, %v773, 0.0
        %v784 = vrot.slane %v783, 4
        %v785 = vadd.f32 %v783, %v784
        %v786 = vrot.slane %v785, 2
        %v787 = vadd.f32 %v785, %v786
        %v788 = vrot.slane %v787, 1
        %v789 = vadd.f32 %v787, %v788
        %v790 = vld [vmem:[%s687] sm:$0x77]
        %v791 = vsub.f32 %v790, %v767
        %v792 = vmul.f32 %v791, %v791
        %v794 = vcombine.high %v792, %v792
        %v796 = vsel %vm775, %v792, 0.0
        %v797 = vrot.slane %v796, 4
        %v798 = vadd.f32 %v796, %v797
        %v799 = vrot.slane %v798, 2
        %v800 = vadd.f32 %v798, %v799
        %v801 = vrot.slane %v800, 1
        %v802 = vadd.f32 %v800, %v801
        %v803 = vsel %vm775, %v794, 0.0
        %v804 = vrot.slane %v803, 4
        %v805 = vadd.f32 %v803, %v804
        %v806 = vrot.slane %v805, 2
        %v807 = vadd.f32 %v805, %v806
        %v808 = vrot.slane %v807, 1
        %v809 = vadd.f32 %v807, %v808
        %v810 = vld [vmem:[%s702] sm:$0x3]
        %v811 = vsub.f32 %v810, %v768
        %v812 = vmul.f32 %v811, %v811
        %v813 = vld [vmem:[%s709] sm:$0x3]
        %v814 = vsub.f32 %v813, %v768
        %v815 = vmul.f32 %v814, %v814
        %v816 = vld [vmem:[%s659] sm:$0xff]
        %v818 = vlaneseq
        %v819 = vshrl.u32 %v818, 7
        %v820 = vsub.s32 0, %v819
        %v821 = vrot.slane %v812, %v820
        %v822 = vlaneseq
        %v823 = vshrl.u32 %v822, 7
        %v824 = vsub.s32 1, %v823
        %v825 = vrot.slane %v812, %v824
        %v829 = vlaneseq
        %v830 = vshrl.u32 %v829, 7
        %v831 = vsub.s32 0, %v830
        %v832 = vrot.slane %v815, %v831
        %v833 = vlaneseq
        %v834 = vshrl.u32 %v833, 7
        %v835 = vsub.s32 1, %v834
        %v836 = vrot.slane %v815, %v835
        %vm839 = vcmask 1040384
        %v840 = vsel %vm839, %v782, %v802
        %v841 = vsel %vm839, %v789, %v809
        %vm842 = vcmask 1041408
        %v843 = vsel %vm842, %v840, %v821
        %v844 = vsel %vm842, %v841, %v825
        %v845 = vsel %vm775, %v843, %v832
        %v846 = vsel %vm775, %v844, %v836
        %v849 = vcombine.low %v845, %v846
        %v851 = vadd.f32 %v816, %v849
        %852 = vst [vmem:[%s659] sm:$0xff] %v851
        %v853 = vld [vmem:[%s724] sm:$0xff]
        %v854 = vld [vmem:[%s724 + $0x8] sm:$0xff]
        %v855 = vld [vmem:[%s724 + $0x10] sm:$0xff]
        %v856 = vld [vmem:[%s724 + $0x18] sm:$0xff]
        %v857 = vld [vmem:[%s724 + $0x20] sm:$0xff]
        %v858 = vld [vmem:[%s724 + $0x28] sm:$0xff]
        %v859 = vld [vmem:[%s724 + $0x30] sm:$0xff]
        %v860 = vld [vmem:[%s724 + $0x38] sm:$0xff]
        %v861 = vld [vmem:[%s724 + $0x40] sm:$0xff]
        %v862 = vld [vmem:[%s724 + $0x48] sm:$0xff]
        %v863 = vld [vmem:[%s724 + $0x50] sm:$0xff]
        %v864 = vld [vmem:[%s724 + $0x58] sm:$0xff]
        %v865 = vld [vmem:[%s724 + $0x60] sm:$0xff]
        %v866 = vld [vmem:[%s724 + $0x68] sm:$0xff]
        %v867 = vld [vmem:[%s724 + $0x70] sm:$0xff]
        %v868 = vld [vmem:[%s724 + $0x78] sm:$0xff]
        %v869 = vld [vmem:[%s724 + $0x80] sm:$0xff]
        %v870 = vld [vmem:[%s724 + $0x88] sm:$0xff]
        %v871 = vld [vmem:[%s724 + $0x90] sm:$0xff]
        %v872 = vld [vmem:[%s724 + $0x98] sm:$0xff]
        %v873 = vld [vmem:[%s724 + $0xa0] sm:$0xff]
        %v874 = vld [vmem:[%s724 + $0xa8] sm:$0xff]
        %v875 = vld [vmem:[%s724 + $0xb0] sm:$0xff]
        %v876 = vld [vmem:[%s724 + $0xb8] sm:$0xff]
        %v877 = vld [vmem:[%s724 + $0xc0] sm:$0xff]
        %v878 = vld [vmem:[%s724 + $0xc8] sm:$0xff]
        %v879 = vld [vmem:[%s724 + $0xd0] sm:$0xff]
        %v880 = vld [vmem:[%s724 + $0xd8] sm:$0xff]
        %v881 = vld [vmem:[%s724 + $0xe0] sm:$0xff]
        %v882 = vld [vmem:[%s724 + $0xe8] sm:$0xff]
        %v883 = vld [vmem:[%s724 + $0xf0] sm:$0xff]
        %v884 = vld [vmem:[%s724 + $0xf8] sm:$0xff]
        %v885 = vsub.f32 %v853, 0.05
        %v886 = vsub.f32 %v854, 0.05
        %v887 = vsub.f32 %v855, 0.05
        %v888 = vsub.f32 %v856, 0.05
        %v889 = vsub.f32 %v857, 0.05
        %v890 = vsub.f32 %v858, 0.05
        %v891 = vsub.f32 %v859, 0.05
        %v892 = vsub.f32 %v860, 0.05
        %v893 = vsub.f32 %v861, 0.05
        %v894 = vsub.f32 %v862, 0.05
        %v895 = vsub.f32 %v863, 0.05
        %v896 = vsub.f32 %v864, 0.05
        %v897 = vsub.f32 %v865, 0.05
        %v898 = vsub.f32 %v866, 0.05
        %v899 = vsub.f32 %v867, 0.05
        %v900 = vsub.f32 %v868, 0.05
        %v901 = vsub.f32 %v869, 0.05
        %v902 = vsub.f32 %v870, 0.05
        %v903 = vsub.f32 %v871, 0.05
        %v904 = vsub.f32 %v872, 0.05
        %v905 = vsub.f32 %v873, 0.05
        %v906 = vsub.f32 %v874, 0.05
        %v907 = vsub.f32 %v875, 0.05
        %v908 = vsub.f32 %v876, 0.05
        %v909 = vsub.f32 %v877, 0.05
        %v910 = vsub.f32 %v878, 0.05
        %v911 = vsub.f32 %v879, 0.05
        %v912 = vsub.f32 %v880, 0.05
        %v913 = vsub.f32 %v881, 0.05
        %v914 = vsub.f32 %v882, 0.05
        %v915 = vsub.f32 %v883, 0.05
        %v916 = vsub.f32 %v884, 0.05
        %v917 = vadd.f32 %v853, 0.05
        %v918 = vadd.f32 %v854, 0.05
        %v919 = vadd.f32 %v855, 0.05
        %v920 = vadd.f32 %v856, 0.05
        %v921 = vadd.f32 %v857, 0.05
        %v922 = vadd.f32 %v858, 0.05
        %v923 = vadd.f32 %v859, 0.05
        %v924 = vadd.f32 %v860, 0.05
        %v925 = vadd.f32 %v861, 0.05
        %v926 = vadd.f32 %v862, 0.05
        %v927 = vadd.f32 %v863, 0.05
        %v928 = vadd.f32 %v864, 0.05
        %v929 = vadd.f32 %v865, 0.05
        %v930 = vadd.f32 %v866, 0.05
        %v931 = vadd.f32 %v867, 0.05
        %v932 = vadd.f32 %v868, 0.05
        %v933 = vadd.f32 %v869, 0.05
        %v934 = vadd.f32 %v870, 0.05
        %v935 = vadd.f32 %v871, 0.05
        %v936 = vadd.f32 %v872, 0.05
        %v937 = vadd.f32 %v873, 0.05
        %v938 = vadd.f32 %v874, 0.05
        %v939 = vadd.f32 %v875, 0.05
        %v940 = vadd.f32 %v876, 0.05
        %v941 = vadd.f32 %v877, 0.05
        %v942 = vadd.f32 %v878, 0.05
        %v943 = vadd.f32 %v879, 0.05
        %v944 = vadd.f32 %v880, 0.05
        %v945 = vadd.f32 %v881, 0.05
        %v946 = vadd.f32 %v882, 0.05
        %v947 = vadd.f32 %v883, 0.05
        %v948 = vadd.f32 %v884, 0.05
        %vm949 = vcmp.gt.f32.partialorder %v853, 0.0
        %vm950 = vcmp.gt.f32.partialorder %v854, 0.0
        %vm951 = vcmp.gt.f32.partialorder %v855, 0.0
        %vm952 = vcmp.gt.f32.partialorder %v856, 0.0
        %vm953 = vcmp.gt.f32.partialorder %v857, 0.0
        %vm954 = vcmp.gt.f32.partialorder %v858, 0.0
        %vm955 = vcmp.gt.f32.partialorder %v859, 0.0
        %vm956 = vcmp.gt.f32.partialorder %v860, 0.0
        %vm957 = vcmp.gt.f32.partialorder %v861, 0.0
        %vm958 = vcmp.gt.f32.partialorder %v862, 0.0
        %vm959 = vcmp.gt.f32.partialorder %v863, 0.0
        %vm960 = vcmp.gt.f32.partialorder %v864, 0.0
        %vm961 = vcmp.gt.f32.partialorder %v865, 0.0
        %vm962 = vcmp.gt.f32.partialorder %v866, 0.0
        %vm963 = vcmp.gt.f32.partialorder %v867, 0.0
        %vm964 = vcmp.gt.f32.partialorder %v868, 0.0
        %vm965 = vcmp.gt.f32.partialorder %v869, 0.0
        %vm966 = vcmp.gt.f32.partialorder %v870, 0.0
        %vm967 = vcmp.gt.f32.partialorder %v871, 0.0
        %vm968 = vcmp.gt.f32.partialorder %v872, 0.0
        %vm969 = vcmp.gt.f32.partialorder %v873, 0.0
        %vm970 = vcmp.gt.f32.partialorder %v874, 0.0
        %vm971 = vcmp.gt.f32.partialorder %v875, 0.0
        %vm972 = vcmp.gt.f32.partialorder %v876, 0.0
        %vm973 = vcmp.gt.f32.partialorder %v877, 0.0
        %vm974 = vcmp.gt.f32.partialorder %v878, 0.0
        %vm975 = vcmp.gt.f32.partialorder %v879, 0.0
        %vm976 = vcmp.gt.f32.partialorder %v880, 0.0
        %vm977 = vcmp.gt.f32.partialorder %v881, 0.0
        %vm978 = vcmp.gt.f32.partialorder %v882, 0.0
        %vm979 = vcmp.gt.f32.partialorder %v883, 0.0
        %vm980 = vcmp.gt.f32.partialorder %v884, 0.0
        %v981 = vsel %vm949, 1.0, 0.0
        %v982 = vsel %vm950, 1.0, 0.0
        %v983 = vsel %vm951, 1.0, 0.0
        %v984 = vsel %vm952, 1.0, 0.0
        %v985 = vsel %vm953, 1.0, 0.0
        %v986 = vsel %vm954, 1.0, 0.0
        %v987 = vsel %vm955, 1.0, 0.0
        %v988 = vsel %vm956, 1.0, 0.0
        %v989 = vsel %vm957, 1.0, 0.0
        %v990 = vsel %vm958, 1.0, 0.0
        %v991 = vsel %vm959, 1.0, 0.0
        %v992 = vsel %vm960, 1.0, 0.0
        %v993 = vsel %vm961, 1.0, 0.0
        %v994 = vsel %vm962, 1.0, 0.0
        %v995 = vsel %vm963, 1.0, 0.0
        %v996 = vsel %vm964, 1.0, 0.0
        %v997 = vsel %vm965, 1.0, 0.0
        %v998 = vsel %vm966, 1.0, 0.0
        %v999 = vsel %vm967, 1.0, 0.0
        %v1000 = vsel %vm968, 1.0, 0.0
        %v1001 = vsel %vm969, 1.0, 0.0
        %v1002 = vsel %vm970, 1.0, 0.0
        %v1003 = vsel %vm971, 1.0, 0.0
        %v1004 = vsel %vm972, 1.0, 0.0
        %v1005 = vsel %vm973, 1.0, 0.0
        %v1006 = vsel %vm974, 1.0, 0.0
        %v1007 = vsel %vm975, 1.0, 0.0
        %v1008 = vsel %vm976, 1.0, 0.0
        %v1009 = vsel %vm977, 1.0, 0.0
        %v1010 = vsel %vm978, 1.0, 0.0
        %v1011 = vsel %vm979, 1.0, 0.0
        %v1012 = vsel %vm980, 1.0, 0.0
        %v1013 = vld [vmem:[%s732] sm:$0xff]
        %v1014 = vld [vmem:[%s732 + $0x8] sm:$0xff]
        %v1015 = vld [vmem:[%s732 + $0x10] sm:$0xff]
        %v1016 = vld [vmem:[%s732 + $0x18] sm:$0xff]
        %v1017 = vld [vmem:[%s732 + $0x20] sm:$0xff]
        %v1018 = vld [vmem:[%s732 + $0x28] sm:$0xff]
        %v1019 = vld [vmem:[%s732 + $0x30] sm:$0xff]
        %v1020 = vld [vmem:[%s732 + $0x38] sm:$0xff]
        %v1021 = vld [vmem:[%s732 + $0x40] sm:$0xff]
        %v1022 = vld [vmem:[%s732 + $0x48] sm:$0xff]
        %v1023 = vld [vmem:[%s732 + $0x50] sm:$0xff]
        %v1024 = vld [vmem:[%s732 + $0x58] sm:$0xff]
        %v1025 = vld [vmem:[%s732 + $0x60] sm:$0xff]
        %v1026 = vld [vmem:[%s732 + $0x68] sm:$0xff]
        %v1027 = vld [vmem:[%s732 + $0x70] sm:$0xff]
        %v1028 = vld [vmem:[%s732 + $0x78] sm:$0xff]
        %v1029 = vld [vmem:[%s732 + $0x80] sm:$0xff]
        %v1030 = vld [vmem:[%s732 + $0x88] sm:$0xff]
        %v1031 = vld [vmem:[%s732 + $0x90] sm:$0xff]
        %v1032 = vld [vmem:[%s732 + $0x98] sm:$0xff]
        %v1033 = vld [vmem:[%s732 + $0xa0] sm:$0xff]
        %v1034 = vld [vmem:[%s732 + $0xa8] sm:$0xff]
        %v1035 = vld [vmem:[%s732 + $0xb0] sm:$0xff]
        %v1036 = vld [vmem:[%s732 + $0xb8] sm:$0xff]
        %v1037 = vld [vmem:[%s732 + $0xc0] sm:$0xff]
        %v1038 = vld [vmem:[%s732 + $0xc8] sm:$0xff]
        %v1039 = vld [vmem:[%s732 + $0xd0] sm:$0xff]
        %v1040 = vld [vmem:[%s732 + $0xd8] sm:$0xff]
        %v1041 = vld [vmem:[%s732 + $0xe0] sm:$0xff]
        %v1042 = vld [vmem:[%s732 + $0xe8] sm:$0xff]
        %v1043 = vld [vmem:[%s732 + $0xf0] sm:$0xff]
        %v1044 = vld [vmem:[%s732 + $0xf8] sm:$0xff]
        %v1045 = vld [vmem:[%s740] sm:$0xff]
        %v1046 = vld [vmem:[%s740 + $0x8] sm:$0xff]
        %v1047 = vld [vmem:[%s740 + $0x10] sm:$0xff]
        %v1048 = vld [vmem:[%s740 + $0x18] sm:$0xff]
        %v1049 = vld [vmem:[%s740 + $0x20] sm:$0xff]
        %v1050 = vld [vmem:[%s740 + $0x28] sm:$0xff]
        %v1051 = vld [vmem:[%s740 + $0x30] sm:$0xff]
        %v1052 = vld [vmem:[%s740 + $0x38] sm:$0xff]
        %v1053 = vld [vmem:[%s740 + $0x40] sm:$0xff]
        %v1054 = vld [vmem:[%s740 + $0x48] sm:$0xff]
        %v1055 = vld [vmem:[%s740 + $0x50] sm:$0xff]
        %v1056 = vld [vmem:[%s740 + $0x58] sm:$0xff]
        %v1057 = vld [vmem:[%s740 + $0x60] sm:$0xff]
        %v1058 = vld [vmem:[%s740 + $0x68] sm:$0xff]
        %v1059 = vld [vmem:[%s740 + $0x70] sm:$0xff]
        %v1060 = vld [vmem:[%s740 + $0x78] sm:$0xff]
        %v1061 = vld [vmem:[%s740 + $0x80] sm:$0xff]
        %v1062 = vld [vmem:[%s740 + $0x88] sm:$0xff]
        %v1063 = vld [vmem:[%s740 + $0x90] sm:$0xff]
        %v1064 = vld [vmem:[%s740 + $0x98] sm:$0xff]
        %v1065 = vld [vmem:[%s740 + $0xa0] sm:$0xff]
        %v1066 = vld [vmem:[%s740 + $0xa8] sm:$0xff]
        %v1067 = vld [vmem:[%s740 + $0xb0] sm:$0xff]
        %v1068 = vld [vmem:[%s740 + $0xb8] sm:$0xff]
        %v1069 = vld [vmem:[%s740 + $0xc0] sm:$0xff]
        %v1070 = vld [vmem:[%s740 + $0xc8] sm:$0xff]
        %v1071 = vld [vmem:[%s740 + $0xd0] sm:$0xff]
        %v1072 = vld [vmem:[%s740 + $0xd8] sm:$0xff]
        %v1073 = vld [vmem:[%s740 + $0xe0] sm:$0xff]
        %v1074 = vld [vmem:[%s740 + $0xe8] sm:$0xff]
        %v1075 = vld [vmem:[%s740 + $0xf0] sm:$0xff]
        %v1076 = vld [vmem:[%s740 + $0xf8] sm:$0xff]
        %1078 = vset.pattern.permute.xlu0 0
        %1079 = vperm.xlu0 %1078, %v885
        %v1080 = vpop.permute.xlu0 %1079
        %1083 = vset.pattern.permute.xlu0 0
        %1084 = vperm.xlu0 %1083, %v886
        %v1085 = vpop.permute.xlu0 %1084
        %1088 = vset.pattern.permute.xlu0 0
        %1089 = vperm.xlu0 %1088, %v887
        %v1090 = vpop.permute.xlu0 %1089
        %1093 = vset.pattern.permute.xlu0 0
        %1094 = vperm.xlu0 %1093, %v888
        %v1095 = vpop.permute.xlu0 %1094
        %1098 = vset.pattern.permute.xlu0 0
        %1099 = vperm.xlu0 %1098, %v889
        %v1100 = vpop.permute.xlu0 %1099
        %1103 = vset.pattern.permute.xlu0 0
        %1104 = vperm.xlu0 %1103, %v890
        %v1105 = vpop.permute.xlu0 %1104
        %1108 = vset.pattern.permute.xlu0 0
        %1109 = vperm.xlu0 %1108, %v891
        %v1110 = vpop.permute.xlu0 %1109
        %1113 = vset.pattern.permute.xlu0 0
        %1114 = vperm.xlu0 %1113, %v892
        %v1115 = vpop.permute.xlu0 %1114
        %1118 = vset.pattern.permute.xlu0 0
        %1119 = vperm.xlu0 %1118, %v893
        %v1120 = vpop.permute.xlu0 %1119
        %1123 = vset.pattern.permute.xlu0 0
        %1124 = vperm.xlu0 %1123, %v894
        %v1125 = vpop.permute.xlu0 %1124
        %1128 = vset.pattern.permute.xlu0 0
        %1129 = vperm.xlu0 %1128, %v895
        %v1130 = vpop.permute.xlu0 %1129
        %1133 = vset.pattern.permute.xlu0 0
        %1134 = vperm.xlu0 %1133, %v896
        %v1135 = vpop.permute.xlu0 %1134
        %1138 = vset.pattern.permute.xlu0 0
        %1139 = vperm.xlu0 %1138, %v897
        %v1140 = vpop.permute.xlu0 %1139
        %1143 = vset.pattern.permute.xlu0 0
        %1144 = vperm.xlu0 %1143, %v898
        %v1145 = vpop.permute.xlu0 %1144
        %1148 = vset.pattern.permute.xlu0 0
        %1149 = vperm.xlu0 %1148, %v899
        %v1150 = vpop.permute.xlu0 %1149
        %1153 = vset.pattern.permute.xlu0 0
        %1154 = vperm.xlu0 %1153, %v900
        %v1155 = vpop.permute.xlu0 %1154
        %1158 = vset.pattern.permute.xlu0 0
        %1159 = vperm.xlu0 %1158, %v901
        %v1160 = vpop.permute.xlu0 %1159
        %1163 = vset.pattern.permute.xlu0 0
        %1164 = vperm.xlu0 %1163, %v902
        %v1165 = vpop.permute.xlu0 %1164
        %1168 = vset.pattern.permute.xlu0 0
        %1169 = vperm.xlu0 %1168, %v903
        %v1170 = vpop.permute.xlu0 %1169
        %1173 = vset.pattern.permute.xlu0 0
        %1174 = vperm.xlu0 %1173, %v904
        %v1175 = vpop.permute.xlu0 %1174
        %1178 = vset.pattern.permute.xlu0 0
        %1179 = vperm.xlu0 %1178, %v905
        %v1180 = vpop.permute.xlu0 %1179
        %1183 = vset.pattern.permute.xlu0 0
        %1184 = vperm.xlu0 %1183, %v906
        %v1185 = vpop.permute.xlu0 %1184
        %1188 = vset.pattern.permute.xlu0 0
        %1189 = vperm.xlu0 %1188, %v907
        %v1190 = vpop.permute.xlu0 %1189
        %1193 = vset.pattern.permute.xlu0 0
        %1194 = vperm.xlu0 %1193, %v908
        %v1195 = vpop.permute.xlu0 %1194
        %1198 = vset.pattern.permute.xlu0 0
        %1199 = vperm.xlu0 %1198, %v909
        %v1200 = vpop.permute.xlu0 %1199
        %1203 = vset.pattern.permute.xlu0 0
        %1204 = vperm.xlu0 %1203, %v910
        %v1205 = vpop.permute.xlu0 %1204
        %1208 = vset.pattern.permute.xlu0 0
        %1209 = vperm.xlu0 %1208, %v911
        %v1210 = vpop.permute.xlu0 %1209
        %1213 = vset.pattern.permute.xlu0 0
        %1214 = vperm.xlu0 %1213, %v912
        %v1215 = vpop.permute.xlu0 %1214
        %1218 = vset.pattern.permute.xlu0 0
        %1219 = vperm.xlu0 %1218, %v913
        %v1220 = vpop.permute.xlu0 %1219
        %1223 = vset.pattern.permute.xlu0 0
        %1224 = vperm.xlu0 %1223, %v914
        %v1225 = vpop.permute.xlu0 %1224
        %1228 = vset.pattern.permute.xlu0 0
        %1229 = vperm.xlu0 %1228, %v915
        %v1230 = vpop.permute.xlu0 %1229
        %1233 = vset.pattern.permute.xlu0 0
        %1234 = vperm.xlu0 %1233, %v916
        %v1235 = vpop.permute.xlu0 %1234
        %vm1237 = vcmp.lt.f32.partialorder %v1013, %v1080
        %vm1238 = vcmp.lt.f32.partialorder %v1014, %v1085
        %vm1239 = vcmp.lt.f32.partialorder %v1015, %v1090
        %vm1240 = vcmp.lt.f32.partialorder %v1016, %v1095
        %vm1241 = vcmp.lt.f32.partialorder %v1017, %v1100
        %vm1242 = vcmp.lt.f32.partialorder %v1018, %v1105
        %vm1243 = vcmp.lt.f32.partialorder %v1019, %v1110
        %vm1244 = vcmp.lt.f32.partialorder %v1020, %v1115
        %vm1245 = vcmp.lt.f32.partialorder %v1021, %v1120
        %vm1246 = vcmp.lt.f32.partialorder %v1022, %v1125
        %vm1247 = vcmp.lt.f32.partialorder %v1023, %v1130
        %vm1248 = vcmp.lt.f32.partialorder %v1024, %v1135
        %vm1249 = vcmp.lt.f32.partialorder %v1025, %v1140
        %vm1250 = vcmp.lt.f32.partialorder %v1026, %v1145
        %vm1251 = vcmp.lt.f32.partialorder %v1027, %v1150
        %vm1252 = vcmp.lt.f32.partialorder %v1028, %v1155
        %vm1253 = vcmp.lt.f32.partialorder %v1029, %v1160
        %vm1254 = vcmp.lt.f32.partialorder %v1030, %v1165
        %vm1255 = vcmp.lt.f32.partialorder %v1031, %v1170
        %vm1256 = vcmp.lt.f32.partialorder %v1032, %v1175
        %vm1257 = vcmp.lt.f32.partialorder %v1033, %v1180
        %vm1258 = vcmp.lt.f32.partialorder %v1034, %v1185
        %vm1259 = vcmp.lt.f32.partialorder %v1035, %v1190
        %vm1260 = vcmp.lt.f32.partialorder %v1036, %v1195
        %vm1261 = vcmp.lt.f32.partialorder %v1037, %v1200
        %vm1262 = vcmp.lt.f32.partialorder %v1038, %v1205
        %vm1263 = vcmp.lt.f32.partialorder %v1039, %v1210
        %vm1264 = vcmp.lt.f32.partialorder %v1040, %v1215
        %vm1265 = vcmp.lt.f32.partialorder %v1041, %v1220
        %vm1266 = vcmp.lt.f32.partialorder %v1042, %v1225
        %vm1267 = vcmp.lt.f32.partialorder %v1043, %v1230
        %vm1268 = vcmp.lt.f32.partialorder %v1044, %v1235
        %vm1269 = vcmp.ge.f32.partialorder %v1013, %v1080
        %vm1270 = vcmp.ge.f32.partialorder %v1014, %v1085
        %vm1271 = vcmp.ge.f32.partialorder %v1015, %v1090
        %vm1272 = vcmp.ge.f32.partialorder %v1016, %v1095
        %vm1273 = vcmp.ge.f32.partialorder %v1017, %v1100
        %vm1274 = vcmp.ge.f32.partialorder %v1018, %v1105
        %vm1275 = vcmp.ge.f32.partialorder %v1019, %v1110
        %vm1276 = vcmp.ge.f32.partialorder %v1020, %v1115
        %vm1277 = vcmp.ge.f32.partialorder %v1021, %v1120
        %vm1278 = vcmp.ge.f32.partialorder %v1022, %v1125
        %vm1279 = vcmp.ge.f32.partialorder %v1023, %v1130
        %vm1280 = vcmp.ge.f32.partialorder %v1024, %v1135
        %vm1281 = vcmp.ge.f32.partialorder %v1025, %v1140
        %vm1282 = vcmp.ge.f32.partialorder %v1026, %v1145
        %vm1283 = vcmp.ge.f32.partialorder %v1027, %v1150
        %vm1284 = vcmp.ge.f32.partialorder %v1028, %v1155
        %vm1285 = vcmp.ge.f32.partialorder %v1029, %v1160
        %vm1286 = vcmp.ge.f32.partialorder %v1030, %v1165
        %vm1287 = vcmp.ge.f32.partialorder %v1031, %v1170
        %vm1288 = vcmp.ge.f32.partialorder %v1032, %v1175
        %vm1289 = vcmp.ge.f32.partialorder %v1033, %v1180
        %vm1290 = vcmp.ge.f32.partialorder %v1034, %v1185
        %vm1291 = vcmp.ge.f32.partialorder %v1035, %v1190
        %vm1292 = vcmp.ge.f32.partialorder %v1036, %v1195
        %vm1293 = vcmp.ge.f32.partialorder %v1037, %v1200
        %vm1294 = vcmp.ge.f32.partialorder %v1038, %v1205
        %vm1295 = vcmp.ge.f32.partialorder %v1039, %v1210
        %vm1296 = vcmp.ge.f32.partialorder %v1040, %v1215
        %vm1297 = vcmp.ge.f32.partialorder %v1041, %v1220
        %vm1298 = vcmp.ge.f32.partialorder %v1042, %v1225
        %vm1299 = vcmp.ge.f32.partialorder %v1043, %v1230
        %vm1300 = vcmp.ge.f32.partialorder %v1044, %v1235
        %1302 = vset.pattern.permute.xlu0 0
        %1303 = vperm.xlu0 %1302, %v917
        %v1304 = vpop.permute.xlu0 %1303
        %1307 = vset.pattern.permute.xlu0 0
        %1308 = vperm.xlu0 %1307, %v918
        %v1309 = vpop.permute.xlu0 %1308
        %1312 = vset.pattern.permute.xlu0 0
        %1313 = vperm.xlu0 %1312, %v919
        %v1314 = vpop.permute.xlu0 %1313
        %1317 = vset.pattern.permute.xlu0 0
        %1318 = vperm.xlu0 %1317, %v920
        %v1319 = vpop.permute.xlu0 %1318
        %1322 = vset.pattern.permute.xlu0 0
        %1323 = vperm.xlu0 %1322, %v921
        %v1324 = vpop.permute.xlu0 %1323
        %1327 = vset.pattern.permute.xlu0 0
        %1328 = vperm.xlu0 %1327, %v922
        %v1329 = vpop.permute.xlu0 %1328
        %1332 = vset.pattern.permute.xlu0 0
        %1333 = vperm.xlu0 %1332, %v923
        %v1334 = vpop.permute.xlu0 %1333
        %1337 = vset.pattern.permute.xlu0 0
        %1338 = vperm.xlu0 %1337, %v924
        %v1339 = vpop.permute.xlu0 %1338
        %1342 = vset.pattern.permute.xlu0 0
        %1343 = vperm.xlu0 %1342, %v925
        %v1344 = vpop.permute.xlu0 %1343
        %1347 = vset.pattern.permute.xlu0 0
        %1348 = vperm.xlu0 %1347, %v926
        %v1349 = vpop.permute.xlu0 %1348
        %1352 = vset.pattern.permute.xlu0 0
        %1353 = vperm.xlu0 %1352, %v927
        %v1354 = vpop.permute.xlu0 %1353
        %1357 = vset.pattern.permute.xlu0 0
        %1358 = vperm.xlu0 %1357, %v928
        %v1359 = vpop.permute.xlu0 %1358
        %1362 = vset.pattern.permute.xlu0 0
        %1363 = vperm.xlu0 %1362, %v929
        %v1364 = vpop.permute.xlu0 %1363
        %1367 = vset.pattern.permute.xlu0 0
        %1368 = vperm.xlu0 %1367, %v930
        %v1369 = vpop.permute.xlu0 %1368
        %1372 = vset.pattern.permute.xlu0 0
        %1373 = vperm.xlu0 %1372, %v931
        %v1374 = vpop.permute.xlu0 %1373
        %1377 = vset.pattern.permute.xlu0 0
        %1378 = vperm.xlu0 %1377, %v932
        %v1379 = vpop.permute.xlu0 %1378
        %1382 = vset.pattern.permute.xlu0 0
        %1383 = vperm.xlu0 %1382, %v933
        %v1384 = vpop.permute.xlu0 %1383
        %1387 = vset.pattern.permute.xlu0 0
        %1388 = vperm.xlu0 %1387, %v934
        %v1389 = vpop.permute.xlu0 %1388
        %1392 = vset.pattern.permute.xlu0 0
        %1393 = vperm.xlu0 %1392, %v935
        %v1394 = vpop.permute.xlu0 %1393
        %1397 = vset.pattern.permute.xlu0 0
        %1398 = vperm.xlu0 %1397, %v936
        %v1399 = vpop.permute.xlu0 %1398
        %1402 = vset.pattern.permute.xlu0 0
        %1403 = vperm.xlu0 %1402, %v937
        %v1404 = vpop.permute.xlu0 %1403
        %1407 = vset.pattern.permute.xlu0 0
        %1408 = vperm.xlu0 %1407, %v938
        %v1409 = vpop.permute.xlu0 %1408
        %1412 = vset.pattern.permute.xlu0 0
        %1413 = vperm.xlu0 %1412, %v939
        %v1414 = vpop.permute.xlu0 %1413
        %1417 = vset.pattern.permute.xlu0 0
        %1418 = vperm.xlu0 %1417, %v940
        %v1419 = vpop.permute.xlu0 %1418
        %1422 = vset.pattern.permute.xlu0 0
        %1423 = vperm.xlu0 %1422, %v941
        %v1424 = vpop.permute.xlu0 %1423
        %1427 = vset.pattern.permute.xlu0 0
        %1428 = vperm.xlu0 %1427, %v942
        %v1429 = vpop.permute.xlu0 %1428
        %1432 = vset.pattern.permute.xlu0 0
        %1433 = vperm.xlu0 %1432, %v943
        %v1434 = vpop.permute.xlu0 %1433
        %1437 = vset.pattern.permute.xlu0 0
        %1438 = vperm.xlu0 %1437, %v944
        %v1439 = vpop.permute.xlu0 %1438
        %1442 = vset.pattern.permute.xlu0 0
        %1443 = vperm.xlu0 %1442, %v945
        %v1444 = vpop.permute.xlu0 %1443
        %1447 = vset.pattern.permute.xlu0 0
        %1448 = vperm.xlu0 %1447, %v946
        %v1449 = vpop.permute.xlu0 %1448
        %1452 = vset.pattern.permute.xlu0 0
        %1453 = vperm.xlu0 %1452, %v947
        %v1454 = vpop.permute.xlu0 %1453
        %1457 = vset.pattern.permute.xlu0 0
        %1458 = vperm.xlu0 %1457, %v948
        %v1459 = vpop.permute.xlu0 %1458
        %vm1461 = vcmp.le.f32.partialorder %v1013, %v1304
        %vm1462 = vcmp.le.f32.partialorder %v1014, %v1309
        %vm1463 = vcmp.le.f32.partialorder %v1015, %v1314
        %vm1464 = vcmp.le.f32.partialorder %v1016, %v1319
        %vm1465 = vcmp.le.f32.partialorder %v1017, %v1324
        %vm1466 = vcmp.le.f32.partialorder %v1018, %v1329
        %vm1467 = vcmp.le.f32.partialorder %v1019, %v1334
        %vm1468 = vcmp.le.f32.partialorder %v1020, %v1339
        %vm1469 = vcmp.le.f32.partialorder %v1021, %v1344
        %vm1470 = vcmp.le.f32.partialorder %v1022, %v1349
        %vm1471 = vcmp.le.f32.partialorder %v1023, %v1354
        %vm1472 = vcmp.le.f32.partialorder %v1024, %v1359
        %vm1473 = vcmp.le.f32.partialorder %v1025, %v1364
        %vm1474 = vcmp.le.f32.partialorder %v1026, %v1369
        %vm1475 = vcmp.le.f32.partialorder %v1027, %v1374
        %vm1476 = vcmp.le.f32.partialorder %v1028, %v1379
        %vm1477 = vcmp.le.f32.partialorder %v1029, %v1384
        %vm1478 = vcmp.le.f32.partialorder %v1030, %v1389
        %vm1479 = vcmp.le.f32.partialorder %v1031, %v1394
        %vm1480 = vcmp.le.f32.partialorder %v1032, %v1399
        %vm1481 = vcmp.le.f32.partialorder %v1033, %v1404
        %vm1482 = vcmp.le.f32.partialorder %v1034, %v1409
        %vm1483 = vcmp.le.f32.partialorder %v1035, %v1414
        %vm1484 = vcmp.le.f32.partialorder %v1036, %v1419
        %vm1485 = vcmp.le.f32.partialorder %v1037, %v1424
        %vm1486 = vcmp.le.f32.partialorder %v1038, %v1429
        %vm1487 = vcmp.le.f32.partialorder %v1039, %v1434
        %vm1488 = vcmp.le.f32.partialorder %v1040, %v1439
        %vm1489 = vcmp.le.f32.partialorder %v1041, %v1444
        %vm1490 = vcmp.le.f32.partialorder %v1042, %v1449
        %vm1491 = vcmp.le.f32.partialorder %v1043, %v1454
        %vm1492 = vcmp.le.f32.partialorder %v1044, %v1459
        %vm1493 = vmand %vm1269, %vm1461
        %vm1494 = vmand %vm1270, %vm1462
        %vm1495 = vmand %vm1271, %vm1463
        %vm1496 = vmand %vm1272, %vm1464
        %vm1497 = vmand %vm1273, %vm1465
        %vm1498 = vmand %vm1274, %vm1466
        %vm1499 = vmand %vm1275, %vm1467
        %vm1500 = vmand %vm1276, %vm1468
        %vm1501 = vmand %vm1277, %vm1469
        %vm1502 = vmand %vm1278, %vm1470
        %vm1503 = vmand %vm1279, %vm1471
        %vm1504 = vmand %vm1280, %vm1472
        %vm1505 = vmand %vm1281, %vm1473
        %vm1506 = vmand %vm1282, %vm1474
        %vm1507 = vmand %vm1283, %vm1475
        %vm1508 = vmand %vm1284, %vm1476
        %vm1509 = vmand %vm1285, %vm1477
        %vm1510 = vmand %vm1286, %vm1478
        %vm1511 = vmand %vm1287, %vm1479
        %vm1512 = vmand %vm1288, %vm1480
        %vm1513 = vmand %vm1289, %vm1481
        %vm1514 = vmand %vm1290, %vm1482
        %vm1515 = vmand %vm1291, %vm1483
        %vm1516 = vmand %vm1292, %vm1484
        %vm1517 = vmand %vm1293, %vm1485
        %vm1518 = vmand %vm1294, %vm1486
        %vm1519 = vmand %vm1295, %vm1487
        %vm1520 = vmand %vm1296, %vm1488
        %vm1521 = vmand %vm1297, %vm1489
        %vm1522 = vmand %vm1298, %vm1490
        %vm1523 = vmand %vm1299, %vm1491
        %vm1524 = vmand %vm1300, %vm1492
        %v1525 = vsel %vm1237, 1.0, 0.0
        %v1526 = vsel %vm1238, 1.0, 0.0
        %v1527 = vsel %vm1239, 1.0, 0.0
        %v1528 = vsel %vm1240, 1.0, 0.0
        %v1529 = vsel %vm1241, 1.0, 0.0
        %v1530 = vsel %vm1242, 1.0, 0.0
        %v1531 = vsel %vm1243, 1.0, 0.0
        %v1532 = vsel %vm1244, 1.0, 0.0
        %v1533 = vsel %vm1245, 1.0, 0.0
        %v1534 = vsel %vm1246, 1.0, 0.0
        %v1535 = vsel %vm1247, 1.0, 0.0
        %v1536 = vsel %vm1248, 1.0, 0.0
        %v1537 = vsel %vm1249, 1.0, 0.0
        %v1538 = vsel %vm1250, 1.0, 0.0
        %v1539 = vsel %vm1251, 1.0, 0.0
        %v1540 = vsel %vm1252, 1.0, 0.0
        %v1541 = vsel %vm1253, 1.0, 0.0
        %v1542 = vsel %vm1254, 1.0, 0.0
        %v1543 = vsel %vm1255, 1.0, 0.0
        %v1544 = vsel %vm1256, 1.0, 0.0
        %v1545 = vsel %vm1257, 1.0, 0.0
        %v1546 = vsel %vm1258, 1.0, 0.0
        %v1547 = vsel %vm1259, 1.0, 0.0
        %v1548 = vsel %vm1260, 1.0, 0.0
        %v1549 = vsel %vm1261, 1.0, 0.0
        %v1550 = vsel %vm1262, 1.0, 0.0
        %v1551 = vsel %vm1263, 1.0, 0.0
        %v1552 = vsel %vm1264, 1.0, 0.0
        %v1553 = vsel %vm1265, 1.0, 0.0
        %v1554 = vsel %vm1266, 1.0, 0.0
        %v1555 = vsel %vm1267, 1.0, 0.0
        %v1556 = vsel %vm1268, 1.0, 0.0
        %v1557 = vsel %vm1493, 1.0, 0.0
        %v1558 = vsel %vm1494, 1.0, 0.0
        %v1559 = vsel %vm1495, 1.0, 0.0
        %v1560 = vsel %vm1496, 1.0, 0.0
        %v1561 = vsel %vm1497, 1.0, 0.0
        %v1562 = vsel %vm1498, 1.0, 0.0
        %v1563 = vsel %vm1499, 1.0, 0.0
        %v1564 = vsel %vm1500, 1.0, 0.0
        %v1565 = vsel %vm1501, 1.0, 0.0
        %v1566 = vsel %vm1502, 1.0, 0.0
        %v1567 = vsel %vm1503, 1.0, 0.0
        %v1568 = vsel %vm1504, 1.0, 0.0
        %v1569 = vsel %vm1505, 1.0, 0.0
        %v1570 = vsel %vm1506, 1.0, 0.0
        %v1571 = vsel %vm1507, 1.0, 0.0
        %v1572 = vsel %vm1508, 1.0, 0.0
        %v1573 = vsel %vm1509, 1.0, 0.0
        %v1574 = vsel %vm1510, 1.0, 0.0
        %v1575 = vsel %vm1511, 1.0, 0.0
        %v1576 = vsel %vm1512, 1.0, 0.0
        %v1577 = vsel %vm1513, 1.0, 0.0
        %v1578 = vsel %vm1514, 1.0, 0.0
        %v1579 = vsel %vm1515, 1.0, 0.0
        %v1580 = vsel %vm1516, 1.0, 0.0
        %v1581 = vsel %vm1517, 1.0, 0.0
        %v1582 = vsel %vm1518, 1.0, 0.0
        %v1583 = vsel %vm1519, 1.0, 0.0
        %v1584 = vsel %vm1520, 1.0, 0.0
        %v1585 = vsel %vm1521, 1.0, 0.0
        %v1586 = vsel %vm1522, 1.0, 0.0
        %v1587 = vsel %vm1523, 1.0, 0.0
        %v1588 = vsel %vm1524, 1.0, 0.0
        %1590 = vset.pattern.permute.xlu0 0
        %1591 = vperm.xlu0 %1590, %v981
        %v1592 = vpop.permute.xlu0 %1591
        %1595 = vset.pattern.permute.xlu0 0
        %1596 = vperm.xlu0 %1595, %v982
        %v1597 = vpop.permute.xlu0 %1596
        %1600 = vset.pattern.permute.xlu0 0
        %1601 = vperm.xlu0 %1600, %v983
        %v1602 = vpop.permute.xlu0 %1601
        %1605 = vset.pattern.permute.xlu0 0
        %1606 = vperm.xlu0 %1605, %v984
        %v1607 = vpop.permute.xlu0 %1606
        %1610 = vset.pattern.permute.xlu0 0
        %1611 = vperm.xlu0 %1610, %v985
        %v1612 = vpop.permute.xlu0 %1611
        %1615 = vset.pattern.permute.xlu0 0
        %1616 = vperm.xlu0 %1615, %v986
        %v1617 = vpop.permute.xlu0 %1616
        %1620 = vset.pattern.permute.xlu0 0
        %1621 = vperm.xlu0 %1620, %v987
        %v1622 = vpop.permute.xlu0 %1621
        %1625 = vset.pattern.permute.xlu0 0
        %1626 = vperm.xlu0 %1625, %v988
        %v1627 = vpop.permute.xlu0 %1626
        %1630 = vset.pattern.permute.xlu0 0
        %1631 = vperm.xlu0 %1630, %v989
        %v1632 = vpop.permute.xlu0 %1631
        %1635 = vset.pattern.permute.xlu0 0
        %1636 = vperm.xlu0 %1635, %v990
        %v1637 = vpop.permute.xlu0 %1636
        %1640 = vset.pattern.permute.xlu0 0
        %1641 = vperm.xlu0 %1640, %v991
        %v1642 = vpop.permute.xlu0 %1641
        %1645 = vset.pattern.permute.xlu0 0
        %1646 = vperm.xlu0 %1645, %v992
        %v1647 = vpop.permute.xlu0 %1646
        %1650 = vset.pattern.permute.xlu0 0
        %1651 = vperm.xlu0 %1650, %v993
        %v1652 = vpop.permute.xlu0 %1651
        %1655 = vset.pattern.permute.xlu0 0
        %1656 = vperm.xlu0 %1655, %v994
        %v1657 = vpop.permute.xlu0 %1656
        %1660 = vset.pattern.permute.xlu0 0
        %1661 = vperm.xlu0 %1660, %v995
        %v1662 = vpop.permute.xlu0 %1661
        %1665 = vset.pattern.permute.xlu0 0
        %1666 = vperm.xlu0 %1665, %v996
        %v1667 = vpop.permute.xlu0 %1666
        %1670 = vset.pattern.permute.xlu0 0
        %1671 = vperm.xlu0 %1670, %v997
        %v1672 = vpop.permute.xlu0 %1671
        %1675 = vset.pattern.permute.xlu0 0
        %1676 = vperm.xlu0 %1675, %v998
        %v1677 = vpop.permute.xlu0 %1676
        %1680 = vset.pattern.permute.xlu0 0
        %1681 = vperm.xlu0 %1680, %v999
        %v1682 = vpop.permute.xlu0 %1681
        %1685 = vset.pattern.permute.xlu0 0
        %1686 = vperm.xlu0 %1685, %v1000
        %v1687 = vpop.permute.xlu0 %1686
        %1690 = vset.pattern.permute.xlu0 0
        %1691 = vperm.xlu0 %1690, %v1001
        %v1692 = vpop.permute.xlu0 %1691
        %1695 = vset.pattern.permute.xlu0 0
        %1696 = vperm.xlu0 %1695, %v1002
        %v1697 = vpop.permute.xlu0 %1696
        %1700 = vset.pattern.permute.xlu0 0
        %1701 = vperm.xlu0 %1700, %v1003
        %v1702 = vpop.permute.xlu0 %1701
        %1705 = vset.pattern.permute.xlu0 0
        %1706 = vperm.xlu0 %1705, %v1004
        %v1707 = vpop.permute.xlu0 %1706
        %1710 = vset.pattern.permute.xlu0 0
        %1711 = vperm.xlu0 %1710, %v1005
        %v1712 = vpop.permute.xlu0 %1711
        %1715 = vset.pattern.permute.xlu0 0
        %1716 = vperm.xlu0 %1715, %v1006
        %v1717 = vpop.permute.xlu0 %1716
        %1720 = vset.pattern.permute.xlu0 0
        %1721 = vperm.xlu0 %1720, %v1007
        %v1722 = vpop.permute.xlu0 %1721
        %1725 = vset.pattern.permute.xlu0 0
        %1726 = vperm.xlu0 %1725, %v1008
        %v1727 = vpop.permute.xlu0 %1726
        %1730 = vset.pattern.permute.xlu0 0
        %1731 = vperm.xlu0 %1730, %v1009
        %v1732 = vpop.permute.xlu0 %1731
        %1735 = vset.pattern.permute.xlu0 0
        %1736 = vperm.xlu0 %1735, %v1010
        %v1737 = vpop.permute.xlu0 %1736
        %1740 = vset.pattern.permute.xlu0 0
        %1741 = vperm.xlu0 %1740, %v1011
        %v1742 = vpop.permute.xlu0 %1741
        %1745 = vset.pattern.permute.xlu0 0
        %1746 = vperm.xlu0 %1745, %v1012
        %v1747 = vpop.permute.xlu0 %1746
        %v1749 = vmul.f32 %v1557, %v1592
        %v1750 = vmul.f32 %v1558, %v1597
        %v1751 = vmul.f32 %v1559, %v1602
        %v1752 = vmul.f32 %v1560, %v1607
        %v1753 = vmul.f32 %v1561, %v1612
        %v1754 = vmul.f32 %v1562, %v1617
        %v1755 = vmul.f32 %v1563, %v1622
        %v1756 = vmul.f32 %v1564, %v1627
        %v1757 = vmul.f32 %v1565, %v1632
        %v1758 = vmul.f32 %v1566, %v1637
        %v1759 = vmul.f32 %v1567, %v1642
        %v1760 = vmul.f32 %v1568, %v1647
        %v1761 = vmul.f32 %v1569, %v1652
        %v1762 = vmul.f32 %v1570, %v1657
        %v1763 = vmul.f32 %v1571, %v1662
        %v1764 = vmul.f32 %v1572, %v1667
        %v1765 = vmul.f32 %v1573, %v1672
        %v1766 = vmul.f32 %v1574, %v1677
        %v1767 = vmul.f32 %v1575, %v1682
        %v1768 = vmul.f32 %v1576, %v1687
        %v1769 = vmul.f32 %v1577, %v1692
        %v1770 = vmul.f32 %v1578, %v1697
        %v1771 = vmul.f32 %v1579, %v1702
        %v1772 = vmul.f32 %v1580, %v1707
        %v1773 = vmul.f32 %v1581, %v1712
        %v1774 = vmul.f32 %v1582, %v1717
        %v1775 = vmul.f32 %v1583, %v1722
        %v1776 = vmul.f32 %v1584, %v1727
        %v1777 = vmul.f32 %v1585, %v1732
        %v1778 = vmul.f32 %v1586, %v1737
        %v1779 = vmul.f32 %v1587, %v1742
        %v1780 = vmul.f32 %v1588, %v1747
        %v1781 = vsub.f32 %v1045, 1.0
        %v1782 = vsub.f32 %v1046, 1.0
        %v1783 = vsub.f32 %v1047, 1.0
        %v1784 = vsub.f32 %v1048, 1.0
        %v1785 = vsub.f32 %v1049, 1.0
        %v1786 = vsub.f32 %v1050, 1.0
        %v1787 = vsub.f32 %v1051, 1.0
        %v1788 = vsub.f32 %v1052, 1.0
        %v1789 = vsub.f32 %v1053, 1.0
        %v1790 = vsub.f32 %v1054, 1.0
        %v1791 = vsub.f32 %v1055, 1.0
        %v1792 = vsub.f32 %v1056, 1.0
        %v1793 = vsub.f32 %v1057, 1.0
        %v1794 = vsub.f32 %v1058, 1.0
        %v1795 = vsub.f32 %v1059, 1.0
        %v1796 = vsub.f32 %v1060, 1.0
        %v1797 = vsub.f32 %v1061, 1.0
        %v1798 = vsub.f32 %v1062, 1.0
        %v1799 = vsub.f32 %v1063, 1.0
        %v1800 = vsub.f32 %v1064, 1.0
        %v1801 = vsub.f32 %v1065, 1.0
        %v1802 = vsub.f32 %v1066, 1.0
        %v1803 = vsub.f32 %v1067, 1.0
        %v1804 = vsub.f32 %v1068, 1.0
        %v1805 = vsub.f32 %v1069, 1.0
        %v1806 = vsub.f32 %v1070, 1.0
        %v1807 = vsub.f32 %v1071, 1.0
        %v1808 = vsub.f32 %v1072, 1.0
        %v1809 = vsub.f32 %v1073, 1.0
        %v1810 = vsub.f32 %v1074, 1.0
        %v1811 = vsub.f32 %v1075, 1.0
        %v1812 = vsub.f32 %v1076, 1.0
        %v1813 = vmul.f32 %v1781, %v1781
        %v1814 = vmul.f32 %v1782, %v1782
        %v1815 = vmul.f32 %v1783, %v1783
        %v1816 = vmul.f32 %v1784, %v1784
        %v1817 = vmul.f32 %v1785, %v1785
        %v1818 = vmul.f32 %v1786, %v1786
        %v1819 = vmul.f32 %v1787, %v1787
        %v1820 = vmul.f32 %v1788, %v1788
        %v1821 = vmul.f32 %v1789, %v1789
        %v1822 = vmul.f32 %v1790, %v1790
        %v1823 = vmul.f32 %v1791, %v1791
        %v1824 = vmul.f32 %v1792, %v1792
        %v1825 = vmul.f32 %v1793, %v1793
        %v1826 = vmul.f32 %v1794, %v1794
        %v1827 = vmul.f32 %v1795, %v1795
        %v1828 = vmul.f32 %v1796, %v1796
        %v1829 = vmul.f32 %v1797, %v1797
        %v1830 = vmul.f32 %v1798, %v1798
        %v1831 = vmul.f32 %v1799, %v1799
        %v1832 = vmul.f32 %v1800, %v1800
        %v1833 = vmul.f32 %v1801, %v1801
        %v1834 = vmul.f32 %v1802, %v1802
        %v1835 = vmul.f32 %v1803, %v1803
        %v1836 = vmul.f32 %v1804, %v1804
        %v1837 = vmul.f32 %v1805, %v1805
        %v1838 = vmul.f32 %v1806, %v1806
        %v1839 = vmul.f32 %v1807, %v1807
        %v1840 = vmul.f32 %v1808, %v1808
        %v1841 = vmul.f32 %v1809, %v1809
        %v1842 = vmul.f32 %v1810, %v1810
        %v1843 = vmul.f32 %v1811, %v1811
        %v1844 = vmul.f32 %v1812, %v1812
        %v1845 = vsel %vm1237, %v1813, 0.0
        %v1846 = vsel %vm1238, %v1814, 0.0
        %v1847 = vsel %vm1239, %v1815, 0.0
        %v1848 = vsel %vm1240, %v1816, 0.0
        %v1849 = vsel %vm1241, %v1817, 0.0
        %v1850 = vsel %vm1242, %v1818, 0.0
        %v1851 = vsel %vm1243, %v1819, 0.0
        %v1852 = vsel %vm1244, %v1820, 0.0
        %v1853 = vsel %vm1245, %v1821, 0.0
        %v1854 = vsel %vm1246, %v1822, 0.0
        %v1855 = vsel %vm1247, %v1823, 0.0
        %v1856 = vsel %vm1248, %v1824, 0.0
        %v1857 = vsel %vm1249, %v1825, 0.0
        %v1858 = vsel %vm1250, %v1826, 0.0
        %v1859 = vsel %vm1251, %v1827, 0.0
        %v1860 = vsel %vm1252, %v1828, 0.0
        %v1861 = vsel %vm1253, %v1829, 0.0
        %v1862 = vsel %vm1254, %v1830, 0.0
        %v1863 = vsel %vm1255, %v1831, 0.0
        %v1864 = vsel %vm1256, %v1832, 0.0
        %v1865 = vsel %vm1257, %v1833, 0.0
        %v1866 = vsel %vm1258, %v1834, 0.0
        %v1867 = vsel %vm1259, %v1835, 0.0
        %v1868 = vsel %vm1260, %v1836, 0.0
        %v1869 = vsel %vm1261, %v1837, 0.0
        %v1870 = vsel %vm1262, %v1838, 0.0
        %v1871 = vsel %vm1263, %v1839, 0.0
        %v1872 = vsel %vm1264, %v1840, 0.0
        %v1873 = vsel %vm1265, %v1841, 0.0
        %v1874 = vsel %vm1266, %v1842, 0.0
        %v1875 = vsel %vm1267, %v1843, 0.0
        %v1876 = vsel %vm1268, %v1844, 0.0
        %1878 = vset.pattern.permute.xlu0 0
        %1879 = vperm.xlu0 %1878, %v853
        %v1880 = vpop.permute.xlu0 %1879
        %1883 = vset.pattern.permute.xlu0 0
        %1884 = vperm.xlu0 %1883, %v854
        %v1885 = vpop.permute.xlu0 %1884
        %1888 = vset.pattern.permute.xlu0 0
        %1889 = vperm.xlu0 %1888, %v855
        %v1890 = vpop.permute.xlu0 %1889
        %1893 = vset.pattern.permute.xlu0 0
        %1894 = vperm.xlu0 %1893, %v856
        %v1895 = vpop.permute.xlu0 %1894
        %1898 = vset.pattern.permute.xlu0 0
        %1899 = vperm.xlu0 %1898, %v857
        %v1900 = vpop.permute.xlu0 %1899
        %1903 = vset.pattern.permute.xlu0 0
        %1904 = vperm.xlu0 %1903, %v858
        %v1905 = vpop.permute.xlu0 %1904
        %1908 = vset.pattern.permute.xlu0 0
        %1909 = vperm.xlu0 %1908, %v859
        %v1910 = vpop.permute.xlu0 %1909
        %1913 = vset.pattern.permute.xlu0 0
        %1914 = vperm.xlu0 %1913, %v860
        %v1915 = vpop.permute.xlu0 %1914
        %1918 = vset.pattern.permute.xlu0 0
        %1919 = vperm.xlu0 %1918, %v861
        %v1920 = vpop.permute.xlu0 %1919
        %1923 = vset.pattern.permute.xlu0 0
        %1924 = vperm.xlu0 %1923, %v862
        %v1925 = vpop.permute.xlu0 %1924
        %1928 = vset.pattern.permute.xlu0 0
        %1929 = vperm.xlu0 %1928, %v863
        %v1930 = vpop.permute.xlu0 %1929
        %1933 = vset.pattern.permute.xlu0 0
        %1934 = vperm.xlu0 %1933, %v864
        %v1935 = vpop.permute.xlu0 %1934
        %1938 = vset.pattern.permute.xlu0 0
        %1939 = vperm.xlu0 %1938, %v865
        %v1940 = vpop.permute.xlu0 %1939
        %1943 = vset.pattern.permute.xlu0 0
        %1944 = vperm.xlu0 %1943, %v866
        %v1945 = vpop.permute.xlu0 %1944
        %1948 = vset.pattern.permute.xlu0 0
        %1949 = vperm.xlu0 %1948, %v867
        %v1950 = vpop.permute.xlu0 %1949
        %1953 = vset.pattern.permute.xlu0 0
        %1954 = vperm.xlu0 %1953, %v868
        %v1955 = vpop.permute.xlu0 %1954
        %1958 = vset.pattern.permute.xlu0 0
        %1959 = vperm.xlu0 %1958, %v869
        %v1960 = vpop.permute.xlu0 %1959
        %1963 = vset.pattern.permute.xlu0 0
        %1964 = vperm.xlu0 %1963, %v870
        %v1965 = vpop.permute.xlu0 %1964
        %1968 = vset.pattern.permute.xlu0 0
        %1969 = vperm.xlu0 %1968, %v871
        %v1970 = vpop.permute.xlu0 %1969
        %1973 = vset.pattern.permute.xlu0 0
        %1974 = vperm.xlu0 %1973, %v872
        %v1975 = vpop.permute.xlu0 %1974
        %1978 = vset.pattern.permute.xlu0 0
        %1979 = vperm.xlu0 %1978, %v873
        %v1980 = vpop.permute.xlu0 %1979
        %1983 = vset.pattern.permute.xlu0 0
        %1984 = vperm.xlu0 %1983, %v874
        %v1985 = vpop.permute.xlu0 %1984
        %1988 = vset.pattern.permute.xlu0 0
        %1989 = vperm.xlu0 %1988, %v875
        %v1990 = vpop.permute.xlu0 %1989
        %1993 = vset.pattern.permute.xlu0 0
        %1994 = vperm.xlu0 %1993, %v876
        %v1995 = vpop.permute.xlu0 %1994
        %1998 = vset.pattern.permute.xlu0 0
        %1999 = vperm.xlu0 %1998, %v877
        %v2000 = vpop.permute.xlu0 %1999
        %2003 = vset.pattern.permute.xlu0 0
        %2004 = vperm.xlu0 %2003, %v878
        %v2005 = vpop.permute.xlu0 %2004
        %2008 = vset.pattern.permute.xlu0 0
        %2009 = vperm.xlu0 %2008, %v879
        %v2010 = vpop.permute.xlu0 %2009
        %2013 = vset.pattern.permute.xlu0 0
        %2014 = vperm.xlu0 %2013, %v880
        %v2015 = vpop.permute.xlu0 %2014
        %2018 = vset.pattern.permute.xlu0 0
        %2019 = vperm.xlu0 %2018, %v881
        %v2020 = vpop.permute.xlu0 %2019
        %2023 = vset.pattern.permute.xlu0 0
        %2024 = vperm.xlu0 %2023, %v882
        %v2025 = vpop.permute.xlu0 %2024
        %2028 = vset.pattern.permute.xlu0 0
        %2029 = vperm.xlu0 %2028, %v883
        %v2030 = vpop.permute.xlu0 %2029
        %2033 = vset.pattern.permute.xlu0 0
        %2034 = vperm.xlu0 %2033, %v884
        %v2035 = vpop.permute.xlu0 %2034
        %v2037 = vsub.f32 %v1880, %v1013
        %v2038 = vsub.f32 %v1885, %v1014
        %v2039 = vsub.f32 %v1890, %v1015
        %v2040 = vsub.f32 %v1895, %v1016
        %v2041 = vsub.f32 %v1900, %v1017
        %v2042 = vsub.f32 %v1905, %v1018
        %v2043 = vsub.f32 %v1910, %v1019
        %v2044 = vsub.f32 %v1915, %v1020
        %v2045 = vsub.f32 %v1920, %v1021
        %v2046 = vsub.f32 %v1925, %v1022
        %v2047 = vsub.f32 %v1930, %v1023
        %v2048 = vsub.f32 %v1935, %v1024
        %v2049 = vsub.f32 %v1940, %v1025
        %v2050 = vsub.f32 %v1945, %v1026
        %v2051 = vsub.f32 %v1950, %v1027
        %v2052 = vsub.f32 %v1955, %v1028
        %v2053 = vsub.f32 %v1960, %v1029
        %v2054 = vsub.f32 %v1965, %v1030
        %v2055 = vsub.f32 %v1970, %v1031
        %v2056 = vsub.f32 %v1975, %v1032
        %v2057 = vsub.f32 %v1980, %v1033
        %v2058 = vsub.f32 %v1985, %v1034
        %v2059 = vsub.f32 %v1990, %v1035
        %v2060 = vsub.f32 %v1995, %v1036
        %v2061 = vsub.f32 %v2000, %v1037
        %v2062 = vsub.f32 %v2005, %v1038
        %v2063 = vsub.f32 %v2010, %v1039
        %v2064 = vsub.f32 %v2015, %v1040
        %v2065 = vsub.f32 %v2020, %v1041
        %v2066 = vsub.f32 %v2025, %v1042
        %v2067 = vsub.f32 %v2030, %v1043
        %v2068 = vsub.f32 %v2035, %v1044
        %v2069 = vmul.f32 %v2037, 20.0
        %v2070 = vmul.f32 %v2038, 20.0
        %v2071 = vmul.f32 %v2039, 20.0
        %v2072 = vmul.f32 %v2040, 20.0
        %v2073 = vmul.f32 %v2041, 20.0
        %v2074 = vmul.f32 %v2042, 20.0
        %v2075 = vmul.f32 %v2043, 20.0
        %v2076 = vmul.f32 %v2044, 20.0
        %v2077 = vmul.f32 %v2045, 20.0
        %v2078 = vmul.f32 %v2046, 20.0
        %v2079 = vmul.f32 %v2047, 20.0
        %v2080 = vmul.f32 %v2048, 20.0
        %v2081 = vmul.f32 %v2049, 20.0
        %v2082 = vmul.f32 %v2050, 20.0
        %v2083 = vmul.f32 %v2051, 20.0
        %v2084 = vmul.f32 %v2052, 20.0
        %v2085 = vmul.f32 %v2053, 20.0
        %v2086 = vmul.f32 %v2054, 20.0
        %v2087 = vmul.f32 %v2055, 20.0
        %v2088 = vmul.f32 %v2056, 20.0
        %v2089 = vmul.f32 %v2057, 20.0
        %v2090 = vmul.f32 %v2058, 20.0
        %v2091 = vmul.f32 %v2059, 20.0
        %v2092 = vmul.f32 %v2060, 20.0
        %v2093 = vmul.f32 %v2061, 20.0
        %v2094 = vmul.f32 %v2062, 20.0
        %v2095 = vmul.f32 %v2063, 20.0
        %v2096 = vmul.f32 %v2064, 20.0
        %v2097 = vmul.f32 %v2065, 20.0
        %v2098 = vmul.f32 %v2066, 20.0
        %v2099 = vmul.f32 %v2067, 20.0
        %v2100 = vmul.f32 %v2068, 20.0
        %v2101 = vsub.f32 %v1045, %v2069
        %v2102 = vsub.f32 %v1046, %v2070
        %v2103 = vsub.f32 %v1047, %v2071
        %v2104 = vsub.f32 %v1048, %v2072
        %v2105 = vsub.f32 %v1049, %v2073
        %v2106 = vsub.f32 %v1050, %v2074
        %v2107 = vsub.f32 %v1051, %v2075
        %v2108 = vsub.f32 %v1052, %v2076
        %v2109 = vsub.f32 %v1053, %v2077
        %v2110 = vsub.f32 %v1054, %v2078
        %v2111 = vsub.f32 %v1055, %v2079
        %v2112 = vsub.f32 %v1056, %v2080
        %v2113 = vsub.f32 %v1057, %v2081
        %v2114 = vsub.f32 %v1058, %v2082
        %v2115 = vsub.f32 %v1059, %v2083
        %v2116 = vsub.f32 %v1060, %v2084
        %v2117 = vsub.f32 %v1061, %v2085
        %v2118 = vsub.f32 %v1062, %v2086
        %v2119 = vsub.f32 %v1063, %v2087
        %v2120 = vsub.f32 %v1064, %v2088
        %v2121 = vsub.f32 %v1065, %v2089
        %v2122 = vsub.f32 %v1066, %v2090
        %v2123 = vsub.f32 %v1067, %v2091
        %v2124 = vsub.f32 %v1068, %v2092
        %v2125 = vsub.f32 %v1069, %v2093
        %v2126 = vsub.f32 %v1070, %v2094
        %v2127 = vsub.f32 %v1071, %v2095
        %v2128 = vsub.f32 %v1072, %v2096
        %v2129 = vsub.f32 %v1073, %v2097
        %v2130 = vsub.f32 %v1074, %v2098
        %v2131 = vsub.f32 %v1075, %v2099
        %v2132 = vsub.f32 %v1076, %v2100
        %v2133 = vmul.f32 %v2101, %v2101
        %v2134 = vmul.f32 %v2102, %v2102
        %v2135 = vmul.f32 %v2103, %v2103
        %v2136 = vmul.f32 %v2104, %v2104
        %v2137 = vmul.f32 %v2105, %v2105
        %v2138 = vmul.f32 %v2106, %v2106
        %v2139 = vmul.f32 %v2107, %v2107
        %v2140 = vmul.f32 %v2108, %v2108
        %v2141 = vmul.f32 %v2109, %v2109
        %v2142 = vmul.f32 %v2110, %v2110
        %v2143 = vmul.f32 %v2111, %v2111
        %v2144 = vmul.f32 %v2112, %v2112
        %v2145 = vmul.f32 %v2113, %v2113
        %v2146 = vmul.f32 %v2114, %v2114
        %v2147 = vmul.f32 %v2115, %v2115
        %v2148 = vmul.f32 %v2116, %v2116
        %v2149 = vmul.f32 %v2117, %v2117
        %v2150 = vmul.f32 %v2118, %v2118
        %v2151 = vmul.f32 %v2119, %v2119
        %v2152 = vmul.f32 %v2120, %v2120
        %v2153 = vmul.f32 %v2121, %v2121
        %v2154 = vmul.f32 %v2122, %v2122
        %v2155 = vmul.f32 %v2123, %v2123
        %v2156 = vmul.f32 %v2124, %v2124
        %v2157 = vmul.f32 %v2125, %v2125
        %v2158 = vmul.f32 %v2126, %v2126
        %v2159 = vmul.f32 %v2127, %v2127
        %v2160 = vmul.f32 %v2128, %v2128
        %v2161 = vmul.f32 %v2129, %v2129
        %v2162 = vmul.f32 %v2130, %v2130
        %v2163 = vmul.f32 %v2131, %v2131
        %v2164 = vmul.f32 %v2132, %v2132
        %v2165 = vmul.f32 %v1749, %v2133
        %v2166 = vmul.f32 %v1750, %v2134
        %v2167 = vmul.f32 %v1751, %v2135
        %v2168 = vmul.f32 %v1752, %v2136
        %v2169 = vmul.f32 %v1753, %v2137
        %v2170 = vmul.f32 %v1754, %v2138
        %v2171 = vmul.f32 %v1755, %v2139
        %v2172 = vmul.f32 %v1756, %v2140
        %v2173 = vmul.f32 %v1757, %v2141
        %v2174 = vmul.f32 %v1758, %v2142
        %v2175 = vmul.f32 %v1759, %v2143
        %v2176 = vmul.f32 %v1760, %v2144
        %v2177 = vmul.f32 %v1761, %v2145
        %v2178 = vmul.f32 %v1762, %v2146
        %v2179 = vmul.f32 %v1763, %v2147
        %v2180 = vmul.f32 %v1764, %v2148
        %v2181 = vmul.f32 %v1765, %v2149
        %v2182 = vmul.f32 %v1766, %v2150
        %v2183 = vmul.f32 %v1767, %v2151
        %v2184 = vmul.f32 %v1768, %v2152
        %v2185 = vmul.f32 %v1769, %v2153
        %v2186 = vmul.f32 %v1770, %v2154
        %v2187 = vmul.f32 %v1771, %v2155
        %v2188 = vmul.f32 %v1772, %v2156
        %v2189 = vmul.f32 %v1773, %v2157
        %v2190 = vmul.f32 %v1774, %v2158
        %v2191 = vmul.f32 %v1775, %v2159
        %v2192 = vmul.f32 %v1776, %v2160
        %v2193 = vmul.f32 %v1777, %v2161
        %v2194 = vmul.f32 %v1778, %v2162
        %v2195 = vmul.f32 %v1779, %v2163
        %v2196 = vmul.f32 %v1780, %v2164
        %v2197 = vld [vmem:[%s666] sm:$0xf]
        %vm2198 = vcmask 523264
        %v2199 = vsel %vm2198, %v1845, 0.0
        %v2200 = vsel %vm2198, %v1846, 0.0
        %v2201 = vadd.f32 %v2199, %v2200
        %v2202 = vsel %vm2198, %v1847, 0.0
        %v2203 = vadd.f32 %v2201, %v2202
        %v2204 = vsel %vm2198, %v1848, 0.0
        %v2205 = vadd.f32 %v2203, %v2204
        %v2206 = vsel %vm2198, %v1849, 0.0
        %v2207 = vadd.f32 %v2205, %v2206
        %v2208 = vsel %vm2198, %v1850, 0.0
        %v2209 = vadd.f32 %v2207, %v2208
        %v2210 = vsel %vm2198, %v1851, 0.0
        %v2211 = vadd.f32 %v2209, %v2210
        %v2212 = vsel %vm2198, %v1852, 0.0
        %v2213 = vadd.f32 %v2211, %v2212
        %v2214 = vsel %vm2198, %v1853, 0.0
        %v2215 = vadd.f32 %v2213, %v2214
        %v2216 = vsel %vm2198, %v1854, 0.0
        %v2217 = vadd.f32 %v2215, %v2216
        %v2218 = vsel %vm2198, %v1855, 0.0
        %v2219 = vadd.f32 %v2217, %v2218
        %v2220 = vsel %vm2198, %v1856, 0.0
        %v2221 = vadd.f32 %v2219, %v2220
        %v2222 = vsel %vm2198, %v1857, 0.0
        %v2223 = vadd.f32 %v2221, %v2222
        %v2224 = vsel %vm2198, %v1858, 0.0
        %v2225 = vadd.f32 %v2223, %v2224
        %v2226 = vsel %vm2198, %v1859, 0.0
        %v2227 = vadd.f32 %v2225, %v2226
        %v2228 = vsel %vm2198, %v1860, 0.0
        %v2229 = vadd.f32 %v2227, %v2228
        %v2230 = vsel %vm2198, %v1861, 0.0
        %v2231 = vadd.f32 %v2229, %v2230
        %v2232 = vsel %vm2198, %v1862, 0.0
        %v2233 = vadd.f32 %v2231, %v2232
        %v2234 = vsel %vm2198, %v1863, 0.0
        %v2235 = vadd.f32 %v2233, %v2234
        %v2236 = vsel %vm2198, %v1864, 0.0
        %v2237 = vadd.f32 %v2235, %v2236
        %v2238 = vsel %vm2198, %v1865, 0.0
        %v2239 = vadd.f32 %v2237, %v2238
        %v2240 = vsel %vm2198, %v1866, 0.0
        %v2241 = vadd.f32 %v2239, %v2240
        %v2242 = vsel %vm2198, %v1867, 0.0
        %v2243 = vadd.f32 %v2241, %v2242
        %v2244 = vsel %vm2198, %v1868, 0.0
        %v2245 = vadd.f32 %v2243, %v2244
        %v2246 = vsel %vm2198, %v1869, 0.0
        %v2247 = vadd.f32 %v2245, %v2246
        %v2248 = vsel %vm2198, %v1870, 0.0
        %v2249 = vadd.f32 %v2247, %v2248
        %v2250 = vsel %vm2198, %v1871, 0.0
        %v2251 = vadd.f32 %v2249, %v2250
        %v2252 = vsel %vm2198, %v1872, 0.0
        %v2253 = vadd.f32 %v2251, %v2252
        %v2254 = vsel %vm2198, %v1873, 0.0
        %v2255 = vadd.f32 %v2253, %v2254
        %v2256 = vsel %vm2198, %v1874, 0.0
        %v2257 = vadd.f32 %v2255, %v2256
        %v2258 = vsel %vm2198, %v1875, 0.0
        %v2259 = vadd.f32 %v2257, %v2258
        %v2260 = vsel %vm2198, %v1876, 0.0
        %v2261 = vadd.f32 %v2259, %v2260
        %v2262 = vrot.slane %v2261, 4
        %v2263 = vadd.f32 %v2261, %v2262
        %v2264 = vrot.slane %v2263, 2
        %v2265 = vadd.f32 %v2263, %v2264
        %v2266 = vrot.slane %v2265, 1
        %v2267 = vadd.f32 %v2265, %v2266
        %v2268 = vsel %vm2198, %v1525, 0.0
        %v2269 = vsel %vm2198, %v1526, 0.0
        %v2270 = vadd.f32 %v2268, %v2269
        %v2271 = vsel %vm2198, %v1527, 0.0
        %v2272 = vadd.f32 %v2270, %v2271
        %v2273 = vsel %vm2198, %v1528, 0.0
        %v2274 = vadd.f32 %v2272, %v2273
        %v2275 = vsel %vm2198, %v1529, 0.0
        %v2276 = vadd.f32 %v2274, %v2275
        %v2277 = vsel %vm2198, %v1530, 0.0
        %v2278 = vadd.f32 %v2276, %v2277
        %v2279 = vsel %vm2198, %v1531, 0.0
        %v2280 = vadd.f32 %v2278, %v2279
        %v2281 = vsel %vm2198, %v1532, 0.0
        %v2282 = vadd.f32 %v2280, %v2281
        %v2283 = vsel %vm2198, %v1533, 0.0
        %v2284 = vadd.f32 %v2282, %v2283
        %v2285 = vsel %vm2198, %v1534, 0.0
        %v2286 = vadd.f32 %v2284, %v2285
        %v2287 = vsel %vm2198, %v1535, 0.0
        %v2288 = vadd.f32 %v2286, %v2287
        %v2289 = vsel %vm2198, %v1536, 0.0
        %v2290 = vadd.f32 %v2288, %v2289
        %v2291 = vsel %vm2198, %v1537, 0.0
        %v2292 = vadd.f32 %v2290, %v2291
        %v2293 = vsel %vm2198, %v1538, 0.0
        %v2294 = vadd.f32 %v2292, %v2293
        %v2295 = vsel %vm2198, %v1539, 0.0
        %v2296 = vadd.f32 %v2294, %v2295
        %v2297 = vsel %vm2198, %v1540, 0.0
        %v2298 = vadd.f32 %v2296, %v2297
        %v2299 = vsel %vm2198, %v1541, 0.0
        %v2300 = vadd.f32 %v2298, %v2299
        %v2301 = vsel %vm2198, %v1542, 0.0
        %v2302 = vadd.f32 %v2300, %v2301
        %v2303 = vsel %vm2198, %v1543, 0.0
        %v2304 = vadd.f32 %v2302, %v2303
        %v2305 = vsel %vm2198, %v1544, 0.0
        %v2306 = vadd.f32 %v2304, %v2305
        %v2307 = vsel %vm2198, %v1545, 0.0
        %v2308 = vadd.f32 %v2306, %v2307
        %v2309 = vsel %vm2198, %v1546, 0.0
        %v2310 = vadd.f32 %v2308, %v2309
        %v2311 = vsel %vm2198, %v1547, 0.0
        %v2312 = vadd.f32 %v2310, %v2311
        %v2313 = vsel %vm2198, %v1548, 0.0
        %v2314 = vadd.f32 %v2312, %v2313
        %v2315 = vsel %vm2198, %v1549, 0.0
        %v2316 = vadd.f32 %v2314, %v2315
        %v2317 = vsel %vm2198, %v1550, 0.0
        %v2318 = vadd.f32 %v2316, %v2317
        %v2319 = vsel %vm2198, %v1551, 0.0
        %v2320 = vadd.f32 %v2318, %v2319
        %v2321 = vsel %vm2198, %v1552, 0.0
        %v2322 = vadd.f32 %v2320, %v2321
        %v2323 = vsel %vm2198, %v1553, 0.0
        %v2324 = vadd.f32 %v2322, %v2323
        %v2325 = vsel %vm2198, %v1554, 0.0
        %v2326 = vadd.f32 %v2324, %v2325
        %v2327 = vsel %vm2198, %v1555, 0.0
        %v2328 = vadd.f32 %v2326, %v2327
        %v2329 = vsel %vm2198, %v1556, 0.0
        %v2330 = vadd.f32 %v2328, %v2329
        %v2331 = vrot.slane %v2330, 4
        %v2332 = vadd.f32 %v2330, %v2331
        %v2333 = vrot.slane %v2332, 2
        %v2334 = vadd.f32 %v2332, %v2333
        %v2335 = vrot.slane %v2334, 1
        %v2336 = vadd.f32 %v2334, %v2335
        %v2337 = vsel %vm2198, %v2165, 0.0
        %v2338 = vsel %vm2198, %v2166, 0.0
        %v2339 = vadd.f32 %v2337, %v2338
        %v2340 = vsel %vm2198, %v2167, 0.0
        %v2341 = vadd.f32 %v2339, %v2340
        %v2342 = vsel %vm2198, %v2168, 0.0
        %v2343 = vadd.f32 %v2341, %v2342
        %v2344 = vsel %vm2198, %v2169, 0.0
        %v2345 = vadd.f32 %v2343, %v2344
        %v2346 = vsel %vm2198, %v2170, 0.0
        %v2347 = vadd.f32 %v2345, %v2346
        %v2348 = vsel %vm2198, %v2171, 0.0
        %v2349 = vadd.f32 %v2347, %v2348
        %v2350 = vsel %vm2198, %v2172, 0.0
        %v2351 = vadd.f32 %v2349, %v2350
        %v2352 = vsel %vm2198, %v2173, 0.0
        %v2353 = vadd.f32 %v2351, %v2352
        %v2354 = vsel %vm2198, %v2174, 0.0
        %v2355 = vadd.f32 %v2353, %v2354
        %v2356 = vsel %vm2198, %v2175, 0.0
        %v2357 = vadd.f32 %v2355, %v2356
        %v2358 = vsel %vm2198, %v2176, 0.0
        %v2359 = vadd.f32 %v2357, %v2358
        %v2360 = vsel %vm2198, %v2177, 0.0
        %v2361 = vadd.f32 %v2359, %v2360
        %v2362 = vsel %vm2198, %v2178, 0.0
        %v2363 = vadd.f32 %v2361, %v2362
        %v2364 = vsel %vm2198, %v2179, 0.0
        %v2365 = vadd.f32 %v2363, %v2364
        %v2366 = vsel %vm2198, %v2180, 0.0
        %v2367 = vadd.f32 %v2365, %v2366
        %v2368 = vsel %vm2198, %v2181, 0.0
        %v2369 = vadd.f32 %v2367, %v2368
        %v2370 = vsel %vm2198, %v2182, 0.0
        %v2371 = vadd.f32 %v2369, %v2370
        %v2372 = vsel %vm2198, %v2183, 0.0
        %v2373 = vadd.f32 %v2371, %v2372
        %v2374 = vsel %vm2198, %v2184, 0.0
        %v2375 = vadd.f32 %v2373, %v2374
        %v2376 = vsel %vm2198, %v2185, 0.0
        %v2377 = vadd.f32 %v2375, %v2376
        %v2378 = vsel %vm2198, %v2186, 0.0
        %v2379 = vadd.f32 %v2377, %v2378
        %v2380 = vsel %vm2198, %v2187, 0.0
        %v2381 = vadd.f32 %v2379, %v2380
        %v2382 = vsel %vm2198, %v2188, 0.0
        %v2383 = vadd.f32 %v2381, %v2382
        %v2384 = vsel %vm2198, %v2189, 0.0
        %v2385 = vadd.f32 %v2383, %v2384
        %v2386 = vsel %vm2198, %v2190, 0.0
        %v2387 = vadd.f32 %v2385, %v2386
        %v2388 = vsel %vm2198, %v2191, 0.0
        %v2389 = vadd.f32 %v2387, %v2388
        %v2390 = vsel %vm2198, %v2192, 0.0
        %v2391 = vadd.f32 %v2389, %v2390
        %v2392 = vsel %vm2198, %v2193, 0.0
        %v2393 = vadd.f32 %v2391, %v2392
        %v2394 = vsel %vm2198, %v2194, 0.0
        %v2395 = vadd.f32 %v2393, %v2394
        %v2396 = vsel %vm2198, %v2195, 0.0
        %v2397 = vadd.f32 %v2395, %v2396
        %v2398 = vsel %vm2198, %v2196, 0.0
        %v2399 = vadd.f32 %v2397, %v2398
        %v2400 = vrot.slane %v2399, 4
        %v2401 = vadd.f32 %v2399, %v2400
        %v2402 = vrot.slane %v2401, 2
        %v2403 = vadd.f32 %v2401, %v2402
        %v2404 = vrot.slane %v2403, 1
        %v2405 = vadd.f32 %v2403, %v2404
        %v2406 = vsel %vm2198, %v1749, 0.0
        %v2407 = vsel %vm2198, %v1750, 0.0
        %v2408 = vadd.f32 %v2406, %v2407
        %v2409 = vsel %vm2198, %v1751, 0.0
        %v2410 = vadd.f32 %v2408, %v2409
        %v2411 = vsel %vm2198, %v1752, 0.0
        %v2412 = vadd.f32 %v2410, %v2411
        %v2413 = vsel %vm2198, %v1753, 0.0
        %v2414 = vadd.f32 %v2412, %v2413
        %v2415 = vsel %vm2198, %v1754, 0.0
        %v2416 = vadd.f32 %v2414, %v2415
        %v2417 = vsel %vm2198, %v1755, 0.0
        %v2418 = vadd.f32 %v2416, %v2417
        %v2419 = vsel %vm2198, %v1756, 0.0
        %v2420 = vadd.f32 %v2418, %v2419
        %v2421 = vsel %vm2198, %v1757, 0.0
        %v2422 = vadd.f32 %v2420, %v2421
        %v2423 = vsel %vm2198, %v1758, 0.0
        %v2424 = vadd.f32 %v2422, %v2423
        %v2425 = vsel %vm2198, %v1759, 0.0
        %v2426 = vadd.f32 %v2424, %v2425
        %v2427 = vsel %vm2198, %v1760, 0.0
        %v2428 = vadd.f32 %v2426, %v2427
        %v2429 = vsel %vm2198, %v1761, 0.0
        %v2430 = vadd.f32 %v2428, %v2429
        %v2431 = vsel %vm2198, %v1762, 0.0
        %v2432 = vadd.f32 %v2430, %v2431
        %v2433 = vsel %vm2198, %v1763, 0.0
        %v2434 = vadd.f32 %v2432, %v2433
        %v2435 = vsel %vm2198, %v1764, 0.0
        %v2436 = vadd.f32 %v2434, %v2435
        %v2437 = vsel %vm2198, %v1765, 0.0
        %v2438 = vadd.f32 %v2436, %v2437
        %v2439 = vsel %vm2198, %v1766, 0.0
        %v2440 = vadd.f32 %v2438, %v2439
        %v2441 = vsel %vm2198, %v1767, 0.0
        %v2442 = vadd.f32 %v2440, %v2441
        %v2443 = vsel %vm2198, %v1768, 0.0
        %v2444 = vadd.f32 %v2442, %v2443
        %v2445 = vsel %vm2198, %v1769, 0.0
        %v2446 = vadd.f32 %v2444, %v2445
        %v2447 = vsel %vm2198, %v1770, 0.0
        %v2448 = vadd.f32 %v2446, %v2447
        %v2449 = vsel %vm2198, %v1771, 0.0
        %v2450 = vadd.f32 %v2448, %v2449
        %v2451 = vsel %vm2198, %v1772, 0.0
        %v2452 = vadd.f32 %v2450, %v2451
        %v2453 = vsel %vm2198, %v1773, 0.0
        %v2454 = vadd.f32 %v2452, %v2453
        %v2455 = vsel %vm2198, %v1774, 0.0
        %v2456 = vadd.f32 %v2454, %v2455
        %v2457 = vsel %vm2198, %v1775, 0.0
        %v2458 = vadd.f32 %v2456, %v2457
        %v2459 = vsel %vm2198, %v1776, 0.0
        %v2460 = vadd.f32 %v2458, %v2459
        %v2461 = vsel %vm2198, %v1777, 0.0
        %v2462 = vadd.f32 %v2460, %v2461
        %v2463 = vsel %vm2198, %v1778, 0.0
        %v2464 = vadd.f32 %v2462, %v2463
        %v2465 = vsel %vm2198, %v1779, 0.0
        %v2466 = vadd.f32 %v2464, %v2465
        %v2467 = vsel %vm2198, %v1780, 0.0
        %v2468 = vadd.f32 %v2466, %v2467
        %v2469 = vrot.slane %v2468, 4
        %v2470 = vadd.f32 %v2468, %v2469
        %v2471 = vrot.slane %v2470, 2
        %v2472 = vadd.f32 %v2470, %v2471
        %v2473 = vrot.slane %v2472, 1
        %v2474 = vadd.f32 %v2472, %v2473
        %v2475 = vsel %vm839, %v2267, %v2336
        %v2476 = vsel %vm842, %v2475, %v2405
        %v2477 = vsel %vm775, %v2476, %v2474
        %v2478 = vadd.f32 %v2197, %v2477
        %vm2479 = vcmask 519168
        %2480 = vst.msk [vmem:[%s666] sm:$0xf] %vm2479, %v2478
        %v2481 = vld [vmem:[%s748] sm:$0xff]
        %v2482 = vld [vmem:[%s748 + $0x8] sm:$0xff]
        %v2483 = vld [vmem:[%s748 + $0x10] sm:$0xff]
        %v2484 = vld [vmem:[%s748 + $0x18] sm:$0xff]
        %v2485 = vld [vmem:[%s748 + $0x20] sm:$0xff]
        %v2486 = vld [vmem:[%s748 + $0x28] sm:$0xff]
        %v2487 = vld [vmem:[%s748 + $0x30] sm:$0xff]
        %v2488 = vld [vmem:[%s748 + $0x38] sm:$0xff]
        %v2489 = vld [vmem:[%s748 + $0x40] sm:$0xff]
        %v2490 = vld [vmem:[%s748 + $0x48] sm:$0xff]
        %v2491 = vld [vmem:[%s748 + $0x50] sm:$0xff]
        %v2492 = vld [vmem:[%s748 + $0x58] sm:$0xff]
        %v2493 = vld [vmem:[%s748 + $0x60] sm:$0xff]
        %v2494 = vld [vmem:[%s748 + $0x68] sm:$0xff]
        %v2495 = vld [vmem:[%s748 + $0x70] sm:$0xff]
        %v2496 = vld [vmem:[%s748 + $0x78] sm:$0xff]
        %v2497 = vld [vmem:[%s748 + $0x80] sm:$0xff]
        %v2498 = vld [vmem:[%s748 + $0x88] sm:$0xff]
        %v2499 = vld [vmem:[%s748 + $0x90] sm:$0xff]
        %v2500 = vld [vmem:[%s748 + $0x98] sm:$0xff]
        %v2501 = vld [vmem:[%s748 + $0xa0] sm:$0xff]
        %v2502 = vld [vmem:[%s748 + $0xa8] sm:$0xff]
        %v2503 = vld [vmem:[%s748 + $0xb0] sm:$0xff]
        %v2504 = vld [vmem:[%s748 + $0xb8] sm:$0xff]
        %v2505 = vld [vmem:[%s748 + $0xc0] sm:$0xff]
        %v2506 = vld [vmem:[%s748 + $0xc8] sm:$0xff]
        %v2507 = vld [vmem:[%s748 + $0xd0] sm:$0xff]
        %v2508 = vld [vmem:[%s748 + $0xd8] sm:$0xff]
        %v2509 = vld [vmem:[%s748 + $0xe0] sm:$0xff]
        %v2510 = vld [vmem:[%s748 + $0xe8] sm:$0xff]
        %v2511 = vld [vmem:[%s748 + $0xf0] sm:$0xff]
        %v2512 = vld [vmem:[%s748 + $0xf8] sm:$0xff]
        %v2513 = vld [vmem:[%s756] sm:$0xff]
        %v2514 = vld [vmem:[%s756 + $0x8] sm:$0xff]
        %v2515 = vld [vmem:[%s756 + $0x10] sm:$0xff]
        %v2516 = vld [vmem:[%s756 + $0x18] sm:$0xff]
        %v2517 = vld [vmem:[%s756 + $0x20] sm:$0xff]
        %v2518 = vld [vmem:[%s756 + $0x28] sm:$0xff]
        %v2519 = vld [vmem:[%s756 + $0x30] sm:$0xff]
        %v2520 = vld [vmem:[%s756 + $0x38] sm:$0xff]
        %v2521 = vld [vmem:[%s756 + $0x40] sm:$0xff]
        %v2522 = vld [vmem:[%s756 + $0x48] sm:$0xff]
        %v2523 = vld [vmem:[%s756 + $0x50] sm:$0xff]
        %v2524 = vld [vmem:[%s756 + $0x58] sm:$0xff]
        %v2525 = vld [vmem:[%s756 + $0x60] sm:$0xff]
        %v2526 = vld [vmem:[%s756 + $0x68] sm:$0xff]
        %v2527 = vld [vmem:[%s756 + $0x70] sm:$0xff]
        %v2528 = vld [vmem:[%s756 + $0x78] sm:$0xff]
        %v2529 = vld [vmem:[%s756 + $0x80] sm:$0xff]
        %v2530 = vld [vmem:[%s756 + $0x88] sm:$0xff]
        %v2531 = vld [vmem:[%s756 + $0x90] sm:$0xff]
        %v2532 = vld [vmem:[%s756 + $0x98] sm:$0xff]
        %v2533 = vld [vmem:[%s756 + $0xa0] sm:$0xff]
        %v2534 = vld [vmem:[%s756 + $0xa8] sm:$0xff]
        %v2535 = vld [vmem:[%s756 + $0xb0] sm:$0xff]
        %v2536 = vld [vmem:[%s756 + $0xb8] sm:$0xff]
        %v2537 = vld [vmem:[%s756 + $0xc0] sm:$0xff]
        %v2538 = vld [vmem:[%s756 + $0xc8] sm:$0xff]
        %v2539 = vld [vmem:[%s756 + $0xd0] sm:$0xff]
        %v2540 = vld [vmem:[%s756 + $0xd8] sm:$0xff]
        %v2541 = vld [vmem:[%s756 + $0xe0] sm:$0xff]
        %v2542 = vld [vmem:[%s756 + $0xe8] sm:$0xff]
        %v2543 = vld [vmem:[%s756 + $0xf0] sm:$0xff]
        %v2544 = vld [vmem:[%s756 + $0xf8] sm:$0xff]
        %vm2545 = vcmp.lt.f32.partialorder %v2481, %v1080
        %vm2546 = vcmp.lt.f32.partialorder %v2482, %v1085
        %vm2547 = vcmp.lt.f32.partialorder %v2483, %v1090
        %vm2548 = vcmp.lt.f32.partialorder %v2484, %v1095
        %vm2549 = vcmp.lt.f32.partialorder %v2485, %v1100
        %vm2550 = vcmp.lt.f32.partialorder %v2486, %v1105
        %vm2551 = vcmp.lt.f32.partialorder %v2487, %v1110
        %vm2552 = vcmp.lt.f32.partialorder %v2488, %v1115
        %vm2553 = vcmp.lt.f32.partialorder %v2489, %v1120
        %vm2554 = vcmp.lt.f32.partialorder %v2490, %v1125
        %vm2555 = vcmp.lt.f32.partialorder %v2491, %v1130
        %vm2556 = vcmp.lt.f32.partialorder %v2492, %v1135
        %vm2557 = vcmp.lt.f32.partialorder %v2493, %v1140
        %vm2558 = vcmp.lt.f32.partialorder %v2494, %v1145
        %vm2559 = vcmp.lt.f32.partialorder %v2495, %v1150
        %vm2560 = vcmp.lt.f32.partialorder %v2496, %v1155
        %vm2561 = vcmp.lt.f32.partialorder %v2497, %v1160
        %vm2562 = vcmp.lt.f32.partialorder %v2498, %v1165
        %vm2563 = vcmp.lt.f32.partialorder %v2499, %v1170
        %vm2564 = vcmp.lt.f32.partialorder %v2500, %v1175
        %vm2565 = vcmp.lt.f32.partialorder %v2501, %v1180
        %vm2566 = vcmp.lt.f32.partialorder %v2502, %v1185
        %vm2567 = vcmp.lt.f32.partialorder %v2503, %v1190
        %vm2568 = vcmp.lt.f32.partialorder %v2504, %v1195
        %vm2569 = vcmp.lt.f32.partialorder %v2505, %v1200
        %vm2570 = vcmp.lt.f32.partialorder %v2506, %v1205
        %vm2571 = vcmp.lt.f32.partialorder %v2507, %v1210
        %vm2572 = vcmp.lt.f32.partialorder %v2508, %v1215
        %vm2573 = vcmp.lt.f32.partialorder %v2509, %v1220
        %vm2574 = vcmp.lt.f32.partialorder %v2510, %v1225
        %vm2575 = vcmp.lt.f32.partialorder %v2511, %v1230
        %vm2576 = vcmp.lt.f32.partialorder %v2512, %v1235
        %vm2577 = vcmp.ge.f32.partialorder %v2481, %v1080
        %vm2578 = vcmp.ge.f32.partialorder %v2482, %v1085
        %vm2579 = vcmp.ge.f32.partialorder %v2483, %v1090
        %vm2580 = vcmp.ge.f32.partialorder %v2484, %v1095
        %vm2581 = vcmp.ge.f32.partialorder %v2485, %v1100
        %vm2582 = vcmp.ge.f32.partialorder %v2486, %v1105
        %vm2583 = vcmp.ge.f32.partialorder %v2487, %v1110
        %vm2584 = vcmp.ge.f32.partialorder %v2488, %v1115
        %vm2585 = vcmp.ge.f32.partialorder %v2489, %v1120
        %vm2586 = vcmp.ge.f32.partialorder %v2490, %v1125
        %vm2587 = vcmp.ge.f32.partialorder %v2491, %v1130
        %vm2588 = vcmp.ge.f32.partialorder %v2492, %v1135
        %vm2589 = vcmp.ge.f32.partialorder %v2493, %v1140
        %vm2590 = vcmp.ge.f32.partialorder %v2494, %v1145
        %vm2591 = vcmp.ge.f32.partialorder %v2495, %v1150
        %vm2592 = vcmp.ge.f32.partialorder %v2496, %v1155
        %vm2593 = vcmp.ge.f32.partialorder %v2497, %v1160
        %vm2594 = vcmp.ge.f32.partialorder %v2498, %v1165
        %vm2595 = vcmp.ge.f32.partialorder %v2499, %v1170
        %vm2596 = vcmp.ge.f32.partialorder %v2500, %v1175
        %vm2597 = vcmp.ge.f32.partialorder %v2501, %v1180
        %vm2598 = vcmp.ge.f32.partialorder %v2502, %v1185
        %vm2599 = vcmp.ge.f32.partialorder %v2503, %v1190
        %vm2600 = vcmp.ge.f32.partialorder %v2504, %v1195
        %vm2601 = vcmp.ge.f32.partialorder %v2505, %v1200
        %vm2602 = vcmp.ge.f32.partialorder %v2506, %v1205
        %vm2603 = vcmp.ge.f32.partialorder %v2507, %v1210
        %vm2604 = vcmp.ge.f32.partialorder %v2508, %v1215
        %vm2605 = vcmp.ge.f32.partialorder %v2509, %v1220
        %vm2606 = vcmp.ge.f32.partialorder %v2510, %v1225
        %vm2607 = vcmp.ge.f32.partialorder %v2511, %v1230
        %vm2608 = vcmp.ge.f32.partialorder %v2512, %v1235
        %vm2609 = vcmp.le.f32.partialorder %v2481, %v1304
        %vm2610 = vcmp.le.f32.partialorder %v2482, %v1309
        %vm2611 = vcmp.le.f32.partialorder %v2483, %v1314
        %vm2612 = vcmp.le.f32.partialorder %v2484, %v1319
        %vm2613 = vcmp.le.f32.partialorder %v2485, %v1324
        %vm2614 = vcmp.le.f32.partialorder %v2486, %v1329
        %vm2615 = vcmp.le.f32.partialorder %v2487, %v1334
        %vm2616 = vcmp.le.f32.partialorder %v2488, %v1339
        %vm2617 = vcmp.le.f32.partialorder %v2489, %v1344
        %vm2618 = vcmp.le.f32.partialorder %v2490, %v1349
        %vm2619 = vcmp.le.f32.partialorder %v2491, %v1354
        %vm2620 = vcmp.le.f32.partialorder %v2492, %v1359
        %vm2621 = vcmp.le.f32.partialorder %v2493, %v1364
        %vm2622 = vcmp.le.f32.partialorder %v2494, %v1369
        %vm2623 = vcmp.le.f32.partialorder %v2495, %v1374
        %vm2624 = vcmp.le.f32.partialorder %v2496, %v1379
        %vm2625 = vcmp.le.f32.partialorder %v2497, %v1384
        %vm2626 = vcmp.le.f32.partialorder %v2498, %v1389
        %vm2627 = vcmp.le.f32.partialorder %v2499, %v1394
        %vm2628 = vcmp.le.f32.partialorder %v2500, %v1399
        %vm2629 = vcmp.le.f32.partialorder %v2501, %v1404
        %vm2630 = vcmp.le.f32.partialorder %v2502, %v1409
        %vm2631 = vcmp.le.f32.partialorder %v2503, %v1414
        %vm2632 = vcmp.le.f32.partialorder %v2504, %v1419
        %vm2633 = vcmp.le.f32.partialorder %v2505, %v1424
        %vm2634 = vcmp.le.f32.partialorder %v2506, %v1429
        %vm2635 = vcmp.le.f32.partialorder %v2507, %v1434
        %vm2636 = vcmp.le.f32.partialorder %v2508, %v1439
        %vm2637 = vcmp.le.f32.partialorder %v2509, %v1444
        %vm2638 = vcmp.le.f32.partialorder %v2510, %v1449
        %vm2639 = vcmp.le.f32.partialorder %v2511, %v1454
        %vm2640 = vcmp.le.f32.partialorder %v2512, %v1459
        %vm2641 = vmand %vm2577, %vm2609
        %vm2642 = vmand %vm2578, %vm2610
        %vm2643 = vmand %vm2579, %vm2611
        %vm2644 = vmand %vm2580, %vm2612
        %vm2645 = vmand %vm2581, %vm2613
        %vm2646 = vmand %vm2582, %vm2614
        %vm2647 = vmand %vm2583, %vm2615
        %vm2648 = vmand %vm2584, %vm2616
        %vm2649 = vmand %vm2585, %vm2617
        %vm2650 = vmand %vm2586, %vm2618
        %vm2651 = vmand %vm2587, %vm2619
        %vm2652 = vmand %vm2588, %vm2620
        %vm2653 = vmand %vm2589, %vm2621
        %vm2654 = vmand %vm2590, %vm2622
        %vm2655 = vmand %vm2591, %vm2623
        %vm2656 = vmand %vm2592, %vm2624
        %vm2657 = vmand %vm2593, %vm2625
        %vm2658 = vmand %vm2594, %vm2626
        %vm2659 = vmand %vm2595, %vm2627
        %vm2660 = vmand %vm2596, %vm2628
        %vm2661 = vmand %vm2597, %vm2629
        %vm2662 = vmand %vm2598, %vm2630
        %vm2663 = vmand %vm2599, %vm2631
        %vm2664 = vmand %vm2600, %vm2632
        %vm2665 = vmand %vm2601, %vm2633
        %vm2666 = vmand %vm2602, %vm2634
        %vm2667 = vmand %vm2603, %vm2635
        %vm2668 = vmand %vm2604, %vm2636
        %vm2669 = vmand %vm2605, %vm2637
        %vm2670 = vmand %vm2606, %vm2638
        %vm2671 = vmand %vm2607, %vm2639
        %vm2672 = vmand %vm2608, %vm2640
        %v2673 = vsel %vm2545, 1.0, 0.0
        %v2674 = vsel %vm2546, 1.0, 0.0
        %v2675 = vsel %vm2547, 1.0, 0.0
        %v2676 = vsel %vm2548, 1.0, 0.0
        %v2677 = vsel %vm2549, 1.0, 0.0
        %v2678 = vsel %vm2550, 1.0, 0.0
        %v2679 = vsel %vm2551, 1.0, 0.0
        %v2680 = vsel %vm2552, 1.0, 0.0
        %v2681 = vsel %vm2553, 1.0, 0.0
        %v2682 = vsel %vm2554, 1.0, 0.0
        %v2683 = vsel %vm2555, 1.0, 0.0
        %v2684 = vsel %vm2556, 1.0, 0.0
        %v2685 = vsel %vm2557, 1.0, 0.0
        %v2686 = vsel %vm2558, 1.0, 0.0
        %v2687 = vsel %vm2559, 1.0, 0.0
        %v2688 = vsel %vm2560, 1.0, 0.0
        %v2689 = vsel %vm2561, 1.0, 0.0
        %v2690 = vsel %vm2562, 1.0, 0.0
        %v2691 = vsel %vm2563, 1.0, 0.0
        %v2692 = vsel %vm2564, 1.0, 0.0
        %v2693 = vsel %vm2565, 1.0, 0.0
        %v2694 = vsel %vm2566, 1.0, 0.0
        %v2695 = vsel %vm2567, 1.0, 0.0
        %v2696 = vsel %vm2568, 1.0, 0.0
        %v2697 = vsel %vm2569, 1.0, 0.0
        %v2698 = vsel %vm2570, 1.0, 0.0
        %v2699 = vsel %vm2571, 1.0, 0.0
        %v2700 = vsel %vm2572, 1.0, 0.0
        %v2701 = vsel %vm2573, 1.0, 0.0
        %v2702 = vsel %vm2574, 1.0, 0.0
        %v2703 = vsel %vm2575, 1.0, 0.0
        %v2704 = vsel %vm2576, 1.0, 0.0
        %v2705 = vsel %vm2641, 1.0, 0.0
        %v2706 = vsel %vm2642, 1.0, 0.0
        %v2707 = vsel %vm2643, 1.0, 0.0
        %v2708 = vsel %vm2644, 1.0, 0.0
        %v2709 = vsel %vm2645, 1.0, 0.0
        %v2710 = vsel %vm2646, 1.0, 0.0
        %v2711 = vsel %vm2647, 1.0, 0.0
        %v2712 = vsel %vm2648, 1.0, 0.0
        %v2713 = vsel %vm2649, 1.0, 0.0
        %v2714 = vsel %vm2650, 1.0, 0.0
        %v2715 = vsel %vm2651, 1.0, 0.0
        %v2716 = vsel %vm2652, 1.0, 0.0
        %v2717 = vsel %vm2653, 1.0, 0.0
        %v2718 = vsel %vm2654, 1.0, 0.0
        %v2719 = vsel %vm2655, 1.0, 0.0
        %v2720 = vsel %vm2656, 1.0, 0.0
        %v2721 = vsel %vm2657, 1.0, 0.0
        %v2722 = vsel %vm2658, 1.0, 0.0
        %v2723 = vsel %vm2659, 1.0, 0.0
        %v2724 = vsel %vm2660, 1.0, 0.0
        %v2725 = vsel %vm2661, 1.0, 0.0
        %v2726 = vsel %vm2662, 1.0, 0.0
        %v2727 = vsel %vm2663, 1.0, 0.0
        %v2728 = vsel %vm2664, 1.0, 0.0
        %v2729 = vsel %vm2665, 1.0, 0.0
        %v2730 = vsel %vm2666, 1.0, 0.0
        %v2731 = vsel %vm2667, 1.0, 0.0
        %v2732 = vsel %vm2668, 1.0, 0.0
        %v2733 = vsel %vm2669, 1.0, 0.0
        %v2734 = vsel %vm2670, 1.0, 0.0
        %v2735 = vsel %vm2671, 1.0, 0.0
        %v2736 = vsel %vm2672, 1.0, 0.0
        %v2737 = vmul.f32 %v2705, %v1592
        %v2738 = vmul.f32 %v2706, %v1597
        %v2739 = vmul.f32 %v2707, %v1602
        %v2740 = vmul.f32 %v2708, %v1607
        %v2741 = vmul.f32 %v2709, %v1612
        %v2742 = vmul.f32 %v2710, %v1617
        %v2743 = vmul.f32 %v2711, %v1622
        %v2744 = vmul.f32 %v2712, %v1627
        %v2745 = vmul.f32 %v2713, %v1632
        %v2746 = vmul.f32 %v2714, %v1637
        %v2747 = vmul.f32 %v2715, %v1642
        %v2748 = vmul.f32 %v2716, %v1647
        %v2749 = vmul.f32 %v2717, %v1652
        %v2750 = vmul.f32 %v2718, %v1657
        %v2751 = vmul.f32 %v2719, %v1662
        %v2752 = vmul.f32 %v2720, %v1667
        %v2753 = vmul.f32 %v2721, %v1672
        %v2754 = vmul.f32 %v2722, %v1677
        %v2755 = vmul.f32 %v2723, %v1682
        %v2756 = vmul.f32 %v2724, %v1687
        %v2757 = vmul.f32 %v2725, %v1692
        %v2758 = vmul.f32 %v2726, %v1697
        %v2759 = vmul.f32 %v2727, %v1702
        %v2760 = vmul.f32 %v2728, %v1707
        %v2761 = vmul.f32 %v2729, %v1712
        %v2762 = vmul.f32 %v2730, %v1717
        %v2763 = vmul.f32 %v2731, %v1722
        %v2764 = vmul.f32 %v2732, %v1727
        %v2765 = vmul.f32 %v2733, %v1732
        %v2766 = vmul.f32 %v2734, %v1737
        %v2767 = vmul.f32 %v2735, %v1742
        %v2768 = vmul.f32 %v2736, %v1747
        %v2769 = vsub.f32 %v2513, 1.0
        %v2770 = vsub.f32 %v2514, 1.0
        %v2771 = vsub.f32 %v2515, 1.0
        %v2772 = vsub.f32 %v2516, 1.0
        %v2773 = vsub.f32 %v2517, 1.0
        %v2774 = vsub.f32 %v2518, 1.0
        %v2775 = vsub.f32 %v2519, 1.0
        %v2776 = vsub.f32 %v2520, 1.0
        %v2777 = vsub.f32 %v2521, 1.0
        %v2778 = vsub.f32 %v2522, 1.0
        %v2779 = vsub.f32 %v2523, 1.0
        %v2780 = vsub.f32 %v2524, 1.0
        %v2781 = vsub.f32 %v2525, 1.0
        %v2782 = vsub.f32 %v2526, 1.0
        %v2783 = vsub.f32 %v2527, 1.0
        %v2784 = vsub.f32 %v2528, 1.0
        %v2785 = vsub.f32 %v2529, 1.0
        %v2786 = vsub.f32 %v2530, 1.0
        %v2787 = vsub.f32 %v2531, 1.0
        %v2788 = vsub.f32 %v2532, 1.0
        %v2789 = vsub.f32 %v2533, 1.0
        %v2790 = vsub.f32 %v2534, 1.0
        %v2791 = vsub.f32 %v2535, 1.0
        %v2792 = vsub.f32 %v2536, 1.0
        %v2793 = vsub.f32 %v2537, 1.0
        %v2794 = vsub.f32 %v2538, 1.0
        %v2795 = vsub.f32 %v2539, 1.0
        %v2796 = vsub.f32 %v2540, 1.0
        %v2797 = vsub.f32 %v2541, 1.0
        %v2798 = vsub.f32 %v2542, 1.0
        %v2799 = vsub.f32 %v2543, 1.0
        %v2800 = vsub.f32 %v2544, 1.0
        %v2801 = vmul.f32 %v2769, %v2769
        %v2802 = vmul.f32 %v2770, %v2770
        %v2803 = vmul.f32 %v2771, %v2771
        %v2804 = vmul.f32 %v2772, %v2772
        %v2805 = vmul.f32 %v2773, %v2773
        %v2806 = vmul.f32 %v2774, %v2774
        %v2807 = vmul.f32 %v2775, %v2775
        %v2808 = vmul.f32 %v2776, %v2776
        %v2809 = vmul.f32 %v2777, %v2777
        %v2810 = vmul.f32 %v2778, %v2778
        %v2811 = vmul.f32 %v2779, %v2779
        %v2812 = vmul.f32 %v2780, %v2780
        %v2813 = vmul.f32 %v2781, %v2781
        %v2814 = vmul.f32 %v2782, %v2782
        %v2815 = vmul.f32 %v2783, %v2783
        %v2816 = vmul.f32 %v2784, %v2784
        %v2817 = vmul.f32 %v2785, %v2785
        %v2818 = vmul.f32 %v2786, %v2786
        %v2819 = vmul.f32 %v2787, %v2787
        %v2820 = vmul.f32 %v2788, %v2788
        %v2821 = vmul.f32 %v2789, %v2789
        %v2822 = vmul.f32 %v2790, %v2790
        %v2823 = vmul.f32 %v2791, %v2791
        %v2824 = vmul.f32 %v2792, %v2792
        %v2825 = vmul.f32 %v2793, %v2793
        %v2826 = vmul.f32 %v2794, %v2794
        %v2827 = vmul.f32 %v2795, %v2795
        %v2828 = vmul.f32 %v2796, %v2796
        %v2829 = vmul.f32 %v2797, %v2797
        %v2830 = vmul.f32 %v2798, %v2798
        %v2831 = vmul.f32 %v2799, %v2799
        %v2832 = vmul.f32 %v2800, %v2800
        %v2833 = vsel %vm2545, %v2801, 0.0
        %v2834 = vsel %vm2546, %v2802, 0.0
        %v2835 = vsel %vm2547, %v2803, 0.0
        %v2836 = vsel %vm2548, %v2804, 0.0
        %v2837 = vsel %vm2549, %v2805, 0.0
        %v2838 = vsel %vm2550, %v2806, 0.0
        %v2839 = vsel %vm2551, %v2807, 0.0
        %v2840 = vsel %vm2552, %v2808, 0.0
        %v2841 = vsel %vm2553, %v2809, 0.0
        %v2842 = vsel %vm2554, %v2810, 0.0
        %v2843 = vsel %vm2555, %v2811, 0.0
        %v2844 = vsel %vm2556, %v2812, 0.0
        %v2845 = vsel %vm2557, %v2813, 0.0
        %v2846 = vsel %vm2558, %v2814, 0.0
        %v2847 = vsel %vm2559, %v2815, 0.0
        %v2848 = vsel %vm2560, %v2816, 0.0
        %v2849 = vsel %vm2561, %v2817, 0.0
        %v2850 = vsel %vm2562, %v2818, 0.0
        %v2851 = vsel %vm2563, %v2819, 0.0
        %v2852 = vsel %vm2564, %v2820, 0.0
        %v2853 = vsel %vm2565, %v2821, 0.0
        %v2854 = vsel %vm2566, %v2822, 0.0
        %v2855 = vsel %vm2567, %v2823, 0.0
        %v2856 = vsel %vm2568, %v2824, 0.0
        %v2857 = vsel %vm2569, %v2825, 0.0
        %v2858 = vsel %vm2570, %v2826, 0.0
        %v2859 = vsel %vm2571, %v2827, 0.0
        %v2860 = vsel %vm2572, %v2828, 0.0
        %v2861 = vsel %vm2573, %v2829, 0.0
        %v2862 = vsel %vm2574, %v2830, 0.0
        %v2863 = vsel %vm2575, %v2831, 0.0
        %v2864 = vsel %vm2576, %v2832, 0.0
        %v2865 = vsub.f32 %v1880, %v2481
        %v2866 = vsub.f32 %v1885, %v2482
        %v2867 = vsub.f32 %v1890, %v2483
        %v2868 = vsub.f32 %v1895, %v2484
        %v2869 = vsub.f32 %v1900, %v2485
        %v2870 = vsub.f32 %v1905, %v2486
        %v2871 = vsub.f32 %v1910, %v2487
        %v2872 = vsub.f32 %v1915, %v2488
        %v2873 = vsub.f32 %v1920, %v2489
        %v2874 = vsub.f32 %v1925, %v2490
        %v2875 = vsub.f32 %v1930, %v2491
        %v2876 = vsub.f32 %v1935, %v2492
        %v2877 = vsub.f32 %v1940, %v2493
        %v2878 = vsub.f32 %v1945, %v2494
        %v2879 = vsub.f32 %v1950, %v2495
        %v2880 = vsub.f32 %v1955, %v2496
        %v2881 = vsub.f32 %v1960, %v2497
        %v2882 = vsub.f32 %v1965, %v2498
        %v2883 = vsub.f32 %v1970, %v2499
        %v2884 = vsub.f32 %v1975, %v2500
        %v2885 = vsub.f32 %v1980, %v2501
        %v2886 = vsub.f32 %v1985, %v2502
        %v2887 = vsub.f32 %v1990, %v2503
        %v2888 = vsub.f32 %v1995, %v2504
        %v2889 = vsub.f32 %v2000, %v2505
        %v2890 = vsub.f32 %v2005, %v2506
        %v2891 = vsub.f32 %v2010, %v2507
        %v2892 = vsub.f32 %v2015, %v2508
        %v2893 = vsub.f32 %v2020, %v2509
        %v2894 = vsub.f32 %v2025, %v2510
        %v2895 = vsub.f32 %v2030, %v2511
        %v2896 = vsub.f32 %v2035, %v2512
        %v2897 = vmul.f32 %v2865, 20.0
        %v2898 = vmul.f32 %v2866, 20.0
        %v2899 = vmul.f32 %v2867, 20.0
        %v2900 = vmul.f32 %v2868, 20.0
        %v2901 = vmul.f32 %v2869, 20.0
        %v2902 = vmul.f32 %v2870, 20.0
        %v2903 = vmul.f32 %v2871, 20.0
        %v2904 = vmul.f32 %v2872, 20.0
        %v2905 = vmul.f32 %v2873, 20.0
        %v2906 = vmul.f32 %v2874, 20.0
        %v2907 = vmul.f32 %v2875, 20.0
        %v2908 = vmul.f32 %v2876, 20.0
        %v2909 = vmul.f32 %v2877, 20.0
        %v2910 = vmul.f32 %v2878, 20.0
        %v2911 = vmul.f32 %v2879, 20.0
        %v2912 = vmul.f32 %v2880, 20.0
        %v2913 = vmul.f32 %v2881, 20.0
        %v2914 = vmul.f32 %v2882, 20.0
        %v2915 = vmul.f32 %v2883, 20.0
        %v2916 = vmul.f32 %v2884, 20.0
        %v2917 = vmul.f32 %v2885, 20.0
        %v2918 = vmul.f32 %v2886, 20.0
        %v2919 = vmul.f32 %v2887, 20.0
        %v2920 = vmul.f32 %v2888, 20.0
        %v2921 = vmul.f32 %v2889, 20.0
        %v2922 = vmul.f32 %v2890, 20.0
        %v2923 = vmul.f32 %v2891, 20.0
        %v2924 = vmul.f32 %v2892, 20.0
        %v2925 = vmul.f32 %v2893, 20.0
        %v2926 = vmul.f32 %v2894, 20.0
        %v2927 = vmul.f32 %v2895, 20.0
        %v2928 = vmul.f32 %v2896, 20.0
        %v2929 = vsub.f32 %v2513, %v2897
        %v2930 = vsub.f32 %v2514, %v2898
        %v2931 = vsub.f32 %v2515, %v2899
        %v2932 = vsub.f32 %v2516, %v2900
        %v2933 = vsub.f32 %v2517, %v2901
        %v2934 = vsub.f32 %v2518, %v2902
        %v2935 = vsub.f32 %v2519, %v2903
        %v2936 = vsub.f32 %v2520, %v2904
        %v2937 = vsub.f32 %v2521, %v2905
        %v2938 = vsub.f32 %v2522, %v2906
        %v2939 = vsub.f32 %v2523, %v2907
        %v2940 = vsub.f32 %v2524, %v2908
        %v2941 = vsub.f32 %v2525, %v2909
        %v2942 = vsub.f32 %v2526, %v2910
        %v2943 = vsub.f32 %v2527, %v2911
        %v2944 = vsub.f32 %v2528, %v2912
        %v2945 = vsub.f32 %v2529, %v2913
        %v2946 = vsub.f32 %v2530, %v2914
        %v2947 = vsub.f32 %v2531, %v2915
        %v2948 = vsub.f32 %v2532, %v2916
        %v2949 = vsub.f32 %v2533, %v2917
        %v2950 = vsub.f32 %v2534, %v2918
        %v2951 = vsub.f32 %v2535, %v2919
        %v2952 = vsub.f32 %v2536, %v2920
        %v2953 = vsub.f32 %v2537, %v2921
        %v2954 = vsub.f32 %v2538, %v2922
        %v2955 = vsub.f32 %v2539, %v2923
        %v2956 = vsub.f32 %v2540, %v2924
        %v2957 = vsub.f32 %v2541, %v2925
        %v2958 = vsub.f32 %v2542, %v2926
        %v2959 = vsub.f32 %v2543, %v2927
        %v2960 = vsub.f32 %v2544, %v2928
        %v2961 = vmul.f32 %v2929, %v2929
        %v2962 = vmul.f32 %v2930, %v2930
        %v2963 = vmul.f32 %v2931, %v2931
        %v2964 = vmul.f32 %v2932, %v2932
        %v2965 = vmul.f32 %v2933, %v2933
        %v2966 = vmul.f32 %v2934, %v2934
        %v2967 = vmul.f32 %v2935, %v2935
        %v2968 = vmul.f32 %v2936, %v2936
        %v2969 = vmul.f32 %v2937, %v2937
        %v2970 = vmul.f32 %v2938, %v2938
        %v2971 = vmul.f32 %v2939, %v2939
        %v2972 = vmul.f32 %v2940, %v2940
        %v2973 = vmul.f32 %v2941, %v2941
        %v2974 = vmul.f32 %v2942, %v2942
        %v2975 = vmul.f32 %v2943, %v2943
        %v2976 = vmul.f32 %v2944, %v2944
        %v2977 = vmul.f32 %v2945, %v2945
        %v2978 = vmul.f32 %v2946, %v2946
        %v2979 = vmul.f32 %v2947, %v2947
        %v2980 = vmul.f32 %v2948, %v2948
        %v2981 = vmul.f32 %v2949, %v2949
        %v2982 = vmul.f32 %v2950, %v2950
        %v2983 = vmul.f32 %v2951, %v2951
        %v2984 = vmul.f32 %v2952, %v2952
        %v2985 = vmul.f32 %v2953, %v2953
        %v2986 = vmul.f32 %v2954, %v2954
        %v2987 = vmul.f32 %v2955, %v2955
        %v2988 = vmul.f32 %v2956, %v2956
        %v2989 = vmul.f32 %v2957, %v2957
        %v2990 = vmul.f32 %v2958, %v2958
        %v2991 = vmul.f32 %v2959, %v2959
        %v2992 = vmul.f32 %v2960, %v2960
        %v2993 = vmul.f32 %v2737, %v2961
        %v2994 = vmul.f32 %v2738, %v2962
        %v2995 = vmul.f32 %v2739, %v2963
        %v2996 = vmul.f32 %v2740, %v2964
        %v2997 = vmul.f32 %v2741, %v2965
        %v2998 = vmul.f32 %v2742, %v2966
        %v2999 = vmul.f32 %v2743, %v2967
        %v3000 = vmul.f32 %v2744, %v2968
        %v3001 = vmul.f32 %v2745, %v2969
        %v3002 = vmul.f32 %v2746, %v2970
        %v3003 = vmul.f32 %v2747, %v2971
        %v3004 = vmul.f32 %v2748, %v2972
        %v3005 = vmul.f32 %v2749, %v2973
        %v3006 = vmul.f32 %v2750, %v2974
        %v3007 = vmul.f32 %v2751, %v2975
        %v3008 = vmul.f32 %v2752, %v2976
        %v3009 = vmul.f32 %v2753, %v2977
        %v3010 = vmul.f32 %v2754, %v2978
        %v3011 = vmul.f32 %v2755, %v2979
        %v3012 = vmul.f32 %v2756, %v2980
        %v3013 = vmul.f32 %v2757, %v2981
        %v3014 = vmul.f32 %v2758, %v2982
        %v3015 = vmul.f32 %v2759, %v2983
        %v3016 = vmul.f32 %v2760, %v2984
        %v3017 = vmul.f32 %v2761, %v2985
        %v3018 = vmul.f32 %v2762, %v2986
        %v3019 = vmul.f32 %v2763, %v2987
        %v3020 = vmul.f32 %v2764, %v2988
        %v3021 = vmul.f32 %v2765, %v2989
        %v3022 = vmul.f32 %v2766, %v2990
        %v3023 = vmul.f32 %v2767, %v2991
        %v3024 = vmul.f32 %v2768, %v2992
        %v3025 = vld [vmem:[%s673] sm:$0xf]
        %v3026 = vsel %vm2198, %v2833, 0.0
        %v3027 = vsel %vm2198, %v2834, 0.0
        %v3028 = vadd.f32 %v3026, %v3027
        %v3029 = vsel %vm2198, %v2835, 0.0
        %v3030 = vadd.f32 %v3028, %v3029
        %v3031 = vsel %vm2198, %v2836, 0.0
        %v3032 = vadd.f32 %v3030, %v3031
        %v3033 = vsel %vm2198, %v2837, 0.0
        %v3034 = vadd.f32 %v3032, %v3033
        %v3035 = vsel %vm2198, %v2838, 0.0
        %v3036 = vadd.f32 %v3034, %v3035
        %v3037 = vsel %vm2198, %v2839, 0.0
        %v3038 = vadd.f32 %v3036, %v3037
        %v3039 = vsel %vm2198, %v2840, 0.0
        %v3040 = vadd.f32 %v3038, %v3039
        %v3041 = vsel %vm2198, %v2841, 0.0
        %v3042 = vadd.f32 %v3040, %v3041
        %v3043 = vsel %vm2198, %v2842, 0.0
        %v3044 = vadd.f32 %v3042, %v3043
        %v3045 = vsel %vm2198, %v2843, 0.0
        %v3046 = vadd.f32 %v3044, %v3045
        %v3047 = vsel %vm2198, %v2844, 0.0
        %v3048 = vadd.f32 %v3046, %v3047
        %v3049 = vsel %vm2198, %v2845, 0.0
        %v3050 = vadd.f32 %v3048, %v3049
        %v3051 = vsel %vm2198, %v2846, 0.0
        %v3052 = vadd.f32 %v3050, %v3051
        %v3053 = vsel %vm2198, %v2847, 0.0
        %v3054 = vadd.f32 %v3052, %v3053
        %v3055 = vsel %vm2198, %v2848, 0.0
        %v3056 = vadd.f32 %v3054, %v3055
        %v3057 = vsel %vm2198, %v2849, 0.0
        %v3058 = vadd.f32 %v3056, %v3057
        %v3059 = vsel %vm2198, %v2850, 0.0
        %v3060 = vadd.f32 %v3058, %v3059
        %v3061 = vsel %vm2198, %v2851, 0.0
        %v3062 = vadd.f32 %v3060, %v3061
        %v3063 = vsel %vm2198, %v2852, 0.0
        %v3064 = vadd.f32 %v3062, %v3063
        %v3065 = vsel %vm2198, %v2853, 0.0
        %v3066 = vadd.f32 %v3064, %v3065
        %v3067 = vsel %vm2198, %v2854, 0.0
        %v3068 = vadd.f32 %v3066, %v3067
        %v3069 = vsel %vm2198, %v2855, 0.0
        %v3070 = vadd.f32 %v3068, %v3069
        %v3071 = vsel %vm2198, %v2856, 0.0
        %v3072 = vadd.f32 %v3070, %v3071
        %v3073 = vsel %vm2198, %v2857, 0.0
        %v3074 = vadd.f32 %v3072, %v3073
        %v3075 = vsel %vm2198, %v2858, 0.0
        %v3076 = vadd.f32 %v3074, %v3075
        %v3077 = vsel %vm2198, %v2859, 0.0
        %v3078 = vadd.f32 %v3076, %v3077
        %v3079 = vsel %vm2198, %v2860, 0.0
        %v3080 = vadd.f32 %v3078, %v3079
        %v3081 = vsel %vm2198, %v2861, 0.0
        %v3082 = vadd.f32 %v3080, %v3081
        %v3083 = vsel %vm2198, %v2862, 0.0
        %v3084 = vadd.f32 %v3082, %v3083
        %v3085 = vsel %vm2198, %v2863, 0.0
        %v3086 = vadd.f32 %v3084, %v3085
        %v3087 = vsel %vm2198, %v2864, 0.0
        %v3088 = vadd.f32 %v3086, %v3087
        %v3089 = vrot.slane %v3088, 4
        %v3090 = vadd.f32 %v3088, %v3089
        %v3091 = vrot.slane %v3090, 2
        %v3092 = vadd.f32 %v3090, %v3091
        %v3093 = vrot.slane %v3092, 1
        %v3094 = vadd.f32 %v3092, %v3093
        %v3095 = vsel %vm2198, %v2673, 0.0
        %v3096 = vsel %vm2198, %v2674, 0.0
        %v3097 = vadd.f32 %v3095, %v3096
        %v3098 = vsel %vm2198, %v2675, 0.0
        %v3099 = vadd.f32 %v3097, %v3098
        %v3100 = vsel %vm2198, %v2676, 0.0
        %v3101 = vadd.f32 %v3099, %v3100
        %v3102 = vsel %vm2198, %v2677, 0.0
        %v3103 = vadd.f32 %v3101, %v3102
        %v3104 = vsel %vm2198, %v2678, 0.0
        %v3105 = vadd.f32 %v3103, %v3104
        %v3106 = vsel %vm2198, %v2679, 0.0
        %v3107 = vadd.f32 %v3105, %v3106
        %v3108 = vsel %vm2198, %v2680, 0.0
        %v3109 = vadd.f32 %v3107, %v3108
        %v3110 = vsel %vm2198, %v2681, 0.0
        %v3111 = vadd.f32 %v3109, %v3110
        %v3112 = vsel %vm2198, %v2682, 0.0
        %v3113 = vadd.f32 %v3111, %v3112
        %v3114 = vsel %vm2198, %v2683, 0.0
        %v3115 = vadd.f32 %v3113, %v3114
        %v3116 = vsel %vm2198, %v2684, 0.0
        %v3117 = vadd.f32 %v3115, %v3116
        %v3118 = vsel %vm2198, %v2685, 0.0
        %v3119 = vadd.f32 %v3117, %v3118
        %v3120 = vsel %vm2198, %v2686, 0.0
        %v3121 = vadd.f32 %v3119, %v3120
        %v3122 = vsel %vm2198, %v2687, 0.0
        %v3123 = vadd.f32 %v3121, %v3122
        %v3124 = vsel %vm2198, %v2688, 0.0
        %v3125 = vadd.f32 %v3123, %v3124
        %v3126 = vsel %vm2198, %v2689, 0.0
        %v3127 = vadd.f32 %v3125, %v3126
        %v3128 = vsel %vm2198, %v2690, 0.0
        %v3129 = vadd.f32 %v3127, %v3128
        %v3130 = vsel %vm2198, %v2691, 0.0
        %v3131 = vadd.f32 %v3129, %v3130
        %v3132 = vsel %vm2198, %v2692, 0.0
        %v3133 = vadd.f32 %v3131, %v3132
        %v3134 = vsel %vm2198, %v2693, 0.0
        %v3135 = vadd.f32 %v3133, %v3134
        %v3136 = vsel %vm2198, %v2694, 0.0
        %v3137 = vadd.f32 %v3135, %v3136
        %v3138 = vsel %vm2198, %v2695, 0.0
        %v3139 = vadd.f32 %v3137, %v3138
        %v3140 = vsel %vm2198, %v2696, 0.0
        %v3141 = vadd.f32 %v3139, %v3140
        %v3142 = vsel %vm2198, %v2697, 0.0
        %v3143 = vadd.f32 %v3141, %v3142
        %v3144 = vsel %vm2198, %v2698, 0.0
        %v3145 = vadd.f32 %v3143, %v3144
        %v3146 = vsel %vm2198, %v2699, 0.0
        %v3147 = vadd.f32 %v3145, %v3146
        %v3148 = vsel %vm2198, %v2700, 0.0
        %v3149 = vadd.f32 %v3147, %v3148
        %v3150 = vsel %vm2198, %v2701, 0.0
        %v3151 = vadd.f32 %v3149, %v3150
        %v3152 = vsel %vm2198, %v2702, 0.0
        %v3153 = vadd.f32 %v3151, %v3152
        %v3154 = vsel %vm2198, %v2703, 0.0
        %v3155 = vadd.f32 %v3153, %v3154
        %v3156 = vsel %vm2198, %v2704, 0.0
        %v3157 = vadd.f32 %v3155, %v3156
        %v3158 = vrot.slane %v3157, 4
        %v3159 = vadd.f32 %v3157, %v3158
        %v3160 = vrot.slane %v3159, 2
        %v3161 = vadd.f32 %v3159, %v3160
        %v3162 = vrot.slane %v3161, 1
        %v3163 = vadd.f32 %v3161, %v3162
        %v3164 = vsel %vm2198, %v2993, 0.0
        %v3165 = vsel %vm2198, %v2994, 0.0
        %v3166 = vadd.f32 %v3164, %v3165
        %v3167 = vsel %vm2198, %v2995, 0.0
        %v3168 = vadd.f32 %v3166, %v3167
        %v3169 = vsel %vm2198, %v2996, 0.0
        %v3170 = vadd.f32 %v3168, %v3169
        %v3171 = vsel %vm2198, %v2997, 0.0
        %v3172 = vadd.f32 %v3170, %v3171
        %v3173 = vsel %vm2198, %v2998, 0.0
        %v3174 = vadd.f32 %v3172, %v3173
        %v3175 = vsel %vm2198, %v2999, 0.0
        %v3176 = vadd.f32 %v3174, %v3175
        %v3177 = vsel %vm2198, %v3000, 0.0
        %v3178 = vadd.f32 %v3176, %v3177
        %v3179 = vsel %vm2198, %v3001, 0.0
        %v3180 = vadd.f32 %v3178, %v3179
        %v3181 = vsel %vm2198, %v3002, 0.0
        %v3182 = vadd.f32 %v3180, %v3181
        %v3183 = vsel %vm2198, %v3003, 0.0
        %v3184 = vadd.f32 %v3182, %v3183
        %v3185 = vsel %vm2198, %v3004, 0.0
        %v3186 = vadd.f32 %v3184, %v3185
        %v3187 = vsel %vm2198, %v3005, 0.0
        %v3188 = vadd.f32 %v3186, %v3187
        %v3189 = vsel %vm2198, %v3006, 0.0
        %v3190 = vadd.f32 %v3188, %v3189
        %v3191 = vsel %vm2198, %v3007, 0.0
        %v3192 = vadd.f32 %v3190, %v3191
        %v3193 = vsel %vm2198, %v3008, 0.0
        %v3194 = vadd.f32 %v3192, %v3193
        %v3195 = vsel %vm2198, %v3009, 0.0
        %v3196 = vadd.f32 %v3194, %v3195
        %v3197 = vsel %vm2198, %v3010, 0.0
        %v3198 = vadd.f32 %v3196, %v3197
        %v3199 = vsel %vm2198, %v3011, 0.0
        %v3200 = vadd.f32 %v3198, %v3199
        %v3201 = vsel %vm2198, %v3012, 0.0
        %v3202 = vadd.f32 %v3200, %v3201
        %v3203 = vsel %vm2198, %v3013, 0.0
        %v3204 = vadd.f32 %v3202, %v3203
        %v3205 = vsel %vm2198, %v3014, 0.0
        %v3206 = vadd.f32 %v3204, %v3205
        %v3207 = vsel %vm2198, %v3015, 0.0
        %v3208 = vadd.f32 %v3206, %v3207
        %v3209 = vsel %vm2198, %v3016, 0.0
        %v3210 = vadd.f32 %v3208, %v3209
        %v3211 = vsel %vm2198, %v3017, 0.0
        %v3212 = vadd.f32 %v3210, %v3211
        %v3213 = vsel %vm2198, %v3018, 0.0
        %v3214 = vadd.f32 %v3212, %v3213
        %v3215 = vsel %vm2198, %v3019, 0.0
        %v3216 = vadd.f32 %v3214, %v3215
        %v3217 = vsel %vm2198, %v3020, 0.0
        %v3218 = vadd.f32 %v3216, %v3217
        %v3219 = vsel %vm2198, %v3021, 0.0
        %v3220 = vadd.f32 %v3218, %v3219
        %v3221 = vsel %vm2198, %v3022, 0.0
        %v3222 = vadd.f32 %v3220, %v3221
        %v3223 = vsel %vm2198, %v3023, 0.0
        %v3224 = vadd.f32 %v3222, %v3223
        %v3225 = vsel %vm2198, %v3024, 0.0
        %v3226 = vadd.f32 %v3224, %v3225
        %v3227 = vrot.slane %v3226, 4
        %v3228 = vadd.f32 %v3226, %v3227
        %v3229 = vrot.slane %v3228, 2
        %v3230 = vadd.f32 %v3228, %v3229
        %v3231 = vrot.slane %v3230, 1
        %v3232 = vadd.f32 %v3230, %v3231
        %v3233 = vsel %vm2198, %v2737, 0.0
        %v3234 = vsel %vm2198, %v2738, 0.0
        %v3235 = vadd.f32 %v3233, %v3234
        %v3236 = vsel %vm2198, %v2739, 0.0
        %v3237 = vadd.f32 %v3235, %v3236
        %v3238 = vsel %vm2198, %v2740, 0.0
        %v3239 = vadd.f32 %v3237, %v3238
        %v3240 = vsel %vm2198, %v2741, 0.0
        %v3241 = vadd.f32 %v3239, %v3240
        %v3242 = vsel %vm2198, %v2742, 0.0
        %v3243 = vadd.f32 %v3241, %v3242
        %v3244 = vsel %vm2198, %v2743, 0.0
        %v3245 = vadd.f32 %v3243, %v3244
        %v3246 = vsel %vm2198, %v2744, 0.0
        %v3247 = vadd.f32 %v3245, %v3246
        %v3248 = vsel %vm2198, %v2745, 0.0
        %v3249 = vadd.f32 %v3247, %v3248
        %v3250 = vsel %vm2198, %v2746, 0.0
        %v3251 = vadd.f32 %v3249, %v3250
        %v3252 = vsel %vm2198, %v2747, 0.0
        %v3253 = vadd.f32 %v3251, %v3252
        %v3254 = vsel %vm2198, %v2748, 0.0
        %v3255 = vadd.f32 %v3253, %v3254
        %v3256 = vsel %vm2198, %v2749, 0.0
        %v3257 = vadd.f32 %v3255, %v3256
        %v3258 = vsel %vm2198, %v2750, 0.0
        %v3259 = vadd.f32 %v3257, %v3258
        %v3260 = vsel %vm2198, %v2751, 0.0
        %v3261 = vadd.f32 %v3259, %v3260
        %v3262 = vsel %vm2198, %v2752, 0.0
        %v3263 = vadd.f32 %v3261, %v3262
        %v3264 = vsel %vm2198, %v2753, 0.0
        %v3265 = vadd.f32 %v3263, %v3264
        %v3266 = vsel %vm2198, %v2754, 0.0
        %v3267 = vadd.f32 %v3265, %v3266
        %v3268 = vsel %vm2198, %v2755, 0.0
        %v3269 = vadd.f32 %v3267, %v3268
        %v3270 = vsel %vm2198, %v2756, 0.0
        %v3271 = vadd.f32 %v3269, %v3270
        %v3272 = vsel %vm2198, %v2757, 0.0
        %v3273 = vadd.f32 %v3271, %v3272
        %v3274 = vsel %vm2198, %v2758, 0.0
        %v3275 = vadd.f32 %v3273, %v3274
        %v3276 = vsel %vm2198, %v2759, 0.0
        %v3277 = vadd.f32 %v3275, %v3276
        %v3278 = vsel %vm2198, %v2760, 0.0
        %v3279 = vadd.f32 %v3277, %v3278
        %v3280 = vsel %vm2198, %v2761, 0.0
        %v3281 = vadd.f32 %v3279, %v3280
        %v3282 = vsel %vm2198, %v2762, 0.0
        %v3283 = vadd.f32 %v3281, %v3282
        %v3284 = vsel %vm2198, %v2763, 0.0
        %v3285 = vadd.f32 %v3283, %v3284
        %v3286 = vsel %vm2198, %v2764, 0.0
        %v3287 = vadd.f32 %v3285, %v3286
        %v3288 = vsel %vm2198, %v2765, 0.0
        %v3289 = vadd.f32 %v3287, %v3288
        %v3290 = vsel %vm2198, %v2766, 0.0
        %v3291 = vadd.f32 %v3289, %v3290
        %v3292 = vsel %vm2198, %v2767, 0.0
        %v3293 = vadd.f32 %v3291, %v3292
        %v3294 = vsel %vm2198, %v2768, 0.0
        %v3295 = vadd.f32 %v3293, %v3294
        %v3296 = vrot.slane %v3295, 4
        %v3297 = vadd.f32 %v3295, %v3296
        %v3298 = vrot.slane %v3297, 2
        %v3299 = vadd.f32 %v3297, %v3298
        %v3300 = vrot.slane %v3299, 1
        %v3301 = vadd.f32 %v3299, %v3300
        %v3302 = vsel %vm839, %v3094, %v3163
        %v3303 = vsel %vm842, %v3302, %v3232
        %v3304 = vsel %vm775, %v3303, %v3301
        %v3305 = vadd.f32 %v3025, %v3304
        %3306 = vst.msk [vmem:[%s673] sm:$0xf] %vm2479, %v3305
        %s3307 = sand.u32 %s359, 1
        %s3308 = scalar_lea.sflag [#allocation3], %s3307
        %s3309 = sand.u32 %s359, 1
        %s3310 = smul.addr %s3309, 8
        %s3311 = scalar_lea.vmem [#allocation2], %s3310
        %s3312 = sand.u32 %s31, 1
        %s3313 = scalar_lea.sflag [#allocation5], %s3312
        %s3314 = sand.u32 %s385, 1
        %s3315 = smul.addr %s3314, 4
        %s3316 = scalar_lea.vmem [#allocation4], %s3315
        %s3317 = sand.u32 %s31, 1
        %s3318 = scalar_lea.sflag [#allocation5], %s3317
        %s3319 = sand.u32 %s411, 1
        %s3320 = smul.addr %s3319, 4
        %s3321 = scalar_lea.vmem [#allocation6], %s3320
        // Predicated region
        $region69: #{tpu_custom_call.1} parent=63 // pred_check
          %p3322 = pneg %p369
        $region70: #{tpu_custom_call.1} parent=63 // pred_check_branch
          %3324 = sbr.rel (%p3322) target = $region72
        $region71: #{tpu_custom_call.1} parent=63 // pred_region
          %s3326 = ssub.s32 128, 128
          %3327 = vsyncadd %s3308, %s3326
          %s3328 = smul.addr %s35, 2
          %s3329 = smul.addr %s3328, 64
          %s3330 = scalar_lea.hbm %s11, %s3329
          %s3332 = sshll.u32 %s3311, 4
          %s3333 = int_to_ptr.vmem [resolvable:$true] %s3332
          %3335 = dma.vmem_to_hbm [thread:$0]  %s3333, 128, %s3330, %s3308
        $region72: #{tpu_custom_call.1} parent=63 // pred_fallthru
          _
        // Predicated region
        $region73: #{tpu_custom_call.1} parent=63 // pred_check
          %p3336 = pneg %p395
        $region74: #{tpu_custom_call.1} parent=63 // pred_check_branch
          %3338 = sbr.rel (%p3336) target = $region76
        $region75: #{tpu_custom_call.1} parent=63 // pred_region
          %s3340 = ssub.s32 64, 64
          %3341 = vsyncadd %s3313, %s3340
          %s3342 = smul.addr %s35, 64
          %s3343 = scalar_lea.hbm %s12, %s3342
          %s3345 = sshll.u32 %s3316, 4
          %s3346 = int_to_ptr.vmem [resolvable:$true] %s3345
          %3348 = dma.vmem_to_hbm [thread:$0]  %s3346, 64, %s3343, %s3313
        $region76: #{tpu_custom_call.1} parent=63 // pred_fallthru
          _
        // Predicated region
        $region77: #{tpu_custom_call.1} parent=63 // pred_check
          %p3349 = pneg %p421
        $region78: #{tpu_custom_call.1} parent=63 // pred_check_branch
          %3351 = sbr.rel (%p3349) target = $region80
        $region79: #{tpu_custom_call.1} parent=63 // pred_region
          %s3353 = ssub.s32 64, 64
          %3354 = vsyncadd %s3318, %s3353
          %s3355 = smul.addr %s35, 64
          %s3356 = scalar_lea.hbm %s13, %s3355
          %s3358 = sshll.u32 %s3321, 4
          %s3359 = int_to_ptr.vmem [resolvable:$true] %s3358
          %3361 = dma.vmem_to_hbm [thread:$0]  %s3359, 64, %s3356, %s3318
        $region80: #{tpu_custom_call.1} parent=63 // pred_fallthru
          _
      $region64: #{tpu_custom_call.1} parent=5 // pred_fallthru
        _
      %p3362 = scmp.le.s32.totalorder 2, %s26
      // Predicated region
      $region81: #{tpu_custom_call.1} parent=5 // pred_check
        %p3363 = pneg %p3362
      $region82: #{tpu_custom_call.1} parent=5 // pred_check_branch
        %3365 = sbr.rel (%p3363) target = $region84
      $region83: #{tpu_custom_call.1} parent=5 // pred_region
        %s3366 = ssub.s32 %s26, 2
        // Predicated region
        $region85: #{tpu_custom_call.1} parent=83 // pred_check
          %p3367 = pneg %p375
        $region86: #{tpu_custom_call.1} parent=83 // pred_check_branch
          %3369 = sbr.rel (%p3367) target = $region88
        $region87: #{tpu_custom_call.1} parent=83 // pred_region
          %s3370 = sand.u32 %s360, 1
          %s3371 = scalar_lea.sflag [#allocation3], %s3370
          %s3372 = sand.u32 %s360, 1
          %s3373 = smul.addr %s3372, 8
          %s3374 = scalar_lea.vmem [#allocation2], %s3373
          %3375 = dma.done %s3371, 128
        $region88: #{tpu_custom_call.1} parent=83 // pred_fallthru
          _
        // Predicated region
        $region89: #{tpu_custom_call.1} parent=83 // pred_check
          %p3376 = pneg %p401
        $region90: #{tpu_custom_call.1} parent=83 // pred_check_branch
          %3378 = sbr.rel (%p3376) target = $region92
        $region91: #{tpu_custom_call.1} parent=83 // pred_region
          %s3379 = sand.u32 %s32, 1
          %s3380 = scalar_lea.sflag [#allocation5], %s3379
          %s3381 = sand.u32 %s386, 1
          %s3382 = smul.addr %s3381, 4
          %s3383 = scalar_lea.vmem [#allocation4], %s3382
          %3384 = dma.done %s3380, 64
        $region92: #{tpu_custom_call.1} parent=83 // pred_fallthru
          _
        // Predicated region
        $region93: #{tpu_custom_call.1} parent=83 // pred_check
          %p3385 = pneg %p427
        $region94: #{tpu_custom_call.1} parent=83 // pred_check_branch
          %3387 = sbr.rel (%p3385) target = $region96
        $region95: #{tpu_custom_call.1} parent=83 // pred_region
          %s3388 = sand.u32 %s32, 1
          %s3389 = scalar_lea.sflag [#allocation5], %s3388
          %s3390 = sand.u32 %s412, 1
          %s3391 = smul.addr %s3390, 4
          %s3392 = scalar_lea.vmem [#allocation6], %s3391
          %3393 = dma.done %s3389, 64
        $region96: #{tpu_custom_call.1} parent=83 // pred_fallthru
          _
      $region84: #{tpu_custom_call.1} parent=5 // pred_fallthru
        _
    $region6: #{tpu_custom_call.1} parent=1 // loop_footer
      %s30 = sadd.s32 1, %s26
    $region7: #{tpu_custom_call.1} parent=1 // loop_footer_branch
      %25 = sbr.rel target = $region3
    $region8: #{tpu_custom_call.1} parent=1 // loop_exit
      _
    %3394 = vsyncpa [#allocation3], 1
    %s3395 = scalar_lea.sflag [#allocation3], 1
    %3396 = vsyncpa %s3395, 1
    %3397 = vsyncpa [#allocation5], 1
    %s3398 = scalar_lea.sflag [#allocation5], 1
    %3399 = vsyncpa %s3398, 1

</llo_original>
